<compile_context>
chip_gen: v5e
topology: v5e:2x2
jax: 0.10.0
libtpu: 0.0.40
codegen_flags: <defaults>
</compile_context>

<pallas_src>
import jax
import jax.numpy as jnp
from jax import lax
from jax.experimental import pallas as pl
from jax.experimental.pallas import tpu as pltpu


def _reflect_index(i, n):
    # torch.nn.ReflectionPad2d index semantics (valid while pad < n).
    if i < 0:
        return -i
    if i >= n:
        return 2 * (n - 1) - i
    return i


def upsample_conv_layer(x_nchw, weight_oihw, bias, *, kernel_size, stride, upsample):
    """Forward pass equivalent to UpsampleConvLayer.forward (NCHW in, NCHW out)."""
    N, C_in, H, W = x_nchw.shape
    C_out = weight_oihw.shape[0]
    K = int(kernel_size)
    U = 1 if upsample is None else int(upsample)
    P = K // 2
    if stride != 1:
        # TODO(synk): strided conv breaks the flat-shift im2col; add a strided-lane path.
        raise NotImplementedError("fused UpsampleConvLayer kernel supports stride == 1")

    H_up, W_up = H * U, W * U
    H_p, W_p = H_up + 2 * P, W_up + 2 * P
    H_out = H_p - K + 1                      # == H_up for odd K
    W_out = W_p - K + 1                      # == W_up for odd K
    KKC = K * K * C_in
    Mp = H_out * W_p                         # GEMM lane axis (incl. 2P garbage cols per row)
    V_len = H_p * W_p + max(K - 1, 0)        # flat padded-upsampled image + tap overrun tail

    # --- remaining wrapper glue (tiny): W-direction nearest upsample + reflect pad, one gather.
    col_src = jnp.asarray([_reflect_index(p - P, W_up) // U for p in range(W_p)],
                          dtype=jnp.int32)
    x_wp = jnp.take(x_nchw, col_src, axis=3).astype(jnp.float32)      # (N, C_in, H, W_p)

    # H-direction source-row table: static Python ints, baked into the kernel.
    s_table = [_reflect_index(q - P, H_up) // U for q in range(H_p)]

    # PyTorch Conv2d weight (C_out, C_in, K, K) -> (C_out, K*K*C_in), tap order (kh, kw, ci).
    w_lhs = jnp.transpose(weight_oihw, (0, 2, 3, 1)).reshape(C_out, KKC).astype(jnp.float32)
    b_col = bias.reshape(C_out, 1).astype(jnp.float32)
    out_dtype = x_nchw.dtype

    def kernel(x_ref, w_ref, b_ref, o_ref, v_ref, pat_ref):
        # x_ref:   (1, C_in, H, W_p)   W-prepared source image of this batch element
        # w_ref:   (C_out, KKC)        weights
        # b_ref:   (C_out, 1)          bias column
        # o_ref:   (1, C_out, H_out, W_out)  NCHW output block
        # v_ref:   (C_in, V_len)       flattened padded-upsampled image (scratch)
        # pat_ref: (KKC, Mp)           im2col slab, contraction on sublanes (scratch)
        x = x_ref[0]                                                   # (C_in, H, W_p)

        # 1) H-direction nearest upsample + reflection pad, flattened row-major:
        #    v[ci, q*W_p + p] = padded_upsampled[ci, q, p]   (static row copies only)
        for q in range(H_p):
            v_ref[:, q * W_p:(q + 1) * W_p] = x[:, s_table[q], :]
        if K > 1:
            v_ref[:, pl.ds(H_p * W_p, K - 1)] = jnp.zeros((C_in, K - 1), dtype=v_ref.dtype)

        # 2) im2col: each tap (kh, kw) is one contiguous flat-shifted slice of v.
        for kh in range(K):
            for kw in range(K):
                base = (kh * K + kw) * C_in
                off = kh * W_p + kw
                pat_ref[pl.ds(base, C_in), :] = v_ref[:, pl.ds(off, Mp)]

        # 3) single lane-dense GEMM + bias, f32 accumulation on the MXU.
        acc = jnp.dot(w_ref[...], pat_ref[...], preferred_element_type=jnp.float32)
        acc = acc + b_ref[...]                                         # (C_out, Mp)

        # 4) store NCHW output rows, dropping the 2P garbage columns of each W_p segment.
        for r in range(H_out):
            o_ref[0, :, r, :] = acc[:, r * W_p:r * W_p + W_out].astype(o_ref.dtype)

    flops = 2 * N * H_out * W_out * C_out * KKC
    bytes_accessed = 4 * (N * C_in * H * W_p + C_out * KKC + C_out
                          + N * C_out * H_out * W_out)

    out = pl.pallas_call(
        kernel,
        out_shape=jax.ShapeDtypeStruct((N, C_out, H_out, W_out), out_dtype),
        grid_spec=pltpu.PrefetchScalarGridSpec(
            num_scalar_prefetch=0,
            grid=(N,),                                   # >= 2 parallel steps at demo batch
            in_specs=[
                pl.BlockSpec((1, C_in, H, W_p), lambda n: (n, 0, 0, 0)),
                pl.BlockSpec((C_out, KKC), lambda n: (0, 0)),
                pl.BlockSpec((C_out, 1), lambda n: (0, 0)),
            ],
            out_specs=pl.BlockSpec((1, C_out, H_out, W_out), lambda n: (n, 0, 0, 0)),
            scratch_shapes=[
                pltpu.VMEM((C_in, V_len), jnp.float32),
                pltpu.VMEM((KKC, Mp), jnp.float32),
            ],
        ),
        compiler_params=pltpu.CompilerParams(
            dimension_semantics=("parallel",),
            vmem_limit_bytes=32 * 1024 * 1024,           # explicit; well below every gen's cap
        ),
        cost_estimate=pl.CostEstimate(
            flops=flops, transcendentals=0, bytes_accessed=bytes_accessed),
    )(x_wp, w_lhs, b_col)
    return out


def _reference(x_nchw, weight_oihw, bias, *, kernel_size, stride, upsample):
    """Pure-JAX reference of the same forward pass (for correctness check)."""
    K = kernel_size
    x = jnp.transpose(x_nchw, (0, 2, 3, 1))
    x = jnp.repeat(jnp.repeat(x, upsample, axis=1), upsample, axis=2)
    pad = K // 2
    x = jnp.pad(x, ((0, 0), (pad, pad), (pad, pad), (0, 0)), mode="reflect")
    w_hwio = jnp.transpose(weight_oihw, (2, 3, 1, 0))
    out = lax.conv_general_dilated(
        x, w_hwio, window_strides=(stride, stride), padding="VALID",
        dimension_numbers=("NHWC", "HWIO", "NHWC"),
    )
    out = out + bias[None, None, None, :]
    return jnp.transpose(out, (0, 3, 1, 2))


if __name__ == "__main__":
    # Module config (small, consistent with the PyTorch module's __init__).
    in_channels, out_channels = 4, 8
    kernel_size, stride, upsample = 3, 1, 2
    N, H, W = 2, 16, 16

    key = jax.random.PRNGKey(0)
    kx, kw, kb = jax.random.split(key, 3)
    x = jax.random.normal(kx, (N, in_channels, H, W), dtype=jnp.float32)
    weight = 0.1 * jax.random.normal(
        kw, (out_channels, in_channels, kernel_size, kernel_size), dtype=jnp.float32)
    bias = 0.1 * jax.random.normal(kb, (out_channels,), dtype=jnp.float32)

    out = upsample_conv_layer(
        x, weight, bias, kernel_size=kernel_size, stride=stride, upsample=upsample)
    out = jax.block_until_ready(out)

    ref = _reference(
        x, weight, bias, kernel_size=kernel_size, stride=stride, upsample=upsample)
    ref = jax.block_until_ready(ref)

    assert out.shape == (N, out_channels, H * upsample, W * upsample), out.shape
    assert jnp.allclose(out, ref, atol=1e-4, rtol=1e-4), float(jnp.max(jnp.abs(out - ref)))

    print("KERNEL_OK")
</pallas_src>

<mosaic_0001>
module attributes {stable_mosaic.version = 11 : i64} {
  func.func @kernel(%arg0: i32, %arg1: memref<1x4x16x34xf32, #tpu.memory_space<vmem>>, %arg2: memref<8x36xf32, #tpu.memory_space<vmem>>, %arg3: memref<8x1xf32, #tpu.memory_space<vmem>>, %arg4: memref<1x8x32x32xf32, #tpu.memory_space<vmem>>, %arg5: memref<4x1158xf32, #tpu.memory_space<vmem>>, %arg6: memref<36x1088xf32, #tpu.memory_space<vmem>>) attributes {dimension_semantics = [#tpu.dimension_semantics<parallel>], iteration_bounds = array<i64: 2>, scalar_prefetch = 0 : i64, scratch_operands = 2 : i64, tpu.core_type = #tpu.core_type<tc>, window_params = [{transform_indices = @transform_0, window_bounds = array<i64: 1, 4, 16, 34>}, {pipeline_mode = #tpu.pipeline_mode<synchronous>, transform_indices = @transform_1, window_bounds = array<i64: 8, 36>}, {pipeline_mode = #tpu.pipeline_mode<synchronous>, transform_indices = @transform_2, window_bounds = array<i64: 8, 1>}, {transform_indices = @transform_3, window_bounds = array<i64: 1, 8, 32, 32>}]} {
    %c0 = arith.constant 0 : index
    %c0_0 = arith.constant 0 : index
    %c0_1 = arith.constant 0 : index
    %c0_2 = arith.constant 0 : index
    %0 = vector.load %arg1[%c0, %c0_0, %c0_1, %c0_2] : memref<1x4x16x34xf32, #tpu.memory_space<vmem>>, vector<1x4x16x34xf32>
    %1 = vector.shape_cast %0 : vector<1x4x16x34xf32> to vector<4x16x34xf32>
    %2 = vector.extract_strided_slice %1 {offsets = [0, 0, 0], sizes = [4, 1, 34], strides = [1, 1, 1]} : vector<4x16x34xf32> to vector<4x1x34xf32>
    %3 = vector.shape_cast %2 : vector<4x1x34xf32> to vector<4x34xf32>
    %c0_3 = arith.constant 0 : index
    %c0_4 = arith.constant 0 : index
    %4 = vector.load %arg5[%c0_3, %c0_4] : memref<4x1158xf32, #tpu.memory_space<vmem>>, vector<4x34xf32>
    tpu.vector_store %arg5[%c0_3, %c0_4], %3 {strides = array<i32>} : memref<4x1158xf32, #tpu.memory_space<vmem>>, vector<4x34xf32>,
    %5 = vector.extract_strided_slice %1 {offsets = [0, 0, 0], sizes = [4, 1, 34], strides = [1, 1, 1]} : vector<4x16x34xf32> to vector<4x1x34xf32>
    %6 = vector.shape_cast %5 : vector<4x1x34xf32> to vector<4x34xf32>
    %c0_5 = arith.constant 0 : index
    %c34 = arith.constant 34 : index
    %7 = vector.load %arg5[%c0_5, %c34] : memref<4x1158xf32, #tpu.memory_space<vmem>>, vector<4x34xf32>
    tpu.vector_store %arg5[%c0_5, %c34], %6 {strides = array<i32>} : memref<4x1158xf32, #tpu.memory_space<vmem>>, vector<4x34xf32>,
    %8 = vector.extract_strided_slice %1 {offsets = [0, 0, 0], sizes = [4, 1, 34], strides = [1, 1, 1]} : vector<4x16x34xf32> to vector<4x1x34xf32>
    %9 = vector.shape_cast %8 : vector<4x1x34xf32> to vector<4x34xf32>
    %c0_6 = arith.constant 0 : index
    %c68 = arith.constant 68 : index
    %10 = vector.load %arg5[%c0_6, %c68] : memref<4x1158xf32, #tpu.memory_space<vmem>>, vector<4x34xf32>
    tpu.vector_store %arg5[%c0_6, %c68], %9 {strides = array<i32>} : memref<4x1158xf32, #tpu.memory_space<vmem>>, vector<4x34xf32>,
    %11 = vector.extract_strided_slice %1 {offsets = [0, 1, 0], sizes = [4, 1, 34], strides = [1, 1, 1]} : vector<4x16x34xf32> to vector<4x1x34xf32>
    %12 = vector.shape_cast %11 : vector<4x1x34xf32> to vector<4x34xf32>
    %c0_7 = arith.constant 0 : index
    %c102 = arith.constant 102 : index
    %13 = vector.load %arg5[%c0_7, %c102] : memref<4x1158xf32, #tpu.memory_space<vmem>>, vector<4x34xf32>
    tpu.vector_store %arg5[%c0_7, %c102], %12 {strides = array<i32>} : memref<4x1158xf32, #tpu.memory_space<vmem>>, vector<4x34xf32>,
    %14 = vector.extract_strided_slice %1 {offsets = [0, 1, 0], sizes = [4, 1, 34], strides = [1, 1, 1]} : vector<4x16x34xf32> to vector<4x1x34xf32>
    %15 = vector.shape_cast %14 : vector<4x1x34xf32> to vector<4x34xf32>
    %c0_8 = arith.constant 0 : index
    %c136 = arith.constant 136 : index
    %16 = vector.load %arg5[%c0_8, %c136] : memref<4x1158xf32, #tpu.memory_space<vmem>>, vector<4x34xf32>
    tpu.vector_store %arg5[%c0_8, %c136], %15 {strides = array<i32>} : memref<4x1158xf32, #tpu.memory_space<vmem>>, vector<4x34xf32>,
    %17 = vector.extract_strided_slice %1 {offsets = [0, 2, 0], sizes = [4, 1, 34], strides = [1, 1, 1]} : vector<4x16x34xf32> to vector<4x1x34xf32>
    %18 = vector.shape_cast %17 : vector<4x1x34xf32> to vector<4x34xf32>
    %c0_9 = arith.constant 0 : index
    %c170 = arith.constant 170 : index
    %19 = vector.load %arg5[%c0_9, %c170] : memref<4x1158xf32, #tpu.memory_space<vmem>>, vector<4x34xf32>
    tpu.vector_store %arg5[%c0_9, %c170], %18 {strides = array<i32>} : memref<4x1158xf32, #tpu.memory_space<vmem>>, vector<4x34xf32>,
    %20 = vector.extract_strided_slice %1 {offsets = [0, 2, 0], sizes = [4, 1, 34], strides = [1, 1, 1]} : vector<4x16x34xf32> to vector<4x1x34xf32>
    %21 = vector.shape_cast %20 : vector<4x1x34xf32> to vector<4x34xf32>
    %c0_10 = arith.constant 0 : index
    %c204 = arith.constant 204 : index
    %22 = vector.load %arg5[%c0_10, %c204] : memref<4x1158xf32, #tpu.memory_space<vmem>>, vector<4x34xf32>
    tpu.vector_store %arg5[%c0_10, %c204], %21 {strides = array<i32>} : memref<4x1158xf32, #tpu.memory_space<vmem>>, vector<4x34xf32>,
    %23 = vector.extract_strided_slice %1 {offsets = [0, 3, 0], sizes = [4, 1, 34], strides = [1, 1, 1]} : vector<4x16x34xf32> to vector<4x1x34xf32>
    %24 = vector.shape_cast %23 : vector<4x1x34xf32> to vector<4x34xf32>
    %c0_11 = arith.constant 0 : index
    %c238 = arith.constant 238 : index
    %25 = vector.load %arg5[%c0_11, %c238] : memref<4x1158xf32, #tpu.memory_space<vmem>>, vector<4x34xf32>
    tpu.vector_store %arg5[%c0_11, %c238], %24 {strides = array<i32>} : memref<4x1158xf32, #tpu.memory_space<vmem>>, vector<4x34xf32>,
    %26 = vector.extract_strided_slice %1 {offsets = [0, 3, 0], sizes = [4, 1, 34], strides = [1, 1, 1]} : vector<4x16x34xf32> to vector<4x1x34xf32>
    %27 = vector.shape_cast %26 : vector<4x1x34xf32> to vector<4x34xf32>
    %c0_12 = arith.constant 0 : index
    %c272 = arith.constant 272 : index
    %28 = vector.load %arg5[%c0_12, %c272] : memref<4x1158xf32, #tpu.memory_space<vmem>>, vector<4x34xf32>
    tpu.vector_store %arg5[%c0_12, %c272], %27 {strides = array<i32>} : memref<4x1158xf32, #tpu.memory_space<vmem>>, vector<4x34xf32>,
    %29 = vector.extract_strided_slice %1 {offsets = [0, 4, 0], sizes = [4, 1, 34], strides = [1, 1, 1]} : vector<4x16x34xf32> to vector<4x1x34xf32>
    %30 = vector.shape_cast %29 : vector<4x1x34xf32> to vector<4x34xf32>
    %c0_13 = arith.constant 0 : index
    %c306 = arith.constant 306 : index
    %31 = vector.load %arg5[%c0_13, %c306] : memref<4x1158xf32, #tpu.memory_space<vmem>>, vector<4x34xf32>
    tpu.vector_store %arg5[%c0_13, %c306], %30 {strides = array<i32>} : memref<4x1158xf32, #tpu.memory_space<vmem>>, vector<4x34xf32>,
    %32 = vector.extract_strided_slice %1 {offsets = [0, 4, 0], sizes = [4, 1, 34], strides = [1, 1, 1]} : vector<4x16x34xf32> to vector<4x1x34xf32>
    %33 = vector.shape_cast %32 : vector<4x1x34xf32> to vector<4x34xf32>
    %c0_14 = arith.constant 0 : index
    %c340 = arith.constant 340 : index
    %34 = vector.load %arg5[%c0_14, %c340] : memref<4x1158xf32, #tpu.memory_space<vmem>>, vector<4x34xf32>
    tpu.vector_store %arg5[%c0_14, %c340], %33 {strides = array<i32>} : memref<4x1158xf32, #tpu.memory_space<vmem>>, vector<4x34xf32>,
    %35 = vector.extract_strided_slice %1 {offsets = [0, 5, 0], sizes = [4, 1, 34], strides = [1, 1, 1]} : vector<4x16x34xf32> to vector<4x1x34xf32>
    %36 = vector.shape_cast %35 : vector<4x1x34xf32> to vector<4x34xf32>
    %c0_15 = arith.constant 0 : index
    %c374 = arith.constant 374 : index
    %37 = vector.load %arg5[%c0_15, %c374] : memref<4x1158xf32, #tpu.memory_space<vmem>>, vector<4x34xf32>
    tpu.vector_store %arg5[%c0_15, %c374], %36 {strides = array<i32>} : memref<4x1158xf32, #tpu.memory_space<vmem>>, vector<4x34xf32>,
    %38 = vector.extract_strided_slice %1 {offsets = [0, 5, 0], sizes = [4, 1, 34], strides = [1, 1, 1]} : vector<4x16x34xf32> to vector<4x1x34xf32>
    %39 = vector.shape_cast %38 : vector<4x1x34xf32> to vector<4x34xf32>
    %c0_16 = arith.constant 0 : index
    %c408 = arith.constant 408 : index
    %40 = vector.load %arg5[%c0_16, %c408] : memref<4x1158xf32, #tpu.memory_space<vmem>>, vector<4x34xf32>
    tpu.vector_store %arg5[%c0_16, %c408], %39 {strides = array<i32>} : memref<4x1158xf32, #tpu.memory_space<vmem>>, vector<4x34xf32>,
    %41 = vector.extract_strided_slice %1 {offsets = [0, 6, 0], sizes = [4, 1, 34], strides = [1, 1, 1]} : vector<4x16x34xf32> to vector<4x1x34xf32>
    %42 = vector.shape_cast %41 : vector<4x1x34xf32> to vector<4x34xf32>
    %c0_17 = arith.constant 0 : index
    %c442 = arith.constant 442 : index
    %43 = vector.load %arg5[%c0_17, %c442] : memref<4x1158xf32, #tpu.memory_space<vmem>>, vector<4x34xf32>
    tpu.vector_store %arg5[%c0_17, %c442], %42 {strides = array<i32>} : memref<4x1158xf32, #tpu.memory_space<vmem>>, vector<4x34xf32>,
    %44 = vector.extract_strided_slice %1 {offsets = [0, 6, 0], sizes = [4, 1, 34], strides = [1, 1, 1]} : vector<4x16x34xf32> to vector<4x1x34xf32>
    %45 = vector.shape_cast %44 : vector<4x1x34xf32> to vector<4x34xf32>
    %c0_18 = arith.constant 0 : index
    %c476 = arith.constant 476 : index
    %46 = vector.load %arg5[%c0_18, %c476] : memref<4x1158xf32, #tpu.memory_space<vmem>>, vector<4x34xf32>
    tpu.vector_store %arg5[%c0_18, %c476], %45 {strides = array<i32>} : memref<4x1158xf32, #tpu.memory_space<vmem>>, vector<4x34xf32>,
    %47 = vector.extract_strided_slice %1 {offsets = [0, 7, 0], sizes = [4, 1, 34], strides = [1, 1, 1]} : vector<4x16x34xf32> to vector<4x1x34xf32>
    %48 = vector.shape_cast %47 : vector<4x1x34xf32> to vector<4x34xf32>
    %c0_19 = arith.constant 0 : index
    %c510 = arith.constant 510 : index
    %49 = vector.load %arg5[%c0_19, %c510] : memref<4x1158xf32, #tpu.memory_space<vmem>>, vector<4x34xf32>
    tpu.vector_store %arg5[%c0_19, %c510], %48 {strides = array<i32>} : memref<4x1158xf32, #tpu.memory_space<vmem>>, vector<4x34xf32>,
    %50 = vector.extract_strided_slice %1 {offsets = [0, 7, 0], sizes = [4, 1, 34], strides = [1, 1, 1]} : vector<4x16x34xf32> to vector<4x1x34xf32>
    %51 = vector.shape_cast %50 : vector<4x1x34xf32> to vector<4x34xf32>
    %c0_20 = arith.constant 0 : index
    %c544 = arith.constant 544 : index
    %52 = vector.load %arg5[%c0_20, %c544] : memref<4x1158xf32, #tpu.memory_space<vmem>>, vector<4x34xf32>
    tpu.vector_store %arg5[%c0_20, %c544], %51 {strides = array<i32>} : memref<4x1158xf32, #tpu.memory_space<vmem>>, vector<4x34xf32>,
    %53 = vector.extract_strided_slice %1 {offsets = [0, 8, 0], sizes = [4, 1, 34], strides = [1, 1, 1]} : vector<4x16x34xf32> to vector<4x1x34xf32>
    %54 = vector.shape_cast %53 : vector<4x1x34xf32> to vector<4x34xf32>
    %c0_21 = arith.constant 0 : index
    %c578 = arith.constant 578 : index
    %55 = vector.load %arg5[%c0_21, %c578] : memref<4x1158xf32, #tpu.memory_space<vmem>>, vector<4x34xf32>
    tpu.vector_store %arg5[%c0_21, %c578], %54 {strides = array<i32>} : memref<4x1158xf32, #tpu.memory_space<vmem>>, vector<4x34xf32>,
    %56 = vector.extract_strided_slice %1 {offsets = [0, 8, 0], sizes = [4, 1, 34], strides = [1, 1, 1]} : vector<4x16x34xf32> to vector<4x1x34xf32>
    %57 = vector.shape_cast %56 : vector<4x1x34xf32> to vector<4x34xf32>
    %c0_22 = arith.constant 0 : index
    %c612 = arith.constant 612 : index
    %58 = vector.load %arg5[%c0_22, %c612] : memref<4x1158xf32, #tpu.memory_space<vmem>>, vector<4x34xf32>
    tpu.vector_store %arg5[%c0_22, %c612], %57 {strides = array<i32>} : memref<4x1158xf32, #tpu.memory_space<vmem>>, vector<4x34xf32>,
    %59 = vector.extract_strided_slice %1 {offsets = [0, 9, 0], sizes = [4, 1, 34], strides = [1, 1, 1]} : vector<4x16x34xf32> to vector<4x1x34xf32>
    %60 = vector.shape_cast %59 : vector<4x1x34xf32> to vector<4x34xf32>
    %c0_23 = arith.constant 0 : index
    %c646 = arith.constant 646 : index
    %61 = vector.load %arg5[%c0_23, %c646] : memref<4x1158xf32, #tpu.memory_space<vmem>>, vector<4x34xf32>
    tpu.vector_store %arg5[%c0_23, %c646], %60 {strides = array<i32>} : memref<4x1158xf32, #tpu.memory_space<vmem>>, vector<4x34xf32>,
    %62 = vector.extract_strided_slice %1 {offsets = [0, 9, 0], sizes = [4, 1, 34], strides = [1, 1, 1]} : vector<4x16x34xf32> to vector<4x1x34xf32>
    %63 = vector.shape_cast %62 : vector<4x1x34xf32> to vector<4x34xf32>
    %c0_24 = arith.constant 0 : index
    %c680 = arith.constant 680 : index
    %64 = vector.load %arg5[%c0_24, %c680] : memref<4x1158xf32, #tpu.memory_space<vmem>>, vector<4x34xf32>
    tpu.vector_store %arg5[%c0_24, %c680], %63 {strides = array<i32>} : memref<4x1158xf32, #tpu.memory_space<vmem>>, vector<4x34xf32>,
    %65 = vector.extract_strided_slice %1 {offsets = [0, 10, 0], sizes = [4, 1, 34], strides = [1, 1, 1]} : vector<4x16x34xf32> to vector<4x1x34xf32>
    %66 = vector.shape_cast %65 : vector<4x1x34xf32> to vector<4x34xf32>
    %c0_25 = arith.constant 0 : index
    %c714 = arith.constant 714 : index
    %67 = vector.load %arg5[%c0_25, %c714] : memref<4x1158xf32, #tpu.memory_space<vmem>>, vector<4x34xf32>
    tpu.vector_store %arg5[%c0_25, %c714], %66 {strides = array<i32>} : memref<4x1158xf32, #tpu.memory_space<vmem>>, vector<4x34xf32>,
    %68 = vector.extract_strided_slice %1 {offsets = [0, 10, 0], sizes = [4, 1, 34], strides = [1, 1, 1]} : vector<4x16x34xf32> to vector<4x1x34xf32>
    %69 = vector.shape_cast %68 : vector<4x1x34xf32> to vector<4x34xf32>
    %c0_26 = arith.constant 0 : index
    %c748 = arith.constant 748 : index
    %70 = vector.load %arg5[%c0_26, %c748] : memref<4x1158xf32, #tpu.memory_space<vmem>>, vector<4x34xf32>
    tpu.vector_store %arg5[%c0_26, %c748], %69 {strides = array<i32>} : memref<4x1158xf32, #tpu.memory_space<vmem>>, vector<4x34xf32>,
    %71 = vector.extract_strided_slice %1 {offsets = [0, 11, 0], sizes = [4, 1, 34], strides = [1, 1, 1]} : vector<4x16x34xf32> to vector<4x1x34xf32>
    %72 = vector.shape_cast %71 : vector<4x1x34xf32> to vector<4x34xf32>
    %c0_27 = arith.constant 0 : index
    %c782 = arith.constant 782 : index
    %73 = vector.load %arg5[%c0_27, %c782] : memref<4x1158xf32, #tpu.memory_space<vmem>>, vector<4x34xf32>
    tpu.vector_store %arg5[%c0_27, %c782], %72 {strides = array<i32>} : memref<4x1158xf32, #tpu.memory_space<vmem>>, vector<4x34xf32>,
    %74 = vector.extract_strided_slice %1 {offsets = [0, 11, 0], sizes = [4, 1, 34], strides = [1, 1, 1]} : vector<4x16x34xf32> to vector<4x1x34xf32>
    %75 = vector.shape_cast %74 : vector<4x1x34xf32> to vector<4x34xf32>
    %c0_28 = arith.constant 0 : index
    %c816 = arith.constant 816 : index
    %76 = vector.load %arg5[%c0_28, %c816] : memref<4x1158xf32, #tpu.memory_space<vmem>>, vector<4x34xf32>
    tpu.vector_store %arg5[%c0_28, %c816], %75 {strides = array<i32>} : memref<4x1158xf32, #tpu.memory_space<vmem>>, vector<4x34xf32>,
    %77 = vector.extract_strided_slice %1 {offsets = [0, 12, 0], sizes = [4, 1, 34], strides = [1, 1, 1]} : vector<4x16x34xf32> to vector<4x1x34xf32>
    %78 = vector.shape_cast %77 : vector<4x1x34xf32> to vector<4x34xf32>
    %c0_29 = arith.constant 0 : index
    %c850 = arith.constant 850 : index
    %79 = vector.load %arg5[%c0_29, %c850] : memref<4x1158xf32, #tpu.memory_space<vmem>>, vector<4x34xf32>
    tpu.vector_store %arg5[%c0_29, %c850], %78 {strides = array<i32>} : memref<4x1158xf32, #tpu.memory_space<vmem>>, vector<4x34xf32>,
    %80 = vector.extract_strided_slice %1 {offsets = [0, 12, 0], sizes = [4, 1, 34], strides = [1, 1, 1]} : vector<4x16x34xf32> to vector<4x1x34xf32>
    %81 = vector.shape_cast %80 : vector<4x1x34xf32> to vector<4x34xf32>
    %c0_30 = arith.constant 0 : index
    %c884 = arith.constant 884 : index
    %82 = vector.load %arg5[%c0_30, %c884] : memref<4x1158xf32, #tpu.memory_space<vmem>>, vector<4x34xf32>
    tpu.vector_store %arg5[%c0_30, %c884], %81 {strides = array<i32>} : memref<4x1158xf32, #tpu.memory_space<vmem>>, vector<4x34xf32>,
    %83 = vector.extract_strided_slice %1 {offsets = [0, 13, 0], sizes = [4, 1, 34], strides = [1, 1, 1]} : vector<4x16x34xf32> to vector<4x1x34xf32>
    %84 = vector.shape_cast %83 : vector<4x1x34xf32> to vector<4x34xf32>
    %c0_31 = arith.constant 0 : index
    %c918 = arith.constant 918 : index
    %85 = vector.load %arg5[%c0_31, %c918] : memref<4x1158xf32, #tpu.memory_space<vmem>>, vector<4x34xf32>
    tpu.vector_store %arg5[%c0_31, %c918], %84 {strides = array<i32>} : memref<4x1158xf32, #tpu.memory_space<vmem>>, vector<4x34xf32>,
    %86 = vector.extract_strided_slice %1 {offsets = [0, 13, 0], sizes = [4, 1, 34], strides = [1, 1, 1]} : vector<4x16x34xf32> to vector<4x1x34xf32>
    %87 = vector.shape_cast %86 : vector<4x1x34xf32> to vector<4x34xf32>
    %c0_32 = arith.constant 0 : index
    %c952 = arith.constant 952 : index
    %88 = vector.load %arg5[%c0_32, %c952] : memref<4x1158xf32, #tpu.memory_space<vmem>>, vector<4x34xf32>
    tpu.vector_store %arg5[%c0_32, %c952], %87 {strides = array<i32>} : memref<4x1158xf32, #tpu.memory_space<vmem>>, vector<4x34xf32>,
    %89 = vector.extract_strided_slice %1 {offsets = [0, 14, 0], sizes = [4, 1, 34], strides = [1, 1, 1]} : vector<4x16x34xf32> to vector<4x1x34xf32>
    %90 = vector.shape_cast %89 : vector<4x1x34xf32> to vector<4x34xf32>
    %c0_33 = arith.constant 0 : index
    %c986 = arith.constant 986 : index
    %91 = vector.load %arg5[%c0_33, %c986] : memref<4x1158xf32, #tpu.memory_space<vmem>>, vector<4x34xf32>
    tpu.vector_store %arg5[%c0_33, %c986], %90 {strides = array<i32>} : memref<4x1158xf32, #tpu.memory_space<vmem>>, vector<4x34xf32>,
    %92 = vector.extract_strided_slice %1 {offsets = [0, 14, 0], sizes = [4, 1, 34], strides = [1, 1, 1]} : vector<4x16x34xf32> to vector<4x1x34xf32>
    %93 = vector.shape_cast %92 : vector<4x1x34xf32> to vector<4x34xf32>
    %c0_34 = arith.constant 0 : index
    %c1020 = arith.constant 1020 : index
    %94 = vector.load %arg5[%c0_34, %c1020] : memref<4x1158xf32, #tpu.memory_space<vmem>>, vector<4x34xf32>
    tpu.vector_store %arg5[%c0_34, %c1020], %93 {strides = array<i32>} : memref<4x1158xf32, #tpu.memory_space<vmem>>, vector<4x34xf32>,
    %95 = vector.extract_strided_slice %1 {offsets = [0, 15, 0], sizes = [4, 1, 34], strides = [1, 1, 1]} : vector<4x16x34xf32> to vector<4x1x34xf32>
    %96 = vector.shape_cast %95 : vector<4x1x34xf32> to vector<4x34xf32>
    %c0_35 = arith.constant 0 : index
    %c1054 = arith.constant 1054 : index
    %97 = vector.load %arg5[%c0_35, %c1054] : memref<4x1158xf32, #tpu.memory_space<vmem>>, vector<4x34xf32>
    tpu.vector_store %arg5[%c0_35, %c1054], %96 {strides = array<i32>} : memref<4x1158xf32, #tpu.memory_space<vmem>>, vector<4x34xf32>,
    %98 = vector.extract_strided_slice %1 {offsets = [0, 15, 0], sizes = [4, 1, 34], strides = [1, 1, 1]} : vector<4x16x34xf32> to vector<4x1x34xf32>
    %99 = vector.shape_cast %98 : vector<4x1x34xf32> to vector<4x34xf32>
    %c0_36 = arith.constant 0 : index
    %c1088 = arith.constant 1088 : index
    %100 = vector.load %arg5[%c0_36, %c1088] : memref<4x1158xf32, #tpu.memory_space<vmem>>, vector<4x34xf32>
    tpu.vector_store %arg5[%c0_36, %c1088], %99 {strides = array<i32>} : memref<4x1158xf32, #tpu.memory_space<vmem>>, vector<4x34xf32>,
    %101 = vector.extract_strided_slice %1 {offsets = [0, 15, 0], sizes = [4, 1, 34], strides = [1, 1, 1]} : vector<4x16x34xf32> to vector<4x1x34xf32>
    %102 = vector.shape_cast %101 : vector<4x1x34xf32> to vector<4x34xf32>
    %c0_37 = arith.constant 0 : index
    %c1122 = arith.constant 1122 : index
    %103 = vector.load %arg5[%c0_37, %c1122] : memref<4x1158xf32, #tpu.memory_space<vmem>>, vector<4x34xf32>
    tpu.vector_store %arg5[%c0_37, %c1122], %102 {strides = array<i32>} : memref<4x1158xf32, #tpu.memory_space<vmem>>, vector<4x34xf32>,
    %cst = arith.constant 0.000000e+00 : f32
    %104 = vector.broadcast %cst : f32 to vector<4x2xf32>
    %c0_38 = arith.constant 0 : index
    %c1156 = arith.constant 1156 : index
    %105 = vector.load %arg5[%c0_38, %c1156] : memref<4x1158xf32, #tpu.memory_space<vmem>>, vector<4x2xf32>
    tpu.vector_store %arg5[%c0_38, %c1156], %104 {strides = array<i32>} : memref<4x1158xf32, #tpu.memory_space<vmem>>, vector<4x2xf32>,
    %c0_39 = arith.constant 0 : index
    %c0_40 = arith.constant 0 : index
    %106 = vector.load %arg5[%c0_39, %c0_40] : memref<4x1158xf32, #tpu.memory_space<vmem>>, vector<4x1088xf32>
    %c0_41 = arith.constant 0 : index
    %c0_42 = arith.constant 0 : index
    %107 = vector.load %arg6[%c0_41, %c0_42] : memref<36x1088xf32, #tpu.memory_space<vmem>>, vector<4x1088xf32>
    tpu.vector_store %arg6[%c0_41, %c0_42], %106 {strides = array<i32>} : memref<36x1088xf32, #tpu.memory_space<vmem>>, vector<4x1088xf32>,
    %c0_43 = arith.constant 0 : index
    %c1 = arith.constant 1 : index
    %108 = vector.load %arg5[%c0_43, %c1] : memref<4x1158xf32, #tpu.memory_space<vmem>>, vector<4x1088xf32>
    %c4 = arith.constant 4 : index
    %c0_44 = arith.constant 0 : index
    %109 = vector.load %arg6[%c4, %c0_44] : memref<36x1088xf32, #tpu.memory_space<vmem>>, vector<4x1088xf32>
    tpu.vector_store %arg6[%c4, %c0_44], %108 {strides = array<i32>} : memref<36x1088xf32, #tpu.memory_space<vmem>>, vector<4x1088xf32>,
    %c0_45 = arith.constant 0 : index
    %c2 = arith.constant 2 : index
    %110 = vector.load %arg5[%c0_45, %c2] : memref<4x1158xf32, #tpu.memory_space<vmem>>, vector<4x1088xf32>
    %c8 = arith.constant 8 : index
    %c0_46 = arith.constant 0 : index
    %111 = vector.load %arg6[%c8, %c0_46] : memref<36x1088xf32, #tpu.memory_space<vmem>>, vector<4x1088xf32>
    tpu.vector_store %arg6[%c8, %c0_46], %110 {strides = array<i32>} : memref<36x1088xf32, #tpu.memory_space<vmem>>, vector<4x1088xf32>,
    %c0_47 = arith.constant 0 : index
    %c34_48 = arith.constant 34 : index
    %112 = vector.load %arg5[%c0_47, %c34_48] : memref<4x1158xf32, #tpu.memory_space<vmem>>, vector<4x1088xf32>
    %c12 = arith.constant 12 : index
    %c0_49 = arith.constant 0 : index
    %113 = vector.load %arg6[%c12, %c0_49] : memref<36x1088xf32, #tpu.memory_space<vmem>>, vector<4x1088xf32>
    tpu.vector_store %arg6[%c12, %c0_49], %112 {strides = array<i32>} : memref<36x1088xf32, #tpu.memory_space<vmem>>, vector<4x1088xf32>,
    %c0_50 = arith.constant 0 : index
    %c35 = arith.constant 35 : index
    %114 = vector.load %arg5[%c0_50, %c35] : memref<4x1158xf32, #tpu.memory_space<vmem>>, vector<4x1088xf32>
    %c16 = arith.constant 16 : index
    %c0_51 = arith.constant 0 : index
    %115 = vector.load %arg6[%c16, %c0_51] : memref<36x1088xf32, #tpu.memory_space<vmem>>, vector<4x1088xf32>
    tpu.vector_store %arg6[%c16, %c0_51], %114 {strides = array<i32>} : memref<36x1088xf32, #tpu.memory_space<vmem>>, vector<4x1088xf32>,
    %c0_52 = arith.constant 0 : index
    %c36 = arith.constant 36 : index
    %116 = vector.load %arg5[%c0_52, %c36] : memref<4x1158xf32, #tpu.memory_space<vmem>>, vector<4x1088xf32>
    %c20 = arith.constant 20 : index
    %c0_53 = arith.constant 0 : index
    %117 = vector.load %arg6[%c20, %c0_53] : memref<36x1088xf32, #tpu.memory_space<vmem>>, vector<4x1088xf32>
    tpu.vector_store %arg6[%c20, %c0_53], %116 {strides = array<i32>} : memref<36x1088xf32, #tpu.memory_space<vmem>>, vector<4x1088xf32>,
    %c0_54 = arith.constant 0 : index
    %c68_55 = arith.constant 68 : index
    %118 = vector.load %arg5[%c0_54, %c68_55] : memref<4x1158xf32, #tpu.memory_space<vmem>>, vector<4x1088xf32>
    %c24 = arith.constant 24 : index
    %c0_56 = arith.constant 0 : index
    %119 = vector.load %arg6[%c24, %c0_56] : memref<36x1088xf32, #tpu.memory_space<vmem>>, vector<4x1088xf32>
    tpu.vector_store %arg6[%c24, %c0_56], %118 {strides = array<i32>} : memref<36x1088xf32, #tpu.memory_space<vmem>>, vector<4x1088xf32>,
    %c0_57 = arith.constant 0 : index
    %c69 = arith.constant 69 : index
    %120 = vector.load %arg5[%c0_57, %c69] : memref<4x1158xf32, #tpu.memory_space<vmem>>, vector<4x1088xf32>
    %c28 = arith.constant 28 : index
    %c0_58 = arith.constant 0 : index
    %121 = vector.load %arg6[%c28, %c0_58] : memref<36x1088xf32, #tpu.memory_space<vmem>>, vector<4x1088xf32>
    tpu.vector_store %arg6[%c28, %c0_58], %120 {strides = array<i32>} : memref<36x1088xf32, #tpu.memory_space<vmem>>, vector<4x1088xf32>,
    %c0_59 = arith.constant 0 : index
    %c70 = arith.constant 70 : index
    %122 = vector.load %arg5[%c0_59, %c70] : memref<4x1158xf32, #tpu.memory_space<vmem>>, vector<4x1088xf32>
    %c32 = arith.constant 32 : index
    %c0_60 = arith.constant 0 : index
    %123 = vector.load %arg6[%c32, %c0_60] : memref<36x1088xf32, #tpu.memory_space<vmem>>, vector<4x1088xf32>
    tpu.vector_store %arg6[%c32, %c0_60], %122 {strides = array<i32>} : memref<36x1088xf32, #tpu.memory_space<vmem>>, vector<4x1088xf32>,
    %c0_61 = arith.constant 0 : index
    %c0_62 = arith.constant 0 : index
    %124 = vector.load %arg2[%c0_61, %c0_62] : memref<8x36xf32, #tpu.memory_space<vmem>>, vector<8x36xf32>
    %c0_63 = arith.constant 0 : index
    %c0_64 = arith.constant 0 : index
    %125 = vector.load %arg6[%c0_63, %c0_64] : memref<36x1088xf32, #tpu.memory_space<vmem>>, vector<36x1088xf32>
    %cst_65 = arith.constant dense<0.000000e+00> : vector<8x1088xf32>
    %126 = tpu.matmul %124, %125, %cst_65 {dimension_numbers = #tpu.dot_dimension_numbers<[1], [0], [0], [1], [0, 0, 1, 1], [], []>} : vector<8x36xf32>, vector<36x1088xf32>, vector<8x1088xf32> -> vector<8x1088xf32>
    %c0_66 = arith.constant 0 : index
    %c0_67 = arith.constant 0 : index
    %127 = vector.load %arg3[%c0_66, %c0_67] : memref<8x1xf32, #tpu.memory_space<vmem>>, vector<8x1xf32>
    %128 = vector.broadcast %127 : vector<8x1xf32> to vector<8x1088xf32>
    %129 = arith.addf %126, %128 : vector<8x1088xf32>
    %130 = vector.extract_strided_slice %129 {offsets = [0, 0], sizes = [8, 32], strides = [1, 1]} : vector<8x1088xf32> to vector<8x32xf32>
    %c0_68 = arith.constant 0 : index
    %c0_69 = arith.constant 0 : index
    %c0_70 = arith.constant 0 : index
    %c0_71 = arith.constant 0 : index
    %131 = vector.load %arg4[%c0_68, %c0_69, %c0_70, %c0_71] : memref<1x8x32x32xf32, #tpu.memory_space<vmem>>, vector<1x8x1x32xf32>
    %132 = vector.shape_cast %131 : vector<1x8x1x32xf32> to vector<8x32xf32>
    %133 = vector.shape_cast %130 : vector<8x32xf32> to vector<1x8x1x32xf32>
    tpu.vector_store %arg4[%c0_68, %c0_69, %c0_70, %c0_71], %133 {strides = array<i32>} : memref<1x8x32x32xf32, #tpu.memory_space<vmem>>, vector<1x8x1x32xf32>,
    %134 = vector.extract_strided_slice %129 {offsets = [0, 34], sizes = [8, 32], strides = [1, 1]} : vector<8x1088xf32> to vector<8x32xf32>
    %c0_72 = arith.constant 0 : index
    %c0_73 = arith.constant 0 : index
    %c1_74 = arith.constant 1 : index
    %c0_75 = arith.constant 0 : index
    %135 = vector.load %arg4[%c0_72, %c0_73, %c1_74, %c0_75] : memref<1x8x32x32xf32, #tpu.memory_space<vmem>>, vector<1x8x1x32xf32>
    %136 = vector.shape_cast %135 : vector<1x8x1x32xf32> to vector<8x32xf32>
    %137 = vector.shape_cast %134 : vector<8x32xf32> to vector<1x8x1x32xf32>
    tpu.vector_store %arg4[%c0_72, %c0_73, %c1_74, %c0_75], %137 {strides = array<i32>} : memref<1x8x32x32xf32, #tpu.memory_space<vmem>>, vector<1x8x1x32xf32>,
    %138 = vector.extract_strided_slice %129 {offsets = [0, 68], sizes = [8, 32], strides = [1, 1]} : vector<8x1088xf32> to vector<8x32xf32>
    %c0_76 = arith.constant 0 : index
    %c0_77 = arith.constant 0 : index
    %c2_78 = arith.constant 2 : index
    %c0_79 = arith.constant 0 : index
    %139 = vector.load %arg4[%c0_76, %c0_77, %c2_78, %c0_79] : memref<1x8x32x32xf32, #tpu.memory_space<vmem>>, vector<1x8x1x32xf32>
    %140 = vector.shape_cast %139 : vector<1x8x1x32xf32> to vector<8x32xf32>
    %141 = vector.shape_cast %138 : vector<8x32xf32> to vector<1x8x1x32xf32>
    tpu.vector_store %arg4[%c0_76, %c0_77, %c2_78, %c0_79], %141 {strides = array<i32>} : memref<1x8x32x32xf32, #tpu.memory_space<vmem>>, vector<1x8x1x32xf32>,
    %142 = vector.extract_strided_slice %129 {offsets = [0, 102], sizes = [8, 32], strides = [1, 1]} : vector<8x1088xf32> to vector<8x32xf32>
    %c0_80 = arith.constant 0 : index
    %c0_81 = arith.constant 0 : index
    %c3 = arith.constant 3 : index
    %c0_82 = arith.constant 0 : index
    %143 = vector.load %arg4[%c0_80, %c0_81, %c3, %c0_82] : memref<1x8x32x32xf32, #tpu.memory_space<vmem>>, vector<1x8x1x32xf32>
    %144 = vector.shape_cast %143 : vector<1x8x1x32xf32> to vector<8x32xf32>
    %145 = vector.shape_cast %142 : vector<8x32xf32> to vector<1x8x1x32xf32>
    tpu.vector_store %arg4[%c0_80, %c0_81, %c3, %c0_82], %145 {strides = array<i32>} : memref<1x8x32x32xf32, #tpu.memory_space<vmem>>, vector<1x8x1x32xf32>,
    %146 = vector.extract_strided_slice %129 {offsets = [0, 136], sizes = [8, 32], strides = [1, 1]} : vector<8x1088xf32> to vector<8x32xf32>
    %c0_83 = arith.constant 0 : index
    %c0_84 = arith.constant 0 : index
    %c4_85 = arith.constant 4 : index
    %c0_86 = arith.constant 0 : index
    %147 = vector.load %arg4[%c0_83, %c0_84, %c4_85, %c0_86] : memref<1x8x32x32xf32, #tpu.memory_space<vmem>>, vector<1x8x1x32xf32>
    %148 = vector.shape_cast %147 : vector<1x8x1x32xf32> to vector<8x32xf32>
    %149 = vector.shape_cast %146 : vector<8x32xf32> to vector<1x8x1x32xf32>
    tpu.vector_store %arg4[%c0_83, %c0_84, %c4_85, %c0_86], %149 {strides = array<i32>} : memref<1x8x32x32xf32, #tpu.memory_space<vmem>>, vector<1x8x1x32xf32>,
    %150 = vector.extract_strided_slice %129 {offsets = [0, 170], sizes = [8, 32], strides = [1, 1]} : vector<8x1088xf32> to vector<8x32xf32>
    %c0_87 = arith.constant 0 : index
    %c0_88 = arith.constant 0 : index
    %c5 = arith.constant 5 : index
    %c0_89 = arith.constant 0 : index
    %151 = vector.load %arg4[%c0_87, %c0_88, %c5, %c0_89] : memref<1x8x32x32xf32, #tpu.memory_space<vmem>>, vector<1x8x1x32xf32>
    %152 = vector.shape_cast %151 : vector<1x8x1x32xf32> to vector<8x32xf32>
    %153 = vector.shape_cast %150 : vector<8x32xf32> to vector<1x8x1x32xf32>
    tpu.vector_store %arg4[%c0_87, %c0_88, %c5, %c0_89], %153 {strides = array<i32>} : memref<1x8x32x32xf32, #tpu.memory_space<vmem>>, vector<1x8x1x32xf32>,
    %154 = vector.extract_strided_slice %129 {offsets = [0, 204], sizes = [8, 32], strides = [1, 1]} : vector<8x1088xf32> to vector<8x32xf32>
    %c0_90 = arith.constant 0 : index
    %c0_91 = arith.constant 0 : index
    %c6 = arith.constant 6 : index
    %c0_92 = arith.constant 0 : index
    %155 = vector.load %arg4[%c0_90, %c0_91, %c6, %c0_92] : memref<1x8x32x32xf32, #tpu.memory_space<vmem>>, vector<1x8x1x32xf32>
    %156 = vector.shape_cast %155 : vector<1x8x1x32xf32> to vector<8x32xf32>
    %157 = vector.shape_cast %154 : vector<8x32xf32> to vector<1x8x1x32xf32>
    tpu.vector_store %arg4[%c0_90, %c0_91, %c6, %c0_92], %157 {strides = array<i32>} : memref<1x8x32x32xf32, #tpu.memory_space<vmem>>, vector<1x8x1x32xf32>,
    %158 = vector.extract_strided_slice %129 {offsets = [0, 238], sizes = [8, 32], strides = [1, 1]} : vector<8x1088xf32> to vector<8x32xf32>
    %c0_93 = arith.constant 0 : index
    %c0_94 = arith.constant 0 : index
    %c7 = arith.constant 7 : index
    %c0_95 = arith.constant 0 : index
    %159 = vector.load %arg4[%c0_93, %c0_94, %c7, %c0_95] : memref<1x8x32x32xf32, #tpu.memory_space<vmem>>, vector<1x8x1x32xf32>
    %160 = vector.shape_cast %159 : vector<1x8x1x32xf32> to vector<8x32xf32>
    %161 = vector.shape_cast %158 : vector<8x32xf32> to vector<1x8x1x32xf32>
    tpu.vector_store %arg4[%c0_93, %c0_94, %c7, %c0_95], %161 {strides = array<i32>} : memref<1x8x32x32xf32, #tpu.memory_space<vmem>>, vector<1x8x1x32xf32>,
    %162 = vector.extract_strided_slice %129 {offsets = [0, 272], sizes = [8, 32], strides = [1, 1]} : vector<8x1088xf32> to vector<8x32xf32>
    %c0_96 = arith.constant 0 : index
    %c0_97 = arith.constant 0 : index
    %c8_98 = arith.constant 8 : index
    %c0_99 = arith.constant 0 : index
    %163 = vector.load %arg4[%c0_96, %c0_97, %c8_98, %c0_99] : memref<1x8x32x32xf32, #tpu.memory_space<vmem>>, vector<1x8x1x32xf32>
    %164 = vector.shape_cast %163 : vector<1x8x1x32xf32> to vector<8x32xf32>
    %165 = vector.shape_cast %162 : vector<8x32xf32> to vector<1x8x1x32xf32>
    tpu.vector_store %arg4[%c0_96, %c0_97, %c8_98, %c0_99], %165 {strides = array<i32>} : memref<1x8x32x32xf32, #tpu.memory_space<vmem>>, vector<1x8x1x32xf32>,
    %166 = vector.extract_strided_slice %129 {offsets = [0, 306], sizes = [8, 32], strides = [1, 1]} : vector<8x1088xf32> to vector<8x32xf32>
    %c0_100 = arith.constant 0 : index
    %c0_101 = arith.constant 0 : index
    %c9 = arith.constant 9 : index
    %c0_102 = arith.constant 0 : index
    %167 = vector.load %arg4[%c0_100, %c0_101, %c9, %c0_102] : memref<1x8x32x32xf32, #tpu.memory_space<vmem>>, vector<1x8x1x32xf32>
    %168 = vector.shape_cast %167 : vector<1x8x1x32xf32> to vector<8x32xf32>
    %169 = vector.shape_cast %166 : vector<8x32xf32> to vector<1x8x1x32xf32>
    tpu.vector_store %arg4[%c0_100, %c0_101, %c9, %c0_102], %169 {strides = array<i32>} : memref<1x8x32x32xf32, #tpu.memory_space<vmem>>, vector<1x8x1x32xf32>,
    %170 = vector.extract_strided_slice %129 {offsets = [0, 340], sizes = [8, 32], strides = [1, 1]} : vector<8x1088xf32> to vector<8x32xf32>
    %c0_103 = arith.constant 0 : index
    %c0_104 = arith.constant 0 : index
    %c10 = arith.constant 10 : index
    %c0_105 = arith.constant 0 : index
    %171 = vector.load %arg4[%c0_103, %c0_104, %c10, %c0_105] : memref<1x8x32x32xf32, #tpu.memory_space<vmem>>, vector<1x8x1x32xf32>
    %172 = vector.shape_cast %171 : vector<1x8x1x32xf32> to vector<8x32xf32>
    %173 = vector.shape_cast %170 : vector<8x32xf32> to vector<1x8x1x32xf32>
    tpu.vector_store %arg4[%c0_103, %c0_104, %c10, %c0_105], %173 {strides = array<i32>} : memref<1x8x32x32xf32, #tpu.memory_space<vmem>>, vector<1x8x1x32xf32>,
    %174 = vector.extract_strided_slice %129 {offsets = [0, 374], sizes = [8, 32], strides = [1, 1]} : vector<8x1088xf32> to vector<8x32xf32>
    %c0_106 = arith.constant 0 : index
    %c0_107 = arith.constant 0 : index
    %c11 = arith.constant 11 : index
    %c0_108 = arith.constant 0 : index
    %175 = vector.load %arg4[%c0_106, %c0_107, %c11, %c0_108] : memref<1x8x32x32xf32, #tpu.memory_space<vmem>>, vector<1x8x1x32xf32>
    %176 = vector.shape_cast %175 : vector<1x8x1x32xf32> to vector<8x32xf32>
    %177 = vector.shape_cast %174 : vector<8x32xf32> to vector<1x8x1x32xf32>
    tpu.vector_store %arg4[%c0_106, %c0_107, %c11, %c0_108], %177 {strides = array<i32>} : memref<1x8x32x32xf32, #tpu.memory_space<vmem>>, vector<1x8x1x32xf32>,
    %178 = vector.extract_strided_slice %129 {offsets = [0, 408], sizes = [8, 32], strides = [1, 1]} : vector<8x1088xf32> to vector<8x32xf32>
    %c0_109 = arith.constant 0 : index
    %c0_110 = arith.constant 0 : index
    %c12_111 = arith.constant 12 : index
    %c0_112 = arith.constant 0 : index
    %179 = vector.load %arg4[%c0_109, %c0_110, %c12_111, %c0_112] : memref<1x8x32x32xf32, #tpu.memory_space<vmem>>, vector<1x8x1x32xf32>
    %180 = vector.shape_cast %179 : vector<1x8x1x32xf32> to vector<8x32xf32>
    %181 = vector.shape_cast %178 : vector<8x32xf32> to vector<1x8x1x32xf32>
    tpu.vector_store %arg4[%c0_109, %c0_110, %c12_111, %c0_112], %181 {strides = array<i32>} : memref<1x8x32x32xf32, #tpu.memory_space<vmem>>, vector<1x8x1x32xf32>,
    %182 = vector.extract_strided_slice %129 {offsets = [0, 442], sizes = [8, 32], strides = [1, 1]} : vector<8x1088xf32> to vector<8x32xf32>
    %c0_113 = arith.constant 0 : index
    %c0_114 = arith.constant 0 : index
    %c13 = arith.constant 13 : index
    %c0_115 = arith.constant 0 : index
    %183 = vector.load %arg4[%c0_113, %c0_114, %c13, %c0_115] : memref<1x8x32x32xf32, #tpu.memory_space<vmem>>, vector<1x8x1x32xf32>
    %184 = vector.shape_cast %183 : vector<1x8x1x32xf32> to vector<8x32xf32>
    %185 = vector.shape_cast %182 : vector<8x32xf32> to vector<1x8x1x32xf32>
    tpu.vector_store %arg4[%c0_113, %c0_114, %c13, %c0_115], %185 {strides = array<i32>} : memref<1x8x32x32xf32, #tpu.memory_space<vmem>>, vector<1x8x1x32xf32>,
    %186 = vector.extract_strided_slice %129 {offsets = [0, 476], sizes = [8, 32], strides = [1, 1]} : vector<8x1088xf32> to vector<8x32xf32>
    %c0_116 = arith.constant 0 : index
    %c0_117 = arith.constant 0 : index
    %c14 = arith.constant 14 : index
    %c0_118 = arith.constant 0 : index
    %187 = vector.load %arg4[%c0_116, %c0_117, %c14, %c0_118] : memref<1x8x32x32xf32, #tpu.memory_space<vmem>>, vector<1x8x1x32xf32>
    %188 = vector.shape_cast %187 : vector<1x8x1x32xf32> to vector<8x32xf32>
    %189 = vector.shape_cast %186 : vector<8x32xf32> to vector<1x8x1x32xf32>
    tpu.vector_store %arg4[%c0_116, %c0_117, %c14, %c0_118], %189 {strides = array<i32>} : memref<1x8x32x32xf32, #tpu.memory_space<vmem>>, vector<1x8x1x32xf32>,
    %190 = vector.extract_strided_slice %129 {offsets = [0, 510], sizes = [8, 32], strides = [1, 1]} : vector<8x1088xf32> to vector<8x32xf32>
    %c0_119 = arith.constant 0 : index
    %c0_120 = arith.constant 0 : index
    %c15 = arith.constant 15 : index
    %c0_121 = arith.constant 0 : index
    %191 = vector.load %arg4[%c0_119, %c0_120, %c15, %c0_121] : memref<1x8x32x32xf32, #tpu.memory_space<vmem>>, vector<1x8x1x32xf32>
    %192 = vector.shape_cast %191 : vector<1x8x1x32xf32> to vector<8x32xf32>
    %193 = vector.shape_cast %190 : vector<8x32xf32> to vector<1x8x1x32xf32>
    tpu.vector_store %arg4[%c0_119, %c0_120, %c15, %c0_121], %193 {strides = array<i32>} : memref<1x8x32x32xf32, #tpu.memory_space<vmem>>, vector<1x8x1x32xf32>,
    %194 = vector.extract_strided_slice %129 {offsets = [0, 544], sizes = [8, 32], strides = [1, 1]} : vector<8x1088xf32> to vector<8x32xf32>
    %c0_122 = arith.constant 0 : index
    %c0_123 = arith.constant 0 : index
    %c16_124 = arith.constant 16 : index
    %c0_125 = arith.constant 0 : index
    %195 = vector.load %arg4[%c0_122, %c0_123, %c16_124, %c0_125] : memref<1x8x32x32xf32, #tpu.memory_space<vmem>>, vector<1x8x1x32xf32>
    %196 = vector.shape_cast %195 : vector<1x8x1x32xf32> to vector<8x32xf32>
    %197 = vector.shape_cast %194 : vector<8x32xf32> to vector<1x8x1x32xf32>
    tpu.vector_store %arg4[%c0_122, %c0_123, %c16_124, %c0_125], %197 {strides = array<i32>} : memref<1x8x32x32xf32, #tpu.memory_space<vmem>>, vector<1x8x1x32xf32>,
    %198 = vector.extract_strided_slice %129 {offsets = [0, 578], sizes = [8, 32], strides = [1, 1]} : vector<8x1088xf32> to vector<8x32xf32>
    %c0_126 = arith.constant 0 : index
    %c0_127 = arith.constant 0 : index
    %c17 = arith.constant 17 : index
    %c0_128 = arith.constant 0 : index
    %199 = vector.load %arg4[%c0_126, %c0_127, %c17, %c0_128] : memref<1x8x32x32xf32, #tpu.memory_space<vmem>>, vector<1x8x1x32xf32>
    %200 = vector.shape_cast %199 : vector<1x8x1x32xf32> to vector<8x32xf32>
    %201 = vector.shape_cast %198 : vector<8x32xf32> to vector<1x8x1x32xf32>
    tpu.vector_store %arg4[%c0_126, %c0_127, %c17, %c0_128], %201 {strides = array<i32>} : memref<1x8x32x32xf32, #tpu.memory_space<vmem>>, vector<1x8x1x32xf32>,
    %202 = vector.extract_strided_slice %129 {offsets = [0, 612], sizes = [8, 32], strides = [1, 1]} : vector<8x1088xf32> to vector<8x32xf32>
    %c0_129 = arith.constant 0 : index
    %c0_130 = arith.constant 0 : index
    %c18 = arith.constant 18 : index
    %c0_131 = arith.constant 0 : index
    %203 = vector.load %arg4[%c0_129, %c0_130, %c18, %c0_131] : memref<1x8x32x32xf32, #tpu.memory_space<vmem>>, vector<1x8x1x32xf32>
    %204 = vector.shape_cast %203 : vector<1x8x1x32xf32> to vector<8x32xf32>
    %205 = vector.shape_cast %202 : vector<8x32xf32> to vector<1x8x1x32xf32>
    tpu.vector_store %arg4[%c0_129, %c0_130, %c18, %c0_131], %205 {strides = array<i32>} : memref<1x8x32x32xf32, #tpu.memory_space<vmem>>, vector<1x8x1x32xf32>,
    %206 = vector.extract_strided_slice %129 {offsets = [0, 646], sizes = [8, 32], strides = [1, 1]} : vector<8x1088xf32> to vector<8x32xf32>
    %c0_132 = arith.constant 0 : index
    %c0_133 = arith.constant 0 : index
    %c19 = arith.constant 19 : index
    %c0_134 = arith.constant 0 : index
    %207 = vector.load %arg4[%c0_132, %c0_133, %c19, %c0_134] : memref<1x8x32x32xf32, #tpu.memory_space<vmem>>, vector<1x8x1x32xf32>
    %208 = vector.shape_cast %207 : vector<1x8x1x32xf32> to vector<8x32xf32>
    %209 = vector.shape_cast %206 : vector<8x32xf32> to vector<1x8x1x32xf32>
    tpu.vector_store %arg4[%c0_132, %c0_133, %c19, %c0_134], %209 {strides = array<i32>} : memref<1x8x32x32xf32, #tpu.memory_space<vmem>>, vector<1x8x1x32xf32>,
    %210 = vector.extract_strided_slice %129 {offsets = [0, 680], sizes = [8, 32], strides = [1, 1]} : vector<8x1088xf32> to vector<8x32xf32>
    %c0_135 = arith.constant 0 : index
    %c0_136 = arith.constant 0 : index
    %c20_137 = arith.constant 20 : index
    %c0_138 = arith.constant 0 : index
    %211 = vector.load %arg4[%c0_135, %c0_136, %c20_137, %c0_138] : memref<1x8x32x32xf32, #tpu.memory_space<vmem>>, vector<1x8x1x32xf32>
    %212 = vector.shape_cast %211 : vector<1x8x1x32xf32> to vector<8x32xf32>
    %213 = vector.shape_cast %210 : vector<8x32xf32> to vector<1x8x1x32xf32>
    tpu.vector_store %arg4[%c0_135, %c0_136, %c20_137, %c0_138], %213 {strides = array<i32>} : memref<1x8x32x32xf32, #tpu.memory_space<vmem>>, vector<1x8x1x32xf32>,
    %214 = vector.extract_strided_slice %129 {offsets = [0, 714], sizes = [8, 32], strides = [1, 1]} : vector<8x1088xf32> to vector<8x32xf32>
    %c0_139 = arith.constant 0 : index
    %c0_140 = arith.constant 0 : index
    %c21 = arith.constant 21 : index
    %c0_141 = arith.constant 0 : index
    %215 = vector.load %arg4[%c0_139, %c0_140, %c21, %c0_141] : memref<1x8x32x32xf32, #tpu.memory_space<vmem>>, vector<1x8x1x32xf32>
    %216 = vector.shape_cast %215 : vector<1x8x1x32xf32> to vector<8x32xf32>
    %217 = vector.shape_cast %214 : vector<8x32xf32> to vector<1x8x1x32xf32>
    tpu.vector_store %arg4[%c0_139, %c0_140, %c21, %c0_141], %217 {strides = array<i32>} : memref<1x8x32x32xf32, #tpu.memory_space<vmem>>, vector<1x8x1x32xf32>,
    %218 = vector.extract_strided_slice %129 {offsets = [0, 748], sizes = [8, 32], strides = [1, 1]} : vector<8x1088xf32> to vector<8x32xf32>
    %c0_142 = arith.constant 0 : index
    %c0_143 = arith.constant 0 : index
    %c22 = arith.constant 22 : index
    %c0_144 = arith.constant 0 : index
    %219 = vector.load %arg4[%c0_142, %c0_143, %c22, %c0_144] : memref<1x8x32x32xf32, #tpu.memory_space<vmem>>, vector<1x8x1x32xf32>
    %220 = vector.shape_cast %219 : vector<1x8x1x32xf32> to vector<8x32xf32>
    %221 = vector.shape_cast %218 : vector<8x32xf32> to vector<1x8x1x32xf32>
    tpu.vector_store %arg4[%c0_142, %c0_143, %c22, %c0_144], %221 {strides = array<i32>} : memref<1x8x32x32xf32, #tpu.memory_space<vmem>>, vector<1x8x1x32xf32>,
    %222 = vector.extract_strided_slice %129 {offsets = [0, 782], sizes = [8, 32], strides = [1, 1]} : vector<8x1088xf32> to vector<8x32xf32>
    %c0_145 = arith.constant 0 : index
    %c0_146 = arith.constant 0 : index
    %c23 = arith.constant 23 : index
    %c0_147 = arith.constant 0 : index
    %223 = vector.load %arg4[%c0_145, %c0_146, %c23, %c0_147] : memref<1x8x32x32xf32, #tpu.memory_space<vmem>>, vector<1x8x1x32xf32>
    %224 = vector.shape_cast %223 : vector<1x8x1x32xf32> to vector<8x32xf32>
    %225 = vector.shape_cast %222 : vector<8x32xf32> to vector<1x8x1x32xf32>
    tpu.vector_store %arg4[%c0_145, %c0_146, %c23, %c0_147], %225 {strides = array<i32>} : memref<1x8x32x32xf32, #tpu.memory_space<vmem>>, vector<1x8x1x32xf32>,
    %226 = vector.extract_strided_slice %129 {offsets = [0, 816], sizes = [8, 32], strides = [1, 1]} : vector<8x1088xf32> to vector<8x32xf32>
    %c0_148 = arith.constant 0 : index
    %c0_149 = arith.constant 0 : index
    %c24_150 = arith.constant 24 : index
    %c0_151 = arith.constant 0 : index
    %227 = vector.load %arg4[%c0_148, %c0_149, %c24_150, %c0_151] : memref<1x8x32x32xf32, #tpu.memory_space<vmem>>, vector<1x8x1x32xf32>
    %228 = vector.shape_cast %227 : vector<1x8x1x32xf32> to vector<8x32xf32>
    %229 = vector.shape_cast %226 : vector<8x32xf32> to vector<1x8x1x32xf32>
    tpu.vector_store %arg4[%c0_148, %c0_149, %c24_150, %c0_151], %229 {strides = array<i32>} : memref<1x8x32x32xf32, #tpu.memory_space<vmem>>, vector<1x8x1x32xf32>,
    %230 = vector.extract_strided_slice %129 {offsets = [0, 850], sizes = [8, 32], strides = [1, 1]} : vector<8x1088xf32> to vector<8x32xf32>
    %c0_152 = arith.constant 0 : index
    %c0_153 = arith.constant 0 : index
    %c25 = arith.constant 25 : index
    %c0_154 = arith.constant 0 : index
    %231 = vector.load %arg4[%c0_152, %c0_153, %c25, %c0_154] : memref<1x8x32x32xf32, #tpu.memory_space<vmem>>, vector<1x8x1x32xf32>
    %232 = vector.shape_cast %231 : vector<1x8x1x32xf32> to vector<8x32xf32>
    %233 = vector.shape_cast %230 : vector<8x32xf32> to vector<1x8x1x32xf32>
    tpu.vector_store %arg4[%c0_152, %c0_153, %c25, %c0_154], %233 {strides = array<i32>} : memref<1x8x32x32xf32, #tpu.memory_space<vmem>>, vector<1x8x1x32xf32>,
    %234 = vector.extract_strided_slice %129 {offsets = [0, 884], sizes = [8, 32], strides = [1, 1]} : vector<8x1088xf32> to vector<8x32xf32>
    %c0_155 = arith.constant 0 : index
    %c0_156 = arith.constant 0 : index
    %c26 = arith.constant 26 : index
    %c0_157 = arith.constant 0 : index
    %235 = vector.load %arg4[%c0_155, %c0_156, %c26, %c0_157] : memref<1x8x32x32xf32, #tpu.memory_space<vmem>>, vector<1x8x1x32xf32>
    %236 = vector.shape_cast %235 : vector<1x8x1x32xf32> to vector<8x32xf32>
    %237 = vector.shape_cast %234 : vector<8x32xf32> to vector<1x8x1x32xf32>
    tpu.vector_store %arg4[%c0_155, %c0_156, %c26, %c0_157], %237 {strides = array<i32>} : memref<1x8x32x32xf32, #tpu.memory_space<vmem>>, vector<1x8x1x32xf32>,
    %238 = vector.extract_strided_slice %129 {offsets = [0, 918], sizes = [8, 32], strides = [1, 1]} : vector<8x1088xf32> to vector<8x32xf32>
    %c0_158 = arith.constant 0 : index
    %c0_159 = arith.constant 0 : index
    %c27 = arith.constant 27 : index
    %c0_160 = arith.constant 0 : index
    %239 = vector.load %arg4[%c0_158, %c0_159, %c27, %c0_160] : memref<1x8x32x32xf32, #tpu.memory_space<vmem>>, vector<1x8x1x32xf32>
    %240 = vector.shape_cast %239 : vector<1x8x1x32xf32> to vector<8x32xf32>
    %241 = vector.shape_cast %238 : vector<8x32xf32> to vector<1x8x1x32xf32>
    tpu.vector_store %arg4[%c0_158, %c0_159, %c27, %c0_160], %241 {strides = array<i32>} : memref<1x8x32x32xf32, #tpu.memory_space<vmem>>, vector<1x8x1x32xf32>,
    %242 = vector.extract_strided_slice %129 {offsets = [0, 952], sizes = [8, 32], strides = [1, 1]} : vector<8x1088xf32> to vector<8x32xf32>
    %c0_161 = arith.constant 0 : index
    %c0_162 = arith.constant 0 : index
    %c28_163 = arith.constant 28 : index
    %c0_164 = arith.constant 0 : index
    %243 = vector.load %arg4[%c0_161, %c0_162, %c28_163, %c0_164] : memref<1x8x32x32xf32, #tpu.memory_space<vmem>>, vector<1x8x1x32xf32>
    %244 = vector.shape_cast %243 : vector<1x8x1x32xf32> to vector<8x32xf32>
    %245 = vector.shape_cast %242 : vector<8x32xf32> to vector<1x8x1x32xf32>
    tpu.vector_store %arg4[%c0_161, %c0_162, %c28_163, %c0_164], %245 {strides = array<i32>} : memref<1x8x32x32xf32, #tpu.memory_space<vmem>>, vector<1x8x1x32xf32>,
    %246 = vector.extract_strided_slice %129 {offsets = [0, 986], sizes = [8, 32], strides = [1, 1]} : vector<8x1088xf32> to vector<8x32xf32>
    %c0_165 = arith.constant 0 : index
    %c0_166 = arith.constant 0 : index
    %c29 = arith.constant 29 : index
    %c0_167 = arith.constant 0 : index
    %247 = vector.load %arg4[%c0_165, %c0_166, %c29, %c0_167] : memref<1x8x32x32xf32, #tpu.memory_space<vmem>>, vector<1x8x1x32xf32>
    %248 = vector.shape_cast %247 : vector<1x8x1x32xf32> to vector<8x32xf32>
    %249 = vector.shape_cast %246 : vector<8x32xf32> to vector<1x8x1x32xf32>
    tpu.vector_store %arg4[%c0_165, %c0_166, %c29, %c0_167], %249 {strides = array<i32>} : memref<1x8x32x32xf32, #tpu.memory_space<vmem>>, vector<1x8x1x32xf32>,
    %250 = vector.extract_strided_slice %129 {offsets = [0, 1020], sizes = [8, 32], strides = [1, 1]} : vector<8x1088xf32> to vector<8x32xf32>
    %c0_168 = arith.constant 0 : index
    %c0_169 = arith.constant 0 : index
    %c30 = arith.constant 30 : index
    %c0_170 = arith.constant 0 : index
    %251 = vector.load %arg4[%c0_168, %c0_169, %c30, %c0_170] : memref<1x8x32x32xf32, #tpu.memory_space<vmem>>, vector<1x8x1x32xf32>
    %252 = vector.shape_cast %251 : vector<1x8x1x32xf32> to vector<8x32xf32>
    %253 = vector.shape_cast %250 : vector<8x32xf32> to vector<1x8x1x32xf32>
    tpu.vector_store %arg4[%c0_168, %c0_169, %c30, %c0_170], %253 {strides = array<i32>} : memref<1x8x32x32xf32, #tpu.memory_space<vmem>>, vector<1x8x1x32xf32>,
    %254 = vector.extract_strided_slice %129 {offsets = [0, 1054], sizes = [8, 32], strides = [1, 1]} : vector<8x1088xf32> to vector<8x32xf32>
    %c0_171 = arith.constant 0 : index
    %c0_172 = arith.constant 0 : index
    %c31 = arith.constant 31 : index
    %c0_173 = arith.constant 0 : index
    %255 = vector.load %arg4[%c0_171, %c0_172, %c31, %c0_173] : memref<1x8x32x32xf32, #tpu.memory_space<vmem>>, vector<1x8x1x32xf32>
    %256 = vector.shape_cast %255 : vector<1x8x1x32xf32> to vector<8x32xf32>
    %257 = vector.shape_cast %254 : vector<8x32xf32> to vector<1x8x1x32xf32>
    tpu.vector_store %arg4[%c0_171, %c0_172, %c31, %c0_173], %257 {strides = array<i32>} : memref<1x8x32x32xf32, #tpu.memory_space<vmem>>, vector<1x8x1x32xf32>,
    return
  }
  func.func @transform_0(%arg0: i32) -> (i32, i32, i32, i32) {
    %c0_i32 = arith.constant 0 : i32
    %c0_i32_0 = arith.constant 0 : i32
    %c0_i32_1 = arith.constant 0 : i32
    %c0_i32_2 = arith.constant 0 : i32
    return %arg0, %c0_i32, %c0_i32_0, %c0_i32_1 : i32, i32, i32, i32
  }
  func.func @transform_1(%arg0: i32) -> (i32, i32) {
    %c0_i32 = arith.constant 0 : i32
    %c0_i32_0 = arith.constant 0 : i32
    %c0_i32_1 = arith.constant 0 : i32
    return %c0_i32, %c0_i32_0 : i32, i32
  }
  func.func @transform_2(%arg0: i32) -> (i32, i32) {
    %c0_i32 = arith.constant 0 : i32
    %c0_i32_0 = arith.constant 0 : i32
    %c0_i32_1 = arith.constant 0 : i32
    return %c0_i32, %c0_i32_0 : i32, i32
  }
  func.func @transform_3(%arg0: i32) -> (i32, i32, i32, i32) {
    %c0_i32 = arith.constant 0 : i32
    %c0_i32_0 = arith.constant 0 : i32
    %c0_i32_1 = arith.constant 0 : i32
    %c0_i32_2 = arith.constant 0 : i32
    return %arg0, %c0_i32, %c0_i32_0, %c0_i32_1 : i32, i32, i32, i32
  }
}

</mosaic_0001>

<llo_original>
// kernel: tpu_custom_call.1
$region0: #{tpu_custom_call.1}
  #allocation0 [shape = 'u32[]', space=smem, size = 0x4, offset = 0x4, fixed_abs, tag = 'smem constant byte address 0x4 - core index']
  #allocation1 [shape = 'u32[72,128]{1,0:T(1,128)}', space=vmem, size = 0x9000, scoped, tag = 'internal scratch']
  #allocation2 [shape = 'f32[4,1158]{1,0:T(4,128)}', space=vmem, size = 0x5000, scoped, tag = 'scratch operand']
  #allocation3 [shape = 'f32[36,1088]{1,0:T(8,128)}', space=vmem, size = 0x2d000, scoped, tag = 'scratch operand']
  %s0 = inlined_call_operand.hbm [shape: f32[2,4,16,34], index: 0, kind: input, shape index: {}]
  %s1 = inlined_call_operand.vmem [shape: f32[8,36], index: 1, kind: input, shape index: {}]
  %s2 = inlined_call_operand.vmem [shape: f32[8,1], index: 2, kind: input, shape index: {}]
  %s3 = inlined_call_operand.hbm [shape: f32[2,8,32,32], index: 3, kind: output, shape index: {}]
  %s4 = sld [smem:[#allocation0]]
  $region49: #{tpu_custom_call.1} parent=0
    _
  %s6 = ssub.s32 1, %s4
  %s7 = scalar_select 0, %s6, %s4
  $region1: #{tpu_custom_call.1} parent=0
    #allocation4 [shape = 'u8[65536]{0}', space=vmem, size = 0x10000, scoped, tag = 'input window, operand 0']
    #allocation5 [shape = 's32[2]{0}', space=sflag, size = 0x8, scoped, tag = 'scoped memory for tpu_custom_call.1']
    #allocation6 [shape = 's32[2]{0}', space=sflag, size = 0x8, scoped, tag = 'scoped memory for tpu_custom_call.1']
    #allocation7 [shape = 'u8[262144]{0}', space=vmem, size = 0x40000, scoped, tag = 'output window, operand 0']
    %8 = vsyncpa [#allocation5], 0
    %s9 = scalar_lea.sflag [#allocation5], 1
    %10 = vsyncpa %s9, 0
    %11 = vsyncpa [#allocation6], 0
    %s12 = scalar_lea.sflag [#allocation6], 1
    %13 = vsyncpa %s12, 0
    loop: start=0, step=1, limit=4
    $region2: #{tpu_custom_call.1} parent=1 // loop_pre_header
      _
    $region3: #{tpu_custom_call.1} parent=1 // loop_header
      %s15 = sphi 0, %s19
      %p16 = scmp.ge.s32.totalorder %s15, 4
      %s25 = sphi 0, %s27
      %s28 = sphi 0, %s25
      %s29 = sphi 0, %s28
      %s45 = sphi 0, %s29
      %s49 = sphi 0, %s49
      %s51 = sphi 0, %s49
      %s52 = sphi 0, %s51
      %s66 = sphi 0, %s52
      %s70 = sphi 0, %s70
      %s72 = sphi 0, %s70
      %s73 = sphi 0, %s72
      %s87 = sphi 0, %s73
      %s93 = sphi 0, %s95
      %s96 = sphi 0, %s93
      %s97 = sphi 0, %s96
      %s113 = sphi 0, %s97
    $region4: #{tpu_custom_call.1} parent=1 // loop_header_branch
      %18 = sbr.rel (%p16) target = $region8
    $region5: #{tpu_custom_call.1} parent=1 // loop_body
      %s20 = ssub.s32 %s15, 1
      %s21 = ssub.s32 %s15, 2
      %s22 = sadd.s32 %s15, 1
      %s23 = ssub.s32 %s15, %s22
      %p24 = scmp.eq.s32.totalorder %s23, 0
      %s26 = sadd.s32 %s25, 1
      %s27 = scalar_select %p24, %s25, %s26
      %p30 = pneg %p24
      %p31 = scmp.eq.s32.totalorder %s15, 1
      %p32 = por %p30, %p31
      %p33 = scmp.ne.s32.totalorder %s25, %s28
      %p34 = scmp.eq.s32.totalorder %s15, 0
      %p35 = por %p33, %p34
      %p36 = scmp.ne.s32.totalorder %s25, %s28
      %p37 = scmp.eq.s32.totalorder %s20, 1
      %p38 = por %p36, %p37
      %p39 = scmp.ne.s32.totalorder %s28, %s29
      %p40 = scmp.eq.s32.totalorder %s20, 0
      %p41 = por %p39, %p40
      %p42 = scmp.ne.s32.totalorder %s28, %s29
      %p43 = scmp.eq.s32.totalorder %s21, 1
      %p44 = por %p42, %p43
      %p46 = scmp.ne.s32.totalorder %s29, %s45
      %p47 = scmp.eq.s32.totalorder %s21, 0
      %p48 = por %p46, %p47
      %s50 = sadd.s32 %s49, 1
      %p53 = scmp.eq.s32.totalorder %s15, 1
      %p54 = scmp.ne.s32.totalorder %s49, %s51
      %p55 = scmp.eq.s32.totalorder %s15, 0
      %p56 = por %p54, %p55
      %p57 = scmp.ne.s32.totalorder %s49, %s51
      %p58 = scmp.eq.s32.totalorder %s20, 1
      %p59 = por %p57, %p58
      %p60 = scmp.ne.s32.totalorder %s51, %s52
      %p61 = scmp.eq.s32.totalorder %s20, 0
      %p62 = por %p60, %p61
      %p63 = scmp.ne.s32.totalorder %s51, %s52
      %p64 = scmp.eq.s32.totalorder %s21, 1
      %p65 = por %p63, %p64
      %p67 = scmp.ne.s32.totalorder %s52, %s66
      %p68 = scmp.eq.s32.totalorder %s21, 0
      %p69 = por %p67, %p68
      %s71 = sadd.s32 %s70, 1
      %p74 = scmp.eq.s32.totalorder %s15, 1
      %p75 = scmp.ne.s32.totalorder %s70, %s72
      %p76 = scmp.eq.s32.totalorder %s15, 0
      %p77 = por %p75, %p76
      %p78 = scmp.ne.s32.totalorder %s70, %s72
      %p79 = scmp.eq.s32.totalorder %s20, 1
      %p80 = por %p78, %p79
      %p81 = scmp.ne.s32.totalorder %s72, %s73
      %p82 = scmp.eq.s32.totalorder %s20, 0
      %p83 = por %p81, %p82
      %p84 = scmp.ne.s32.totalorder %s72, %s73
      %p85 = scmp.eq.s32.totalorder %s21, 1
      %p86 = por %p84, %p85
      %p88 = scmp.ne.s32.totalorder %s73, %s87
      %p89 = scmp.eq.s32.totalorder %s21, 0
      %p90 = por %p88, %p89
      %s91 = ssub.s32 %s15, %s22
      %p92 = scmp.eq.s32.totalorder %s91, 0
      %s94 = sadd.s32 %s93, 1
      %s95 = scalar_select %p92, %s93, %s94
      %p98 = pneg %p92
      %p99 = scmp.eq.s32.totalorder %s15, 1
      %p100 = por %p98, %p99
      %p101 = scmp.ne.s32.totalorder %s93, %s96
      %p102 = scmp.eq.s32.totalorder %s15, 0
      %p103 = por %p101, %p102
      %p104 = scmp.ne.s32.totalorder %s93, %s96
      %p105 = scmp.eq.s32.totalorder %s20, 1
      %p106 = por %p104, %p105
      %p107 = scmp.ne.s32.totalorder %s96, %s97
      %p108 = scmp.eq.s32.totalorder %s20, 0
      %p109 = por %p107, %p108
      %p110 = scmp.ne.s32.totalorder %s96, %s97
      %p111 = scmp.eq.s32.totalorder %s21, 1
      %p112 = por %p110, %p111
      %p114 = scmp.ne.s32.totalorder %s97, %s113
      %p115 = scmp.eq.s32.totalorder %s21, 0
      %p116 = por %p114, %p115
      %p117 = scmp.le.s32.totalorder 1, %s15
      %p118 = scmp.lt.s32.totalorder %s15, 3
      %p119 = pnand %p117, %p118
      %p120 = pneg %p119
      // Predicated region
      $region9: #{tpu_custom_call.1} parent=5 // pred_check
        _
      $region10: #{tpu_custom_call.1} parent=5 // pred_check_branch
        %122 = sbr.rel (%p119) target = $region12
      $region11: #{tpu_custom_call.1} parent=5 // pred_region
        %s123 = ssub.s32 %s15, 1
        // Predicated region
        $region13: #{tpu_custom_call.1} parent=11 // pred_check
          %p124 = pneg %p62
        $region14: #{tpu_custom_call.1} parent=11 // pred_check_branch
          %126 = sbr.rel (%p124) target = $region16
        $region15: #{tpu_custom_call.1} parent=11 // pred_region
          _
        $region16: #{tpu_custom_call.1} parent=11 // pred_fallthru
          _
        // Predicated region
        $region17: #{tpu_custom_call.1} parent=11 // pred_check
          %p127 = pneg %p83
        $region18: #{tpu_custom_call.1} parent=11 // pred_check_branch
          %129 = sbr.rel (%p127) target = $region20
        $region19: #{tpu_custom_call.1} parent=11 // pred_region
          _
        $region20: #{tpu_custom_call.1} parent=11 // pred_fallthru
          _
      $region12: #{tpu_custom_call.1} parent=5 // pred_fallthru
        _
      %p130 = scmp.lt.s32.totalorder %s15, 2
      // Predicated region
      $region21: #{tpu_custom_call.1} parent=5 // pred_check
        %p131 = pneg %p130
      $region22: #{tpu_custom_call.1} parent=5 // pred_check_branch
        %133 = sbr.rel (%p131) target = $region24
      $region23: #{tpu_custom_call.1} parent=5 // pred_region
        // Predicated region
        $region25: #{tpu_custom_call.1} parent=23 // pred_check
          %p134 = pneg %p35
        $region26: #{tpu_custom_call.1} parent=23 // pred_check_branch
          %136 = sbr.rel (%p134) target = $region28
        $region27: #{tpu_custom_call.1} parent=23 // pred_region
          %s137 = sand.u32 %s25, 1
          %s138 = scalar_lea.sflag [#allocation5], %s137
          %s139 = sand.u32 %s25, 1
          %s140 = smul.addr %s139, 64
          %s141 = scalar_lea.vmem [#allocation4], %s140
          %143 = vsyncadd %s138, 0
          %s144 = smul.addr %s15, 8
          %s145 = smul.addr %s144, 8
          %s146 = scalar_lea.hbm %s0, %s145
          %s147 = sshll.u32 %s146, 4
          %s148 = int_to_ptr.hbm [resolvable:$true] %s147
          %s149 = sshll.u32 %s141, 4
          %s150 = int_to_ptr.vmem [resolvable:$true] %s149
          %155 = dma.hbm_to_vmem [thread:$0]  %s148, 1024, %s150, %s138, 128, 128, 8
        $region28: #{tpu_custom_call.1} parent=23 // pred_fallthru
          _
      $region24: #{tpu_custom_call.1} parent=5 // pred_fallthru
        _
      %p156 = scmp.le.s32.totalorder 1, %s15
      %p157 = scmp.lt.s32.totalorder %s15, 3
      %p158 = pnand %p156, %p157
      %p159 = pneg %p158
      // Predicated region
      $region29: #{tpu_custom_call.1} parent=5 // pred_check
        _
      $region30: #{tpu_custom_call.1} parent=5 // pred_check_branch
        %161 = sbr.rel (%p158) target = $region32
      $region31: #{tpu_custom_call.1} parent=5 // pred_region
        %s162 = ssub.s32 %s15, 1
        %s163 = sand.u32 %s28, 1
        %s164 = scalar_lea.sflag [#allocation5], %s163
        %s165 = sand.u32 %s28, 1
        %s166 = smul.addr %s165, 64
        %s167 = scalar_lea.vmem [#allocation4], %s166
        // Predicated region
        $region33: #{tpu_custom_call.1} parent=31 // pred_check
          %p168 = pneg %p41
        $region34: #{tpu_custom_call.1} parent=31 // pred_check_branch
          %170 = sbr.rel (%p168) target = $region36
        $region35: #{tpu_custom_call.1} parent=31 // pred_region
          %172 = dma.done %s164, 1024
        $region36: #{tpu_custom_call.1} parent=31 // pred_fallthru
          _
        %s173 = sand.u32 %s28, 1
        %s174 = scalar_lea.sflag [#allocation5], %s173
        %s175 = sand.u32 %s28, 1
        %s176 = smul.addr %s175, 64
        %s177 = scalar_lea.vmem [#allocation4], %s176
        %p178 = pneg %p41
        %p179 = pneg %p38
        %p180 = pneg %p62
        %p181 = pneg %p59
        %p182 = pneg %p83
        %p183 = pneg %p80
        %p184 = pneg %p109
        %p185 = pneg %p106
        %s186 = sand.u32 %s96, 1
        %s187 = scalar_lea.sflag [#allocation6], %s186
        %s188 = sand.u32 %s96, 1
        %s189 = smul.addr %s188, 256
        %s190 = scalar_lea.vmem [#allocation7], %s189
        %v191 = vld [vmem:[%s167] sm:$0xff]
        %v192 = vld [vmem:[%s167 + $0x8] sm:$0xff]
        %v193 = vld [vmem:[%s167 + $0x10] sm:$0xff]
        %v194 = vld [vmem:[%s167 + $0x18] sm:$0xff]
        %v195 = vld [vmem:[%s167 + $0x20] sm:$0xff]
        %v196 = vld [vmem:[%s167 + $0x28] sm:$0xff]
        %v197 = vld [vmem:[%s167 + $0x30] sm:$0xff]
        %v198 = vld [vmem:[%s167 + $0x38] sm:$0xff]
        %vm203 = vcmask 1044484
        %v204 = vrot.slane %v193, 7
        %vm205 = vcmask 1041409
        %v206 = vsel %vm205, %v204, %v191
        %vm207 = vcmask 1045509
        %v208 = vsel %vm207, %v204, %v206
        %v209 = vrot.slane %v195, 6
        %vm210 = vcmask 1042434
        %v211 = vsel %vm210, %v209, %v208
        %vm212 = vcmask 1046534
        %v213 = vsel %vm212, %v209, %v211
        %v214 = vrot.slane %v197, 5
        %vm215 = vcmask 1043459
        %v216 = vsel %vm215, %v214, %v213
        %vm217 = vcmask 1047559
        %v218 = vsel %vm217, %v214, %v216
        %vm220 = vcmask 273408
        %221 = vst.msk [vmem:[#allocation2] sm:$0xf] %vm220, %v218
        %222 = vrot.lane.b32.xlu0 %v218, 34
        %v223 = vpop.permute.xlu0 %222
        %vm225 = vcmask 552208
        %226 = vst.msk [vmem:[#allocation2] sm:$0xf] %vm225, %v223
        %227 = vrot.lane.b32.xlu0 %v218, 68
        %v228 = vpop.permute.xlu0 %227
        %vm230 = vcmask 831008
        %231 = vst.msk [vmem:[#allocation2] sm:$0xf] %vm230, %v228
        %v232 = vrot.slane %v191, 1
        %v233 = vsel %vm205, %v193, %v232
        %v234 = vsel %vm207, %v193, %v233
        %v235 = vrot.slane %v195, 7
        %v236 = vsel %vm210, %v235, %v234
        %v237 = vsel %vm212, %v235, %v236
        %v238 = vrot.slane %v197, 6
        %v239 = vsel %vm215, %v238, %v237
        %v240 = vsel %vm217, %v238, %v239
        %241 = vrot.lane.b32.xlu0 %v240, 102
        %v242 = vpop.permute.xlu0 %241
        %v243 = vrot.slane %v242, 4
        %vm244 = vcmask 834560
        %v245 = vsel %vm244, %v243, %v242
        %vm247 = vcmask 1044272
        %vm248 = vcmask 64516
        %vm249 = vmor %vm248, %vm247
        %250 = vst.msk [vmem:[#allocation2] sm:$0xff] %vm249, %v245
        %251 = vrot.lane.b32.xlu0 %v240, 8
        %v252 = vpop.permute.xlu0 %251
        %vm254 = vcmask 339008
        %255 = vst.msk [vmem:[#allocation2 + $0x4] sm:$0xf] %vm254, %v252
        %v256 = vrot.slane %v191, 2
        %v257 = vrot.slane %v193, 1
        %v258 = vsel %vm205, %v257, %v256
        %v259 = vsel %vm207, %v257, %v258
        %v260 = vsel %vm210, %v195, %v259
        %v261 = vsel %vm212, %v195, %v260
        %v262 = vrot.slane %v197, 7
        %v263 = vsel %vm215, %v262, %v261
        %v264 = vsel %vm217, %v262, %v263
        %265 = vrot.lane.b32.xlu0 %v264, 42
        %v266 = vpop.permute.xlu0 %265
        %vm268 = vcmask 617808
        %269 = vst.msk [vmem:[#allocation2 + $0x4] sm:$0xf] %vm268, %v266
        %270 = vrot.lane.b32.xlu0 %v264, 76
        %v271 = vpop.permute.xlu0 %270
        %vm273 = vcmask 896608
        %274 = vst.msk [vmem:[#allocation2 + $0x4] sm:$0xf] %vm273, %v271
        %v275 = vrot.slane %v191, 3
        %v276 = vrot.slane %v193, 2
        %v277 = vsel %vm205, %v276, %v275
        %v278 = vsel %vm207, %v276, %v277
        %v279 = vrot.slane %v195, 1
        %v280 = vsel %vm210, %v279, %v278
        %v281 = vsel %vm212, %v279, %v280
        %v282 = vsel %vm215, %v197, %v281
        %v283 = vsel %vm217, %v197, %v282
        %284 = vrot.lane.b32.xlu0 %v283, 110
        %v285 = vpop.permute.xlu0 %284
        %v286 = vrot.slane %v285, 4
        %vm287 = vcmask 900096
        %v288 = vsel %vm287, %v286, %v285
        %vm290 = vcmask 1044336
        %vm291 = vcmask 130052
        %vm292 = vmor %vm291, %vm290
        %293 = vst.msk [vmem:[#allocation2 + $0x4] sm:$0xff] %vm292, %v288
        %294 = vrot.lane.b32.xlu0 %v283, 16
        %v295 = vpop.permute.xlu0 %294
        %vm297 = vcmask 404608
        %298 = vst.msk [vmem:[#allocation2 + $0x8] sm:$0xf] %vm297, %v295
        %299 = vst.sshfl [vmem:[#allocation1] sm:$0xff pattern:$0x75316420] %v191
        %s300 = scalar_lea.vmem [#allocation1], 1
        %v301 = vld [vmem:[%s300] ss:$2 sm:$0xff]
        %302 = vst.sshfl [vmem:[#allocation1 + $0x10] sm:$0xff pattern:$0x75316420] %v193
        %s303 = scalar_lea.vmem [#allocation1], 17
        %v304 = vld [vmem:[%s303] ss:$2 sm:$0xff]
        %305 = vst.sshfl [vmem:[#allocation1 + $0x20] sm:$0xff pattern:$0x75316420] %v195
        %s306 = scalar_lea.vmem [#allocation1], 33
        %v307 = vld [vmem:[%s306] ss:$2 sm:$0xff]
        %308 = vst.sshfl [vmem:[#allocation1 + $0x30] sm:$0xff pattern:$0x75316420] %v197
        %s309 = scalar_lea.vmem [#allocation1], 49
        %v310 = vld [vmem:[%s309] ss:$2 sm:$0xff]
        %v311 = vrot.slane %v304, 7
        %v312 = vsel %vm205, %v311, %v301
        %v313 = vsel %vm207, %v311, %v312
        %v314 = vrot.slane %v307, 6
        %v315 = vsel %vm210, %v314, %v313
        %v316 = vsel %vm212, %v314, %v315
        %v317 = vrot.slane %v310, 5
        %v318 = vsel %vm215, %v317, %v316
        %v319 = vsel %vm217, %v317, %v318
        %320 = vrot.lane.b32.xlu0 %v319, 50
        %v321 = vpop.permute.xlu0 %320
        %vm323 = vcmask 683408
        %324 = vst.msk [vmem:[#allocation2 + $0x8] sm:$0xf] %vm323, %v321
        %325 = vst.sshfl [vmem:[#allocation1] sm:$0xff pattern:$0x75316420] %v191
        %s326 = scalar_lea.vmem [#allocation1], 1
        %v327 = vld [vmem:[%s326] ss:$2 sm:$0xff]
        %328 = vst.sshfl [vmem:[#allocation1 + $0x10] sm:$0xff pattern:$0x75316420] %v193
        %s329 = scalar_lea.vmem [#allocation1], 17
        %v330 = vld [vmem:[%s329] ss:$2 sm:$0xff]
        %331 = vst.sshfl [vmem:[#allocation1 + $0x20] sm:$0xff pattern:$0x75316420] %v195
        %s332 = scalar_lea.vmem [#allocation1], 33
        %v333 = vld [vmem:[%s332] ss:$2 sm:$0xff]
        %334 = vst.sshfl [vmem:[#allocation1 + $0x30] sm:$0xff pattern:$0x75316420] %v197
        %s335 = scalar_lea.vmem [#allocation1], 49
        %v336 = vld [vmem:[%s335] ss:$2 sm:$0xff]
        %v337 = vrot.slane %v330, 7
        %v338 = vsel %vm205, %v337, %v327
        %v339 = vsel %vm207, %v337, %v338
        %v340 = vrot.slane %v333, 6
        %v341 = vsel %vm210, %v340, %v339
        %v342 = vsel %vm212, %v340, %v341
        %v343 = vrot.slane %v336, 5
        %v344 = vsel %vm215, %v343, %v342
        %v345 = vsel %vm217, %v343, %v344
        %346 = vrot.lane.b32.xlu0 %v345, 84
        %v347 = vpop.permute.xlu0 %346
        %vm349 = vcmask 962208
        %350 = vst.msk [vmem:[#allocation2 + $0x8] sm:$0xf] %vm349, %v347
        %351 = vst.sshfl [vmem:[#allocation1] sm:$0xff pattern:$0x75316420] %v191
        %s352 = scalar_lea.vmem [#allocation1], 1
        %v353 = vld [vmem:[%s352] ss:$2 sm:$0xff]
        %354 = vst.sshfl [vmem:[#allocation1 + $0x10] sm:$0xff pattern:$0x75316420] %v193
        %s355 = scalar_lea.vmem [#allocation1], 17
        %v356 = vld [vmem:[%s355] ss:$2 sm:$0xff]
        %357 = vst.sshfl [vmem:[#allocation1 + $0x20] sm:$0xff pattern:$0x75316420] %v195
        %s358 = scalar_lea.vmem [#allocation1], 33
        %v359 = vld [vmem:[%s358] ss:$2 sm:$0xff]
        %360 = vst.sshfl [vmem:[#allocation1 + $0x30] sm:$0xff pattern:$0x75316420] %v197
        %s361 = scalar_lea.vmem [#allocation1], 49
        %v362 = vld [vmem:[%s361] ss:$2 sm:$0xff]
        %v363 = vrot.slane %v353, 1
        %v364 = vsel %vm205, %v356, %v363
        %v365 = vsel %vm207, %v356, %v364
        %v366 = vrot.slane %v359, 7
        %v367 = vsel %vm210, %v366, %v365
        %v368 = vsel %vm212, %v366, %v367
        %v369 = vrot.slane %v362, 6
        %v370 = vsel %vm215, %v369, %v368
        %v371 = vsel %vm217, %v369, %v370
        %372 = vrot.lane.b32.xlu0 %v371, 118
        %v373 = vpop.permute.xlu0 %372
        %v374 = vrot.slane %v373, 4
        %vm375 = vcmask 965632
        %v376 = vsel %vm375, %v374, %v373
        %vm378 = vcmask 1044400
        %vm379 = vcmask 195588
        %vm380 = vmor %vm379, %vm378
        %381 = vst.msk [vmem:[#allocation2 + $0x8] sm:$0xff] %vm380, %v376
        %382 = vst.sshfl [vmem:[#allocation1] sm:$0xff pattern:$0x75316420] %v191
        %s383 = scalar_lea.vmem [#allocation1], 1
        %v384 = vld [vmem:[%s383] ss:$2 sm:$0xff]
        %385 = vst.sshfl [vmem:[#allocation1 + $0x10] sm:$0xff pattern:$0x75316420] %v193
        %s386 = scalar_lea.vmem [#allocation1], 17
        %v387 = vld [vmem:[%s386] ss:$2 sm:$0xff]
        %388 = vst.sshfl [vmem:[#allocation1 + $0x20] sm:$0xff pattern:$0x75316420] %v195
        %s389 = scalar_lea.vmem [#allocation1], 33
        %v390 = vld [vmem:[%s389] ss:$2 sm:$0xff]
        %391 = vst.sshfl [vmem:[#allocation1 + $0x30] sm:$0xff pattern:$0x75316420] %v197
        %s392 = scalar_lea.vmem [#allocation1], 49
        %v393 = vld [vmem:[%s392] ss:$2 sm:$0xff]
        %v394 = vrot.slane %v384, 1
        %v395 = vsel %vm205, %v387, %v394
        %v396 = vsel %vm207, %v387, %v395
        %v397 = vrot.slane %v390, 7
        %v398 = vsel %vm210, %v397, %v396
        %v399 = vsel %vm212, %v397, %v398
        %v400 = vrot.slane %v393, 6
        %v401 = vsel %vm215, %v400, %v399
        %v402 = vsel %vm217, %v400, %v401
        %403 = vrot.lane.b32.xlu0 %v402, 24
        %v404 = vpop.permute.xlu0 %403
        %vm406 = vcmask 470208
        %407 = vst.msk [vmem:[#allocation2 + $0xc] sm:$0xf] %vm406, %v404
        %408 = vst.sshfl [vmem:[#allocation1] sm:$0xff pattern:$0x75316420] %v191
        %s409 = scalar_lea.vmem [#allocation1], 1
        %v410 = vld [vmem:[%s409] ss:$2 sm:$0xff]
        %411 = vst.sshfl [vmem:[#allocation1 + $0x10] sm:$0xff pattern:$0x75316420] %v193
        %s412 = scalar_lea.vmem [#allocation1], 17
        %v413 = vld [vmem:[%s412] ss:$2 sm:$0xff]
        %414 = vst.sshfl [vmem:[#allocation1 + $0x20] sm:$0xff pattern:$0x75316420] %v195
        %s415 = scalar_lea.vmem [#allocation1], 33
        %v416 = vld [vmem:[%s415] ss:$2 sm:$0xff]
        %417 = vst.sshfl [vmem:[#allocation1 + $0x30] sm:$0xff pattern:$0x75316420] %v197
        %s418 = scalar_lea.vmem [#allocation1], 49
        %v419 = vld [vmem:[%s418] ss:$2 sm:$0xff]
        %v420 = vrot.slane %v410, 2
        %v421 = vrot.slane %v413, 1
        %v422 = vsel %vm205, %v421, %v420
        %v423 = vsel %vm207, %v421, %v422
        %v424 = vsel %vm210, %v416, %v423
        %v425 = vsel %vm212, %v416, %v424
        %v426 = vrot.slane %v419, 7
        %v427 = vsel %vm215, %v426, %v425
        %v428 = vsel %vm217, %v426, %v427
        %429 = vrot.lane.b32.xlu0 %v428, 58
        %v430 = vpop.permute.xlu0 %429
        %vm432 = vcmask 749008
        %433 = vst.msk [vmem:[#allocation2 + $0xc] sm:$0xf] %vm432, %v430
        %434 = vst.sshfl [vmem:[#allocation1] sm:$0xff pattern:$0x75316420] %v191
        %s435 = scalar_lea.vmem [#allocation1], 1
        %v436 = vld [vmem:[%s435] ss:$2 sm:$0xff]
        %437 = vst.sshfl [vmem:[#allocation1 + $0x10] sm:$0xff pattern:$0x75316420] %v193
        %s438 = scalar_lea.vmem [#allocation1], 17
        %v439 = vld [vmem:[%s438] ss:$2 sm:$0xff]
        %440 = vst.sshfl [vmem:[#allocation1 + $0x20] sm:$0xff pattern:$0x75316420] %v195
        %s441 = scalar_lea.vmem [#allocation1], 33
        %v442 = vld [vmem:[%s441] ss:$2 sm:$0xff]
        %443 = vst.sshfl [vmem:[#allocation1 + $0x30] sm:$0xff pattern:$0x75316420] %v197
        %s444 = scalar_lea.vmem [#allocation1], 49
        %v445 = vld [vmem:[%s444] ss:$2 sm:$0xff]
        %v446 = vrot.slane %v436, 2
        %v447 = vrot.slane %v439, 1
        %v448 = vsel %vm205, %v447, %v446
        %v449 = vsel %vm207, %v447, %v448
        %v450 = vsel %vm210, %v442, %v449
        %v451 = vsel %vm212, %v442, %v450
        %v452 = vrot.slane %v445, 7
        %v453 = vsel %vm215, %v452, %v451
        %v454 = vsel %vm217, %v452, %v453
        %455 = vrot.lane.b32.xlu0 %v454, 92
        %v456 = vpop.permute.xlu0 %455
        %vm458 = vcmask 1027808
        %459 = vst.msk [vmem:[#allocation2 + $0xc] sm:$0xf] %vm458, %v456
        %460 = vst.sshfl [vmem:[#allocation1] sm:$0xff pattern:$0x75316420] %v191
        %s461 = scalar_lea.vmem [#allocation1], 1
        %v462 = vld [vmem:[%s461] ss:$2 sm:$0xff]
        %463 = vst.sshfl [vmem:[#allocation1 + $0x10] sm:$0xff pattern:$0x75316420] %v193
        %s464 = scalar_lea.vmem [#allocation1], 17
        %v465 = vld [vmem:[%s464] ss:$2 sm:$0xff]
        %466 = vst.sshfl [vmem:[#allocation1 + $0x20] sm:$0xff pattern:$0x75316420] %v195
        %s467 = scalar_lea.vmem [#allocation1], 33
        %v468 = vld [vmem:[%s467] ss:$2 sm:$0xff]
        %469 = vst.sshfl [vmem:[#allocation1 + $0x30] sm:$0xff pattern:$0x75316420] %v197
        %s470 = scalar_lea.vmem [#allocation1], 49
        %v471 = vld [vmem:[%s470] ss:$2 sm:$0xff]
        %v472 = vrot.slane %v462, 3
        %v473 = vrot.slane %v465, 2
        %v474 = vsel %vm205, %v473, %v472
        %v475 = vsel %vm207, %v473, %v474
        %v476 = vrot.slane %v468, 1
        %v477 = vsel %vm210, %v476, %v475
        %v478 = vsel %vm212, %v476, %v477
        %v479 = vsel %vm215, %v471, %v478
        %v480 = vsel %vm217, %v471, %v479
        %481 = vrot.lane.b32.xlu0 %v480, 126
        %v482 = vpop.permute.xlu0 %481
        %v483 = vrot.slane %v482, 4
        %vm484 = vcmask 1031168
        %v485 = vsel %vm484, %v483, %v482
        %vm487 = vcmask 1044464
        %vm488 = vcmask 261124
        %vm489 = vmor %vm488, %vm487
        %490 = vst.msk [vmem:[#allocation2 + $0xc] sm:$0xff] %vm489, %v485
        %491 = vst.sshfl [vmem:[#allocation1] sm:$0xff pattern:$0x75316420] %v191
        %s492 = scalar_lea.vmem [#allocation1], 1
        %v493 = vld [vmem:[%s492] ss:$2 sm:$0xff]
        %494 = vst.sshfl [vmem:[#allocation1 + $0x10] sm:$0xff pattern:$0x75316420] %v193
        %s495 = scalar_lea.vmem [#allocation1], 17
        %v496 = vld [vmem:[%s495] ss:$2 sm:$0xff]
        %497 = vst.sshfl [vmem:[#allocation1 + $0x20] sm:$0xff pattern:$0x75316420] %v195
        %s498 = scalar_lea.vmem [#allocation1], 33
        %v499 = vld [vmem:[%s498] ss:$2 sm:$0xff]
        %500 = vst.sshfl [vmem:[#allocation1 + $0x30] sm:$0xff pattern:$0x75316420] %v197
        %s501 = scalar_lea.vmem [#allocation1], 49
        %v502 = vld [vmem:[%s501] ss:$2 sm:$0xff]
        %v503 = vrot.slane %v493, 3
        %v504 = vrot.slane %v496, 2
        %v505 = vsel %vm205, %v504, %v503
        %v506 = vsel %vm207, %v504, %v505
        %v507 = vrot.slane %v499, 1
        %v508 = vsel %vm210, %v507, %v506
        %v509 = vsel %vm212, %v507, %v508
        %v510 = vsel %vm215, %v502, %v509
        %v511 = vsel %vm217, %v502, %v510
        %512 = vrot.lane.b32.xlu0 %v511, 32
        %v513 = vpop.permute.xlu0 %512
        %vm515 = vcmask 535808
        %516 = vst.msk [vmem:[#allocation2 + $0x10] sm:$0xf] %vm515, %v513
        %v521 = vrot.slane %v194, 7
        %v522 = vsel %vm205, %v521, %v192
        %v523 = vsel %vm207, %v521, %v522
        %v524 = vrot.slane %v196, 6
        %v525 = vsel %vm210, %v524, %v523
        %v526 = vsel %vm212, %v524, %v525
        %v527 = vrot.slane %v198, 5
        %v528 = vsel %vm215, %v527, %v526
        %v529 = vsel %vm217, %v527, %v528
        %530 = vrot.lane.b32.xlu0 %v529, 66
        %v531 = vpop.permute.xlu0 %530
        %vm533 = vcmask 814608
        %534 = vst.msk [vmem:[#allocation2 + $0x10] sm:$0xf] %vm533, %v531
        %535 = vrot.lane.b32.xlu0 %v529, 100
        %v536 = vpop.permute.xlu0 %535
        %v537 = vrot.slane %v536, 4
        %vm538 = vcmask 818176
        %v539 = vsel %vm538, %v537, %v536
        %vm541 = vcmask 1044256
        %vm542 = vcmask 48132
        %vm543 = vmor %vm542, %vm541
        %544 = vst.msk [vmem:[#allocation2 + $0x10] sm:$0xff] %vm543, %v539
        %v545 = vrot.slane %v192, 1
        %v546 = vsel %vm205, %v194, %v545
        %v547 = vsel %vm207, %v194, %v546
        %v548 = vrot.slane %v196, 7
        %v549 = vsel %vm210, %v548, %v547
        %v550 = vsel %vm212, %v548, %v549
        %v551 = vrot.slane %v198, 6
        %v552 = vsel %vm215, %v551, %v550
        %v553 = vsel %vm217, %v551, %v552
        %554 = vrot.lane.b32.xlu0 %v553, 6
        %v555 = vpop.permute.xlu0 %554
        %vm557 = vcmask 322608
        %558 = vst.msk [vmem:[#allocation2 + $0x14] sm:$0xf] %vm557, %v555
        %559 = vrot.lane.b32.xlu0 %v553, 40
        %v560 = vpop.permute.xlu0 %559
        %vm562 = vcmask 601408
        %563 = vst.msk [vmem:[#allocation2 + $0x14] sm:$0xf] %vm562, %v560
        %v564 = vrot.slane %v192, 2
        %v565 = vrot.slane %v194, 1
        %v566 = vsel %vm205, %v565, %v564
        %v567 = vsel %vm207, %v565, %v566
        %v568 = vsel %vm210, %v196, %v567
        %v569 = vsel %vm212, %v196, %v568
        %v570 = vrot.slane %v198, 7
        %v571 = vsel %vm215, %v570, %v569
        %v572 = vsel %vm217, %v570, %v571
        %573 = vrot.lane.b32.xlu0 %v572, 74
        %v574 = vpop.permute.xlu0 %573
        %vm576 = vcmask 880208
        %577 = vst.msk [vmem:[#allocation2 + $0x14] sm:$0xf] %vm576, %v574
        %578 = vrot.lane.b32.xlu0 %v572, 108
        %v579 = vpop.permute.xlu0 %578
        %v580 = vrot.slane %v579, 4
        %vm581 = vcmask 883712
        %v582 = vsel %vm581, %v580, %v579
        %vm584 = vcmask 1044320
        %vm585 = vcmask 113668
        %vm586 = vmor %vm585, %vm584
        %587 = vst.msk [vmem:[#allocation2 + $0x14] sm:$0xff] %vm586, %v582
        %v588 = vrot.slane %v192, 3
        %v589 = vrot.slane %v194, 2
        %v590 = vsel %vm205, %v589, %v588
        %v591 = vsel %vm207, %v589, %v590
        %v592 = vrot.slane %v196, 1
        %v593 = vsel %vm210, %v592, %v591
        %v594 = vsel %vm212, %v592, %v593
        %v595 = vsel %vm215, %v198, %v594
        %v596 = vsel %vm217, %v198, %v595
        %597 = vrot.lane.b32.xlu0 %v596, 14
        %v598 = vpop.permute.xlu0 %597
        %vm600 = vcmask 388208
        %601 = vst.msk [vmem:[#allocation2 + $0x18] sm:$0xf] %vm600, %v598
        %602 = vrot.lane.b32.xlu0 %v596, 48
        %v603 = vpop.permute.xlu0 %602
        %vm605 = vcmask 667008
        %606 = vst.msk [vmem:[#allocation2 + $0x18] sm:$0xf] %vm605, %v603
        %607 = vst.sshfl [vmem:[#allocation1] sm:$0xff pattern:$0x75316420] %v192
        %s608 = scalar_lea.vmem [#allocation1], 1
        %v609 = vld [vmem:[%s608] ss:$2 sm:$0xff]
        %610 = vst.sshfl [vmem:[#allocation1 + $0x10] sm:$0xff pattern:$0x75316420] %v194
        %s611 = scalar_lea.vmem [#allocation1], 17
        %v612 = vld [vmem:[%s611] ss:$2 sm:$0xff]
        %613 = vst.sshfl [vmem:[#allocation1 + $0x20] sm:$0xff pattern:$0x75316420] %v196
        %s614 = scalar_lea.vmem [#allocation1], 33
        %v615 = vld [vmem:[%s614] ss:$2 sm:$0xff]
        %616 = vst.sshfl [vmem:[#allocation1 + $0x30] sm:$0xff pattern:$0x75316420] %v198
        %s617 = scalar_lea.vmem [#allocation1], 49
        %v618 = vld [vmem:[%s617] ss:$2 sm:$0xff]
        %v619 = vrot.slane %v612, 7
        %v620 = vsel %vm205, %v619, %v609
        %v621 = vsel %vm207, %v619, %v620
        %v622 = vrot.slane %v615, 6
        %v623 = vsel %vm210, %v622, %v621
        %v624 = vsel %vm212, %v622, %v623
        %v625 = vrot.slane %v618, 5
        %v626 = vsel %vm215, %v625, %v624
        %v627 = vsel %vm217, %v625, %v626
        %628 = vrot.lane.b32.xlu0 %v627, 82
        %v629 = vpop.permute.xlu0 %628
        %vm631 = vcmask 945808
        %632 = vst.msk [vmem:[#allocation2 + $0x18] sm:$0xf] %vm631, %v629
        %633 = vst.sshfl [vmem:[#allocation1] sm:$0xff pattern:$0x75316420] %v192
        %s634 = scalar_lea.vmem [#allocation1], 1
        %v635 = vld [vmem:[%s634] ss:$2 sm:$0xff]
        %636 = vst.sshfl [vmem:[#allocation1 + $0x10] sm:$0xff pattern:$0x75316420] %v194
        %s637 = scalar_lea.vmem [#allocation1], 17
        %v638 = vld [vmem:[%s637] ss:$2 sm:$0xff]
        %639 = vst.sshfl [vmem:[#allocation1 + $0x20] sm:$0xff pattern:$0x75316420] %v196
        %s640 = scalar_lea.vmem [#allocation1], 33
        %v641 = vld [vmem:[%s640] ss:$2 sm:$0xff]
        %642 = vst.sshfl [vmem:[#allocation1 + $0x30] sm:$0xff pattern:$0x75316420] %v198
        %s643 = scalar_lea.vmem [#allocation1], 49
        %v644 = vld [vmem:[%s643] ss:$2 sm:$0xff]
        %v645 = vrot.slane %v638, 7
        %v646 = vsel %vm205, %v645, %v635
        %v647 = vsel %vm207, %v645, %v646
        %v648 = vrot.slane %v641, 6
        %v649 = vsel %vm210, %v648, %v647
        %v650 = vsel %vm212, %v648, %v649
        %v651 = vrot.slane %v644, 5
        %v652 = vsel %vm215, %v651, %v650
        %v653 = vsel %vm217, %v651, %v652
        %654 = vrot.lane.b32.xlu0 %v653, 116
        %v655 = vpop.permute.xlu0 %654
        %v656 = vrot.slane %v655, 4
        %vm657 = vcmask 949248
        %v658 = vsel %vm657, %v656, %v655
        %vm660 = vcmask 1044384
        %vm661 = vcmask 179204
        %vm662 = vmor %vm661, %vm660
        %663 = vst.msk [vmem:[#allocation2 + $0x18] sm:$0xff] %vm662, %v658
        %664 = vst.sshfl [vmem:[#allocation1] sm:$0xff pattern:$0x75316420] %v192
        %s665 = scalar_lea.vmem [#allocation1], 1
        %v666 = vld [vmem:[%s665] ss:$2 sm:$0xff]
        %667 = vst.sshfl [vmem:[#allocation1 + $0x10] sm:$0xff pattern:$0x75316420] %v194
        %s668 = scalar_lea.vmem [#allocation1], 17
        %v669 = vld [vmem:[%s668] ss:$2 sm:$0xff]
        %670 = vst.sshfl [vmem:[#allocation1 + $0x20] sm:$0xff pattern:$0x75316420] %v196
        %s671 = scalar_lea.vmem [#allocation1], 33
        %v672 = vld [vmem:[%s671] ss:$2 sm:$0xff]
        %673 = vst.sshfl [vmem:[#allocation1 + $0x30] sm:$0xff pattern:$0x75316420] %v198
        %s674 = scalar_lea.vmem [#allocation1], 49
        %v675 = vld [vmem:[%s674] ss:$2 sm:$0xff]
        %v676 = vrot.slane %v666, 1
        %v677 = vsel %vm205, %v669, %v676
        %v678 = vsel %vm207, %v669, %v677
        %v679 = vrot.slane %v672, 7
        %v680 = vsel %vm210, %v679, %v678
        %v681 = vsel %vm212, %v679, %v680
        %v682 = vrot.slane %v675, 6
        %v683 = vsel %vm215, %v682, %v681
        %v684 = vsel %vm217, %v682, %v683
        %685 = vrot.lane.b32.xlu0 %v684, 22
        %v686 = vpop.permute.xlu0 %685
        %vm688 = vcmask 453808
        %689 = vst.msk [vmem:[#allocation2 + $0x1c] sm:$0xf] %vm688, %v686
        %690 = vst.sshfl [vmem:[#allocation1] sm:$0xff pattern:$0x75316420] %v192
        %s691 = scalar_lea.vmem [#allocation1], 1
        %v692 = vld [vmem:[%s691] ss:$2 sm:$0xff]
        %693 = vst.sshfl [vmem:[#allocation1 + $0x10] sm:$0xff pattern:$0x75316420] %v194
        %s694 = scalar_lea.vmem [#allocation1], 17
        %v695 = vld [vmem:[%s694] ss:$2 sm:$0xff]
        %696 = vst.sshfl [vmem:[#allocation1 + $0x20] sm:$0xff pattern:$0x75316420] %v196
        %s697 = scalar_lea.vmem [#allocation1], 33
        %v698 = vld [vmem:[%s697] ss:$2 sm:$0xff]
        %699 = vst.sshfl [vmem:[#allocation1 + $0x30] sm:$0xff pattern:$0x75316420] %v198
        %s700 = scalar_lea.vmem [#allocation1], 49
        %v701 = vld [vmem:[%s700] ss:$2 sm:$0xff]
        %v702 = vrot.slane %v692, 1
        %v703 = vsel %vm205, %v695, %v702
        %v704 = vsel %vm207, %v695, %v703
        %v705 = vrot.slane %v698, 7
        %v706 = vsel %vm210, %v705, %v704
        %v707 = vsel %vm212, %v705, %v706
        %v708 = vrot.slane %v701, 6
        %v709 = vsel %vm215, %v708, %v707
        %v710 = vsel %vm217, %v708, %v709
        %711 = vrot.lane.b32.xlu0 %v710, 56
        %v712 = vpop.permute.xlu0 %711
        %vm714 = vcmask 732608
        %715 = vst.msk [vmem:[#allocation2 + $0x1c] sm:$0xf] %vm714, %v712
        %716 = vst.sshfl [vmem:[#allocation1] sm:$0xff pattern:$0x75316420] %v192
        %s717 = scalar_lea.vmem [#allocation1], 1
        %v718 = vld [vmem:[%s717] ss:$2 sm:$0xff]
        %719 = vst.sshfl [vmem:[#allocation1 + $0x10] sm:$0xff pattern:$0x75316420] %v194
        %s720 = scalar_lea.vmem [#allocation1], 17
        %v721 = vld [vmem:[%s720] ss:$2 sm:$0xff]
        %722 = vst.sshfl [vmem:[#allocation1 + $0x20] sm:$0xff pattern:$0x75316420] %v196
        %s723 = scalar_lea.vmem [#allocation1], 33
        %v724 = vld [vmem:[%s723] ss:$2 sm:$0xff]
        %725 = vst.sshfl [vmem:[#allocation1 + $0x30] sm:$0xff pattern:$0x75316420] %v198
        %s726 = scalar_lea.vmem [#allocation1], 49
        %v727 = vld [vmem:[%s726] ss:$2 sm:$0xff]
        %v728 = vrot.slane %v718, 2
        %v729 = vrot.slane %v721, 1
        %v730 = vsel %vm205, %v729, %v728
        %v731 = vsel %vm207, %v729, %v730
        %v732 = vsel %vm210, %v724, %v731
        %v733 = vsel %vm212, %v724, %v732
        %v734 = vrot.slane %v727, 7
        %v735 = vsel %vm215, %v734, %v733
        %v736 = vsel %vm217, %v734, %v735
        %737 = vrot.lane.b32.xlu0 %v736, 90
        %v738 = vpop.permute.xlu0 %737
        %vm740 = vcmask 1011408
        %741 = vst.msk [vmem:[#allocation2 + $0x1c] sm:$0xf] %vm740, %v738
        %742 = vst.sshfl [vmem:[#allocation1] sm:$0xff pattern:$0x75316420] %v192
        %s743 = scalar_lea.vmem [#allocation1], 1
        %v744 = vld [vmem:[%s743] ss:$2 sm:$0xff]
        %745 = vst.sshfl [vmem:[#allocation1 + $0x10] sm:$0xff pattern:$0x75316420] %v194
        %s746 = scalar_lea.vmem [#allocation1], 17
        %v747 = vld [vmem:[%s746] ss:$2 sm:$0xff]
        %748 = vst.sshfl [vmem:[#allocation1 + $0x20] sm:$0xff pattern:$0x75316420] %v196
        %s749 = scalar_lea.vmem [#allocation1], 33
        %v750 = vld [vmem:[%s749] ss:$2 sm:$0xff]
        %751 = vst.sshfl [vmem:[#allocation1 + $0x30] sm:$0xff pattern:$0x75316420] %v198
        %s752 = scalar_lea.vmem [#allocation1], 49
        %v753 = vld [vmem:[%s752] ss:$2 sm:$0xff]
        %v754 = vrot.slane %v744, 2
        %v755 = vrot.slane %v747, 1
        %v756 = vsel %vm205, %v755, %v754
        %v757 = vsel %vm207, %v755, %v756
        %v758 = vsel %vm210, %v750, %v757
        %v759 = vsel %vm212, %v750, %v758
        %v760 = vrot.slane %v753, 7
        %v761 = vsel %vm215, %v760, %v759
        %v762 = vsel %vm217, %v760, %v761
        %763 = vrot.lane.b32.xlu0 %v762, 124
        %v764 = vpop.permute.xlu0 %763
        %v765 = vrot.slane %v764, 4
        %vm766 = vcmask 1014784
        %v767 = vsel %vm766, %v765, %v764
        %vm769 = vcmask 1044448
        %vm770 = vcmask 244740
        %vm771 = vmor %vm770, %vm769
        %772 = vst.msk [vmem:[#allocation2 + $0x1c] sm:$0xff] %vm771, %v767
        %773 = vst.sshfl [vmem:[#allocation1] sm:$0xff pattern:$0x75316420] %v192
        %s774 = scalar_lea.vmem [#allocation1], 1
        %v775 = vld [vmem:[%s774] ss:$2 sm:$0xff]
        %776 = vst.sshfl [vmem:[#allocation1 + $0x10] sm:$0xff pattern:$0x75316420] %v194
        %s777 = scalar_lea.vmem [#allocation1], 17
        %v778 = vld [vmem:[%s777] ss:$2 sm:$0xff]
        %779 = vst.sshfl [vmem:[#allocation1 + $0x20] sm:$0xff pattern:$0x75316420] %v196
        %s780 = scalar_lea.vmem [#allocation1], 33
        %v781 = vld [vmem:[%s780] ss:$2 sm:$0xff]
        %782 = vst.sshfl [vmem:[#allocation1 + $0x30] sm:$0xff pattern:$0x75316420] %v198
        %s783 = scalar_lea.vmem [#allocation1], 49
        %v784 = vld [vmem:[%s783] ss:$2 sm:$0xff]
        %v785 = vrot.slane %v775, 3
        %v786 = vrot.slane %v778, 2
        %v787 = vsel %vm205, %v786, %v785
        %v788 = vsel %vm207, %v786, %v787
        %v789 = vrot.slane %v781, 1
        %v790 = vsel %vm210, %v789, %v788
        %v791 = vsel %vm212, %v789, %v790
        %v792 = vsel %vm215, %v784, %v791
        %v793 = vsel %vm217, %v784, %v792
        %794 = vrot.lane.b32.xlu0 %v793, 30
        %v795 = vpop.permute.xlu0 %794
        %vm797 = vcmask 519408
        %798 = vst.msk [vmem:[#allocation2 + $0x20] sm:$0xf] %vm797, %v795
        %799 = vst.sshfl [vmem:[#allocation1] sm:$0xff pattern:$0x75316420] %v192
        %s800 = scalar_lea.vmem [#allocation1], 1
        %v801 = vld [vmem:[%s800] ss:$2 sm:$0xff]
        %802 = vst.sshfl [vmem:[#allocation1 + $0x10] sm:$0xff pattern:$0x75316420] %v194
        %s803 = scalar_lea.vmem [#allocation1], 17
        %v804 = vld [vmem:[%s803] ss:$2 sm:$0xff]
        %805 = vst.sshfl [vmem:[#allocation1 + $0x20] sm:$0xff pattern:$0x75316420] %v196
        %s806 = scalar_lea.vmem [#allocation1], 33
        %v807 = vld [vmem:[%s806] ss:$2 sm:$0xff]
        %808 = vst.sshfl [vmem:[#allocation1 + $0x30] sm:$0xff pattern:$0x75316420] %v198
        %s809 = scalar_lea.vmem [#allocation1], 49
        %v810 = vld [vmem:[%s809] ss:$2 sm:$0xff]
        %v811 = vrot.slane %v801, 3
        %v812 = vrot.slane %v804, 2
        %v813 = vsel %vm205, %v812, %v811
        %v814 = vsel %vm207, %v812, %v813
        %v815 = vrot.slane %v807, 1
        %v816 = vsel %vm210, %v815, %v814
        %v817 = vsel %vm212, %v815, %v816
        %v818 = vsel %vm215, %v810, %v817
        %v819 = vsel %vm217, %v810, %v818
        %820 = vrot.lane.b32.xlu0 %v819, 64
        %v821 = vpop.permute.xlu0 %820
        %vm823 = vcmask 798208
        %824 = vst.msk [vmem:[#allocation2 + $0x20] sm:$0xf] %vm823, %v821
        %825 = vst.sshfl [vmem:[#allocation1] sm:$0xff pattern:$0x75316420] %v192
        %s826 = scalar_lea.vmem [#allocation1], 1
        %v827 = vld [vmem:[%s826] ss:$2 sm:$0xff]
        %828 = vst.sshfl [vmem:[#allocation1 + $0x10] sm:$0xff pattern:$0x75316420] %v194
        %s829 = scalar_lea.vmem [#allocation1], 17
        %v830 = vld [vmem:[%s829] ss:$2 sm:$0xff]
        %831 = vst.sshfl [vmem:[#allocation1 + $0x20] sm:$0xff pattern:$0x75316420] %v196
        %s832 = scalar_lea.vmem [#allocation1], 33
        %v833 = vld [vmem:[%s832] ss:$2 sm:$0xff]
        %834 = vst.sshfl [vmem:[#allocation1 + $0x30] sm:$0xff pattern:$0x75316420] %v198
        %s835 = scalar_lea.vmem [#allocation1], 49
        %v836 = vld [vmem:[%s835] ss:$2 sm:$0xff]
        %v837 = vrot.slane %v827, 3
        %v838 = vrot.slane %v830, 2
        %v839 = vsel %vm205, %v838, %v837
        %v840 = vsel %vm207, %v838, %v839
        %v841 = vrot.slane %v833, 1
        %v842 = vsel %vm210, %v841, %v840
        %v843 = vsel %vm212, %v841, %v842
        %v844 = vsel %vm215, %v836, %v843
        %v845 = vsel %vm217, %v836, %v844
        %846 = vrot.lane.b32.xlu0 %v845, 98
        %v847 = vpop.permute.xlu0 %846
        %v848 = vrot.slane %v847, 4
        %vm849 = vcmask 801792
        %v850 = vsel %vm849, %v848, %v847
        %vm852 = vcmask 1044240
        %vm853 = vcmask 31748
        %vm854 = vmor %vm853, %vm852
        %855 = vst.msk [vmem:[#allocation2 + $0x20] sm:$0xff] %vm854, %v850
        %vm856 = vcmask 44064
        %857 = vst.msk [vmem:[#allocation2 + $0x24] sm:$0xf] %vm856, 0.0
        %v858 = vld [vmem:[#allocation2] sm:$0xff]
        %v859 = vld [vmem:[#allocation2 + $0x8] sm:$0xff]
        %v860 = vld [vmem:[#allocation2 + $0x10] sm:$0xff]
        %v861 = vld [vmem:[#allocation2 + $0x18] sm:$0xff]
        %v862 = vld [vmem:[#allocation2 + $0x20] sm:$0xf]
        %868 = vst [vmem:[#allocation1] ss:$2 sm:$0xff] %v858
        %s869 = scalar_lea.vmem [#allocation1], 16
        %870 = vst [vmem:[%s869] ss:$2 sm:$0xff] %v859
        %s871 = scalar_lea.vmem [#allocation1], 32
        %872 = vst [vmem:[%s871] ss:$2 sm:$0xff] %v860
        %s873 = scalar_lea.vmem [#allocation1], 48
        %874 = vst [vmem:[%s873] ss:$2 sm:$0xff] %v861
        %v875 = vld.sshfl [vmem:[#allocation1] sm:$0xff pattern:$0x75316420]
        %v876 = vld.sshfl [vmem:[#allocation1 + $0x8] sm:$0xff pattern:$0x75316420]
        %v877 = vld.sshfl [vmem:[#allocation1 + $0x10] sm:$0xff pattern:$0x75316420]
        %v878 = vld.sshfl [vmem:[#allocation1 + $0x18] sm:$0xff pattern:$0x75316420]
        %v879 = vld.sshfl [vmem:[#allocation1 + $0x20] sm:$0xff pattern:$0x75316420]
        %v880 = vld.sshfl [vmem:[#allocation1 + $0x28] sm:$0xff pattern:$0x75316420]
        %v881 = vld.sshfl [vmem:[#allocation1 + $0x30] sm:$0xff pattern:$0x75316420]
        %v882 = vld.sshfl [vmem:[#allocation1 + $0x38] sm:$0xff pattern:$0x75316420]
        %883 = vst [vmem:[#allocation1] ss:$2 sm:$0xff] %v862
        %v884 = vld.sshfl [vmem:[#allocation1] sm:$0xff pattern:$0x75316420]
        %894 = vst [vmem:[#allocation3] sm:$0xf] %v875
        %895 = vst [vmem:[#allocation3 + $0x8] sm:$0xf] %v876
        %896 = vst [vmem:[#allocation3 + $0x10] sm:$0xf] %v877
        %897 = vst [vmem:[#allocation3 + $0x18] sm:$0xf] %v878
        %898 = vst [vmem:[#allocation3 + $0x20] sm:$0xf] %v879
        %899 = vst [vmem:[#allocation3 + $0x28] sm:$0xf] %v880
        %900 = vst [vmem:[#allocation3 + $0x30] sm:$0xf] %v881
        %901 = vst [vmem:[#allocation3 + $0x38] sm:$0xf] %v882
        %vm902 = vcmask 519168
        %903 = vst.msk [vmem:[#allocation3 + $0x40] sm:$0xf] %vm902, %v884
        %v904 = vld [vmem:[#allocation2] sm:$0xff]
        %v905 = vld [vmem:[#allocation2 + $0x8] sm:$0xff]
        %v906 = vld [vmem:[#allocation2 + $0x10] sm:$0xff]
        %v907 = vld [vmem:[#allocation2 + $0x18] sm:$0xff]
        %v908 = vld [vmem:[#allocation2 + $0x20] sm:$0xf]
        %s914 = scalar_lea.vmem [#allocation1], 1
        %915 = vst [vmem:[%s914] ss:$2 sm:$0xff] %v904
        %s916 = scalar_lea.vmem [#allocation1], 17
        %917 = vst [vmem:[%s916] ss:$2 sm:$0xff] %v905
        %s918 = scalar_lea.vmem [#allocation1], 33
        %919 = vst [vmem:[%s918] ss:$2 sm:$0xff] %v906
        %s920 = scalar_lea.vmem [#allocation1], 49
        %921 = vst [vmem:[%s920] ss:$2 sm:$0xff] %v907
        %v922 = vld.sshfl [vmem:[#allocation1] sm:$0xff pattern:$0x75316420]
        %v923 = vld.sshfl [vmem:[#allocation1 + $0x8] sm:$0xff pattern:$0x75316420]
        %v924 = vld.sshfl [vmem:[#allocation1 + $0x10] sm:$0xff pattern:$0x75316420]
        %v925 = vld.sshfl [vmem:[#allocation1 + $0x18] sm:$0xff pattern:$0x75316420]
        %v926 = vld.sshfl [vmem:[#allocation1 + $0x20] sm:$0xff pattern:$0x75316420]
        %v927 = vld.sshfl [vmem:[#allocation1 + $0x28] sm:$0xff pattern:$0x75316420]
        %v928 = vld.sshfl [vmem:[#allocation1 + $0x30] sm:$0xff pattern:$0x75316420]
        %v929 = vld.sshfl [vmem:[#allocation1 + $0x38] sm:$0xff pattern:$0x75316420]
        %930 = vst [vmem:[%s914] ss:$2 sm:$0xff] %v908
        %v931 = vld.sshfl [vmem:[#allocation1] sm:$0xff pattern:$0x75316420]
        %932 = vrot.lane.b32.xlu0 %v922, 127
        %v933 = vpop.permute.xlu0 %932
        %934 = vrot.lane.b32.xlu0 %v923, 127
        %v935 = vpop.permute.xlu0 %934
        %936 = vrot.lane.b32.xlu0 %v924, 127
        %v937 = vpop.permute.xlu0 %936
        %938 = vrot.lane.b32.xlu0 %v925, 127
        %v939 = vpop.permute.xlu0 %938
        %940 = vrot.lane.b32.xlu0 %v926, 127
        %v941 = vpop.permute.xlu0 %940
        %942 = vrot.lane.b32.xlu0 %v927, 127
        %v943 = vpop.permute.xlu0 %942
        %944 = vrot.lane.b32.xlu0 %v928, 127
        %v945 = vpop.permute.xlu0 %944
        %946 = vrot.lane.b32.xlu0 %v929, 127
        %v947 = vpop.permute.xlu0 %946
        %948 = vrot.lane.b32.xlu0 %v931, 127
        %v949 = vpop.permute.xlu0 %948
        %vm950 = vcmask 1039360
        %v951 = vsel %vm950, %v933, %v935
        %v952 = vsel %vm950, %v935, %v937
        %v953 = vsel %vm950, %v937, %v939
        %v954 = vsel %vm950, %v939, %v941
        %v955 = vsel %vm950, %v941, %v943
        %v956 = vsel %vm950, %v943, %v945
        %v957 = vsel %vm950, %v945, %v947
        %v958 = vsel %vm950, %v947, %v949
        %968 = vst [vmem:[#allocation3] sm:$0xf0] %v951
        %969 = vst [vmem:[#allocation3 + $0x8] sm:$0xf0] %v952
        %970 = vst [vmem:[#allocation3 + $0x10] sm:$0xf0] %v953
        %971 = vst [vmem:[#allocation3 + $0x18] sm:$0xf0] %v954
        %972 = vst [vmem:[#allocation3 + $0x20] sm:$0xf0] %v955
        %973 = vst [vmem:[#allocation3 + $0x28] sm:$0xf0] %v956
        %974 = vst [vmem:[#allocation3 + $0x30] sm:$0xf0] %v957
        %975 = vst [vmem:[#allocation3 + $0x38] sm:$0xf0] %v958
        %vm976 = vcmask 523268
        %977 = vst.msk [vmem:[#allocation3 + $0x40] sm:$0xf0] %vm976, %v949
        %v978 = vld [vmem:[#allocation2] sm:$0xff]
        %v979 = vld [vmem:[#allocation2 + $0x8] sm:$0xff]
        %v980 = vld [vmem:[#allocation2 + $0x10] sm:$0xff]
        %v981 = vld [vmem:[#allocation2 + $0x18] sm:$0xff]
        %v982 = vld [vmem:[#allocation2 + $0x20] sm:$0xf]
        %988 = vst [vmem:[#allocation1] ss:$2 sm:$0xff] %v978
        %s989 = scalar_lea.vmem [#allocation1], 16
        %990 = vst [vmem:[%s989] ss:$2 sm:$0xff] %v979
        %s991 = scalar_lea.vmem [#allocation1], 32
        %992 = vst [vmem:[%s991] ss:$2 sm:$0xff] %v980
        %s993 = scalar_lea.vmem [#allocation1], 48
        %994 = vst [vmem:[%s993] ss:$2 sm:$0xff] %v981
        %v995 = vld.sshfl [vmem:[#allocation1] sm:$0xff pattern:$0x75316420]
        %v996 = vld.sshfl [vmem:[#allocation1 + $0x8] sm:$0xff pattern:$0x75316420]
        %v997 = vld.sshfl [vmem:[#allocation1 + $0x10] sm:$0xff pattern:$0x75316420]
        %v998 = vld.sshfl [vmem:[#allocation1 + $0x18] sm:$0xff pattern:$0x75316420]
        %v999 = vld.sshfl [vmem:[#allocation1 + $0x20] sm:$0xff pattern:$0x75316420]
        %v1000 = vld.sshfl [vmem:[#allocation1 + $0x28] sm:$0xff pattern:$0x75316420]
        %v1001 = vld.sshfl [vmem:[#allocation1 + $0x30] sm:$0xff pattern:$0x75316420]
        %v1002 = vld.sshfl [vmem:[#allocation1 + $0x38] sm:$0xff pattern:$0x75316420]
        %1003 = vst [vmem:[#allocation1] ss:$2 sm:$0xff] %v982
        %v1004 = vld.sshfl [vmem:[#allocation1] sm:$0xff pattern:$0x75316420]
        %1005 = vrot.lane.b32.xlu0 %v995, 126
        %v1006 = vpop.permute.xlu0 %1005
        %1007 = vrot.lane.b32.xlu0 %v996, 126
        %v1008 = vpop.permute.xlu0 %1007
        %1009 = vrot.lane.b32.xlu0 %v997, 126
        %v1010 = vpop.permute.xlu0 %1009
        %1011 = vrot.lane.b32.xlu0 %v998, 126
        %v1012 = vpop.permute.xlu0 %1011
        %1013 = vrot.lane.b32.xlu0 %v999, 126
        %v1014 = vpop.permute.xlu0 %1013
        %1015 = vrot.lane.b32.xlu0 %v1000, 126
        %v1016 = vpop.permute.xlu0 %1015
        %1017 = vrot.lane.b32.xlu0 %v1001, 126
        %v1018 = vpop.permute.xlu0 %1017
        %1019 = vrot.lane.b32.xlu0 %v1002, 126
        %v1020 = vpop.permute.xlu0 %1019
        %1021 = vrot.lane.b32.xlu0 %v1004, 126
        %v1022 = vpop.permute.xlu0 %1021
        %v1023 = vsel %vm484, %v1006, %v1008
        %v1024 = vsel %vm484, %v1008, %v1010
        %v1025 = vsel %vm484, %v1010, %v1012
        %v1026 = vsel %vm484, %v1012, %v1014
        %v1027 = vsel %vm484, %v1014, %v1016
        %v1028 = vsel %vm484, %v1016, %v1018
        %v1029 = vsel %vm484, %v1018, %v1020
        %v1030 = vsel %vm484, %v1020, %v1022
        %1040 = vst [vmem:[#allocation3 + $0x48] sm:$0xf] %v1023
        %1041 = vst [vmem:[#allocation3 + $0x50] sm:$0xf] %v1024
        %1042 = vst [vmem:[#allocation3 + $0x58] sm:$0xf] %v1025
        %1043 = vst [vmem:[#allocation3 + $0x60] sm:$0xf] %v1026
        %1044 = vst [vmem:[#allocation3 + $0x68] sm:$0xf] %v1027
        %1045 = vst [vmem:[#allocation3 + $0x70] sm:$0xf] %v1028
        %1046 = vst [vmem:[#allocation3 + $0x78] sm:$0xf] %v1029
        %1047 = vst [vmem:[#allocation3 + $0x80] sm:$0xf] %v1030
        %1048 = vst.msk [vmem:[#allocation3 + $0x88] sm:$0xf] %vm902, %v1022
        %v1049 = vld [vmem:[#allocation2] sm:$0xff]
        %v1050 = vld [vmem:[#allocation2 + $0x8] sm:$0xff]
        %v1051 = vld [vmem:[#allocation2 + $0x10] sm:$0xff]
        %v1052 = vld [vmem:[#allocation2 + $0x18] sm:$0xff]
        %v1053 = vld [vmem:[#allocation2 + $0x20] sm:$0xf]
        %s1059 = scalar_lea.vmem [#allocation1], 1
        %1060 = vst [vmem:[%s1059] ss:$2 sm:$0xff] %v1049
        %s1061 = scalar_lea.vmem [#allocation1], 17
        %1062 = vst [vmem:[%s1061] ss:$2 sm:$0xff] %v1050
        %s1063 = scalar_lea.vmem [#allocation1], 33
        %1064 = vst [vmem:[%s1063] ss:$2 sm:$0xff] %v1051
        %s1065 = scalar_lea.vmem [#allocation1], 49
        %1066 = vst [vmem:[%s1065] ss:$2 sm:$0xff] %v1052
        %v1067 = vld.sshfl [vmem:[#allocation1] sm:$0xff pattern:$0x75316420]
        %v1068 = vld.sshfl [vmem:[#allocation1 + $0x8] sm:$0xff pattern:$0x75316420]
        %v1069 = vld.sshfl [vmem:[#allocation1 + $0x10] sm:$0xff pattern:$0x75316420]
        %v1070 = vld.sshfl [vmem:[#allocation1 + $0x18] sm:$0xff pattern:$0x75316420]
        %v1071 = vld.sshfl [vmem:[#allocation1 + $0x20] sm:$0xff pattern:$0x75316420]
        %v1072 = vld.sshfl [vmem:[#allocation1 + $0x28] sm:$0xff pattern:$0x75316420]
        %v1073 = vld.sshfl [vmem:[#allocation1 + $0x30] sm:$0xff pattern:$0x75316420]
        %v1074 = vld.sshfl [vmem:[#allocation1 + $0x38] sm:$0xff pattern:$0x75316420]
        %1075 = vst [vmem:[%s1059] ss:$2 sm:$0xff] %v1053
        %v1076 = vld.sshfl [vmem:[#allocation1] sm:$0xff pattern:$0x75316420]
        %1077 = vrot.lane.b32.xlu0 %v1067, 94
        %v1078 = vpop.permute.xlu0 %1077
        %1079 = vrot.lane.b32.xlu0 %v1068, 94
        %v1080 = vpop.permute.xlu0 %1079
        %1081 = vrot.lane.b32.xlu0 %v1069, 94
        %v1082 = vpop.permute.xlu0 %1081
        %1083 = vrot.lane.b32.xlu0 %v1070, 94
        %v1084 = vpop.permute.xlu0 %1083
        %1085 = vrot.lane.b32.xlu0 %v1071, 94
        %v1086 = vpop.permute.xlu0 %1085
        %1087 = vrot.lane.b32.xlu0 %v1072, 94
        %v1088 = vpop.permute.xlu0 %1087
        %1089 = vrot.lane.b32.xlu0 %v1073, 94
        %v1090 = vpop.permute.xlu0 %1089
        %1091 = vrot.lane.b32.xlu0 %v1074, 94
        %v1092 = vpop.permute.xlu0 %1091
        %1093 = vrot.lane.b32.xlu0 %v1076, 94
        %v1094 = vpop.permute.xlu0 %1093
        %vm1095 = vcmask 769024
        %v1096 = vsel %vm1095, %v1078, %v1080
        %v1097 = vsel %vm1095, %v1080, %v1082
        %v1098 = vsel %vm1095, %v1082, %v1084
        %v1099 = vsel %vm1095, %v1084, %v1086
        %v1100 = vsel %vm1095, %v1086, %v1088
        %v1101 = vsel %vm1095, %v1088, %v1090
        %v1102 = vsel %vm1095, %v1090, %v1092
        %v1103 = vsel %vm1095, %v1092, %v1094
        %1113 = vst [vmem:[#allocation3 + $0x48] sm:$0xf0] %v1096
        %1114 = vst [vmem:[#allocation3 + $0x50] sm:$0xf0] %v1097
        %1115 = vst [vmem:[#allocation3 + $0x58] sm:$0xf0] %v1098
        %1116 = vst [vmem:[#allocation3 + $0x60] sm:$0xf0] %v1099
        %1117 = vst [vmem:[#allocation3 + $0x68] sm:$0xf0] %v1100
        %1118 = vst [vmem:[#allocation3 + $0x70] sm:$0xf0] %v1101
        %1119 = vst [vmem:[#allocation3 + $0x78] sm:$0xf0] %v1102
        %1120 = vst [vmem:[#allocation3 + $0x80] sm:$0xf0] %v1103
        %1121 = vst.msk [vmem:[#allocation3 + $0x88] sm:$0xf0] %vm976, %v1094
        %v1122 = vld [vmem:[#allocation2] sm:$0xff]
        %v1123 = vld [vmem:[#allocation2 + $0x8] sm:$0xff]
        %v1124 = vld [vmem:[#allocation2 + $0x10] sm:$0xff]
        %v1125 = vld [vmem:[#allocation2 + $0x18] sm:$0xff]
        %v1126 = vld [vmem:[#allocation2 + $0x20] sm:$0xf]
        %1132 = vst [vmem:[#allocation1] ss:$2 sm:$0xff] %v1122
        %s1133 = scalar_lea.vmem [#allocation1], 16
        %1134 = vst [vmem:[%s1133] ss:$2 sm:$0xff] %v1123
        %s1135 = scalar_lea.vmem [#allocation1], 32
        %1136 = vst [vmem:[%s1135] ss:$2 sm:$0xff] %v1124
        %s1137 = scalar_lea.vmem [#allocation1], 48
        %1138 = vst [vmem:[%s1137] ss:$2 sm:$0xff] %v1125
        %v1139 = vld.sshfl [vmem:[#allocation1] sm:$0xff pattern:$0x75316420]
        %v1140 = vld.sshfl [vmem:[#allocation1 + $0x8] sm:$0xff pattern:$0x75316420]
        %v1141 = vld.sshfl [vmem:[#allocation1 + $0x10] sm:$0xff pattern:$0x75316420]
        %v1142 = vld.sshfl [vmem:[#allocation1 + $0x18] sm:$0xff pattern:$0x75316420]
        %v1143 = vld.sshfl [vmem:[#allocation1 + $0x20] sm:$0xff pattern:$0x75316420]
        %v1144 = vld.sshfl [vmem:[#allocation1 + $0x28] sm:$0xff pattern:$0x75316420]
        %v1145 = vld.sshfl [vmem:[#allocation1 + $0x30] sm:$0xff pattern:$0x75316420]
        %v1146 = vld.sshfl [vmem:[#allocation1 + $0x38] sm:$0xff pattern:$0x75316420]
        %1147 = vst [vmem:[#allocation1] ss:$2 sm:$0xff] %v1126
        %v1148 = vld.sshfl [vmem:[#allocation1] sm:$0xff pattern:$0x75316420]
        %1149 = vrot.lane.b32.xlu0 %v1139, 93
        %v1150 = vpop.permute.xlu0 %1149
        %1151 = vrot.lane.b32.xlu0 %v1140, 93
        %v1152 = vpop.permute.xlu0 %1151
        %1153 = vrot.lane.b32.xlu0 %v1141, 93
        %v1154 = vpop.permute.xlu0 %1153
        %1155 = vrot.lane.b32.xlu0 %v1142, 93
        %v1156 = vpop.permute.xlu0 %1155
        %1157 = vrot.lane.b32.xlu0 %v1143, 93
        %v1158 = vpop.permute.xlu0 %1157
        %1159 = vrot.lane.b32.xlu0 %v1144, 93
        %v1160 = vpop.permute.xlu0 %1159
        %1161 = vrot.lane.b32.xlu0 %v1145, 93
        %v1162 = vpop.permute.xlu0 %1161
        %1163 = vrot.lane.b32.xlu0 %v1146, 93
        %v1164 = vpop.permute.xlu0 %1163
        %1165 = vrot.lane.b32.xlu0 %v1148, 93
        %v1166 = vpop.permute.xlu0 %1165
        %vm1167 = vcmask 760832
        %v1168 = vsel %vm1167, %v1150, %v1152
        %v1169 = vsel %vm1167, %v1152, %v1154
        %v1170 = vsel %vm1167, %v1154, %v1156
        %v1171 = vsel %vm1167, %v1156, %v1158
        %v1172 = vsel %vm1167, %v1158, %v1160
        %v1173 = vsel %vm1167, %v1160, %v1162
        %v1174 = vsel %vm1167, %v1162, %v1164
        %v1175 = vsel %vm1167, %v1164, %v1166
        %1185 = vst [vmem:[#allocation3 + $0x90] sm:$0xf] %v1168
        %1186 = vst [vmem:[#allocation3 + $0x98] sm:$0xf] %v1169
        %1187 = vst [vmem:[#allocation3 + $0xa0] sm:$0xf] %v1170
        %1188 = vst [vmem:[#allocation3 + $0xa8] sm:$0xf] %v1171
        %1189 = vst [vmem:[#allocation3 + $0xb0] sm:$0xf] %v1172
        %1190 = vst [vmem:[#allocation3 + $0xb8] sm:$0xf] %v1173
        %1191 = vst [vmem:[#allocation3 + $0xc0] sm:$0xf] %v1174
        %1192 = vst [vmem:[#allocation3 + $0xc8] sm:$0xf] %v1175
        %1193 = vst.msk [vmem:[#allocation3 + $0xd0] sm:$0xf] %vm902, %v1166
        %v1194 = vld [vmem:[#allocation2] sm:$0xff]
        %v1195 = vld [vmem:[#allocation2 + $0x8] sm:$0xff]
        %v1196 = vld [vmem:[#allocation2 + $0x10] sm:$0xff]
        %v1197 = vld [vmem:[#allocation2 + $0x18] sm:$0xff]
        %v1198 = vld [vmem:[#allocation2 + $0x20] sm:$0xf]
        %s1204 = scalar_lea.vmem [#allocation1], 1
        %1205 = vst [vmem:[%s1204] ss:$2 sm:$0xff] %v1194
        %s1206 = scalar_lea.vmem [#allocation1], 17
        %1207 = vst [vmem:[%s1206] ss:$2 sm:$0xff] %v1195
        %s1208 = scalar_lea.vmem [#allocation1], 33
        %1209 = vst [vmem:[%s1208] ss:$2 sm:$0xff] %v1196
        %s1210 = scalar_lea.vmem [#allocation1], 49
        %1211 = vst [vmem:[%s1210] ss:$2 sm:$0xff] %v1197
        %v1212 = vld.sshfl [vmem:[#allocation1] sm:$0xff pattern:$0x75316420]
        %v1213 = vld.sshfl [vmem:[#allocation1 + $0x8] sm:$0xff pattern:$0x75316420]
        %v1214 = vld.sshfl [vmem:[#allocation1 + $0x10] sm:$0xff pattern:$0x75316420]
        %v1215 = vld.sshfl [vmem:[#allocation1 + $0x18] sm:$0xff pattern:$0x75316420]
        %v1216 = vld.sshfl [vmem:[#allocation1 + $0x20] sm:$0xff pattern:$0x75316420]
        %v1217 = vld.sshfl [vmem:[#allocation1 + $0x28] sm:$0xff pattern:$0x75316420]
        %v1218 = vld.sshfl [vmem:[#allocation1 + $0x30] sm:$0xff pattern:$0x75316420]
        %v1219 = vld.sshfl [vmem:[#allocation1 + $0x38] sm:$0xff pattern:$0x75316420]
        %1220 = vst [vmem:[%s1204] ss:$2 sm:$0xff] %v1198
        %v1221 = vld.sshfl [vmem:[#allocation1] sm:$0xff pattern:$0x75316420]
        %1222 = vrot.lane.b32.xlu0 %v1212, 92
        %v1223 = vpop.permute.xlu0 %1222
        %1224 = vrot.lane.b32.xlu0 %v1213, 92
        %v1225 = vpop.permute.xlu0 %1224
        %1226 = vrot.lane.b32.xlu0 %v1214, 92
        %v1227 = vpop.permute.xlu0 %1226
        %1228 = vrot.lane.b32.xlu0 %v1215, 92
        %v1229 = vpop.permute.xlu0 %1228
        %1230 = vrot.lane.b32.xlu0 %v1216, 92
        %v1231 = vpop.permute.xlu0 %1230
        %1232 = vrot.lane.b32.xlu0 %v1217, 92
        %v1233 = vpop.permute.xlu0 %1232
        %1234 = vrot.lane.b32.xlu0 %v1218, 92
        %v1235 = vpop.permute.xlu0 %1234
        %1236 = vrot.lane.b32.xlu0 %v1219, 92
        %v1237 = vpop.permute.xlu0 %1236
        %1238 = vrot.lane.b32.xlu0 %v1221, 92
        %v1239 = vpop.permute.xlu0 %1238
        %vm1240 = vcmask 752640
        %v1241 = vsel %vm1240, %v1223, %v1225
        %v1242 = vsel %vm1240, %v1225, %v1227
        %v1243 = vsel %vm1240, %v1227, %v1229
        %v1244 = vsel %vm1240, %v1229, %v1231
        %v1245 = vsel %vm1240, %v1231, %v1233
        %v1246 = vsel %vm1240, %v1233, %v1235
        %v1247 = vsel %vm1240, %v1235, %v1237
        %v1248 = vsel %vm1240, %v1237, %v1239
        %1258 = vst [vmem:[#allocation3 + $0x90] sm:$0xf0] %v1241
        %1259 = vst [vmem:[#allocation3 + $0x98] sm:$0xf0] %v1242
        %1260 = vst [vmem:[#allocation3 + $0xa0] sm:$0xf0] %v1243
        %1261 = vst [vmem:[#allocation3 + $0xa8] sm:$0xf0] %v1244
        %1262 = vst [vmem:[#allocation3 + $0xb0] sm:$0xf0] %v1245
        %1263 = vst [vmem:[#allocation3 + $0xb8] sm:$0xf0] %v1246
        %1264 = vst [vmem:[#allocation3 + $0xc0] sm:$0xf0] %v1247
        %1265 = vst [vmem:[#allocation3 + $0xc8] sm:$0xf0] %v1248
        %1266 = vst.msk [vmem:[#allocation3 + $0xd0] sm:$0xf0] %vm976, %v1239
        %v1267 = vld [vmem:[#allocation2] sm:$0xff]
        %v1268 = vld [vmem:[#allocation2 + $0x8] sm:$0xff]
        %v1269 = vld [vmem:[#allocation2 + $0x10] sm:$0xff]
        %v1270 = vld [vmem:[#allocation2 + $0x18] sm:$0xff]
        %v1271 = vld [vmem:[#allocation2 + $0x20] sm:$0xff]
        %1277 = vst [vmem:[#allocation1] ss:$2 sm:$0xff] %v1267
        %s1278 = scalar_lea.vmem [#allocation1], 16
        %1279 = vst [vmem:[%s1278] ss:$2 sm:$0xff] %v1268
        %s1280 = scalar_lea.vmem [#allocation1], 32
        %1281 = vst [vmem:[%s1280] ss:$2 sm:$0xff] %v1269
        %s1282 = scalar_lea.vmem [#allocation1], 48
        %1283 = vst [vmem:[%s1282] ss:$2 sm:$0xff] %v1270
        %v1284 = vld.sshfl [vmem:[#allocation1] sm:$0xff pattern:$0x75316420]
        %v1285 = vld.sshfl [vmem:[#allocation1 + $0x8] sm:$0xff pattern:$0x75316420]
        %v1286 = vld.sshfl [vmem:[#allocation1 + $0x10] sm:$0xff pattern:$0x75316420]
        %v1287 = vld.sshfl [vmem:[#allocation1 + $0x18] sm:$0xff pattern:$0x75316420]
        %v1288 = vld.sshfl [vmem:[#allocation1 + $0x20] sm:$0xff pattern:$0x75316420]
        %v1289 = vld.sshfl [vmem:[#allocation1 + $0x28] sm:$0xff pattern:$0x75316420]
        %v1290 = vld.sshfl [vmem:[#allocation1 + $0x30] sm:$0xff pattern:$0x75316420]
        %v1291 = vld.sshfl [vmem:[#allocation1 + $0x38] sm:$0xff pattern:$0x75316420]
        %1292 = vst [vmem:[#allocation1] ss:$2 sm:$0xff] %v1271
        %v1293 = vld.sshfl [vmem:[#allocation1] sm:$0xff pattern:$0x75316420]
        %v1294 = vld.sshfl [vmem:[#allocation1 + $0x8] sm:$0xff pattern:$0x75316420]
        %1295 = vrot.lane.b32.xlu0 %v1284, 60
        %v1296 = vpop.permute.xlu0 %1295
        %1297 = vrot.lane.b32.xlu0 %v1285, 60
        %v1298 = vpop.permute.xlu0 %1297
        %1299 = vrot.lane.b32.xlu0 %v1286, 60
        %v1300 = vpop.permute.xlu0 %1299
        %1301 = vrot.lane.b32.xlu0 %v1287, 60
        %v1302 = vpop.permute.xlu0 %1301
        %1303 = vrot.lane.b32.xlu0 %v1288, 60
        %v1304 = vpop.permute.xlu0 %1303
        %1305 = vrot.lane.b32.xlu0 %v1289, 60
        %v1306 = vpop.permute.xlu0 %1305
        %1307 = vrot.lane.b32.xlu0 %v1290, 60
        %v1308 = vpop.permute.xlu0 %1307
        %1309 = vrot.lane.b32.xlu0 %v1291, 60
        %v1310 = vpop.permute.xlu0 %1309
        %1311 = vrot.lane.b32.xlu0 %v1293, 60
        %v1312 = vpop.permute.xlu0 %1311
        %1313 = vrot.lane.b32.xlu0 %v1294, 60
        %v1314 = vpop.permute.xlu0 %1313
        %vm1315 = vcmask 490496
        %v1316 = vsel %vm1315, %v1296, %v1298
        %v1317 = vsel %vm1315, %v1298, %v1300
        %v1318 = vsel %vm1315, %v1300, %v1302
        %v1319 = vsel %vm1315, %v1302, %v1304
        %v1320 = vsel %vm1315, %v1304, %v1306
        %v1321 = vsel %vm1315, %v1306, %v1308
        %v1322 = vsel %vm1315, %v1308, %v1310
        %v1323 = vsel %vm1315, %v1310, %v1312
        %v1324 = vsel %vm1315, %v1312, %v1314
        %1334 = vst [vmem:[#allocation3 + $0xd8] sm:$0xf] %v1316
        %1335 = vst [vmem:[#allocation3 + $0xe0] sm:$0xf] %v1317
        %1336 = vst [vmem:[#allocation3 + $0xe8] sm:$0xf] %v1318
        %1337 = vst [vmem:[#allocation3 + $0xf0] sm:$0xf] %v1319
        %1338 = vst [vmem:[#allocation3 + $0xf8] sm:$0xf] %v1320
        %1339 = vst [vmem:[#allocation3 + $0x100] sm:$0xf] %v1321
        %1340 = vst [vmem:[#allocation3 + $0x108] sm:$0xf] %v1322
        %1341 = vst [vmem:[#allocation3 + $0x110] sm:$0xf] %v1323
        %1342 = vst.msk [vmem:[#allocation3 + $0x118] sm:$0xf] %vm902, %v1324
        %v1343 = vld [vmem:[#allocation2] sm:$0xff]
        %v1344 = vld [vmem:[#allocation2 + $0x8] sm:$0xff]
        %v1345 = vld [vmem:[#allocation2 + $0x10] sm:$0xff]
        %v1346 = vld [vmem:[#allocation2 + $0x18] sm:$0xff]
        %v1347 = vld [vmem:[#allocation2 + $0x20] sm:$0xff]
        %s1353 = scalar_lea.vmem [#allocation1], 1
        %1354 = vst [vmem:[%s1353] ss:$2 sm:$0xff] %v1343
        %s1355 = scalar_lea.vmem [#allocation1], 17
        %1356 = vst [vmem:[%s1355] ss:$2 sm:$0xff] %v1344
        %s1357 = scalar_lea.vmem [#allocation1], 33
        %1358 = vst [vmem:[%s1357] ss:$2 sm:$0xff] %v1345
        %s1359 = scalar_lea.vmem [#allocation1], 49
        %1360 = vst [vmem:[%s1359] ss:$2 sm:$0xff] %v1346
        %v1361 = vld.sshfl [vmem:[#allocation1] sm:$0xff pattern:$0x75316420]
        %v1362 = vld.sshfl [vmem:[#allocation1 + $0x8] sm:$0xff pattern:$0x75316420]
        %v1363 = vld.sshfl [vmem:[#allocation1 + $0x10] sm:$0xff pattern:$0x75316420]
        %v1364 = vld.sshfl [vmem:[#allocation1 + $0x18] sm:$0xff pattern:$0x75316420]
        %v1365 = vld.sshfl [vmem:[#allocation1 + $0x20] sm:$0xff pattern:$0x75316420]
        %v1366 = vld.sshfl [vmem:[#allocation1 + $0x28] sm:$0xff pattern:$0x75316420]
        %v1367 = vld.sshfl [vmem:[#allocation1 + $0x30] sm:$0xff pattern:$0x75316420]
        %v1368 = vld.sshfl [vmem:[#allocation1 + $0x38] sm:$0xff pattern:$0x75316420]
        %1369 = vst [vmem:[%s1353] ss:$2 sm:$0xff] %v1347
        %v1370 = vld.sshfl [vmem:[#allocation1] sm:$0xff pattern:$0x75316420]
        %v1371 = vld.sshfl [vmem:[#allocation1 + $0x8] sm:$0xff pattern:$0x75316420]
        %1372 = vrot.lane.b32.xlu0 %v1361, 59
        %v1373 = vpop.permute.xlu0 %1372
        %1374 = vrot.lane.b32.xlu0 %v1362, 59
        %v1375 = vpop.permute.xlu0 %1374
        %1376 = vrot.lane.b32.xlu0 %v1363, 59
        %v1377 = vpop.permute.xlu0 %1376
        %1378 = vrot.lane.b32.xlu0 %v1364, 59
        %v1379 = vpop.permute.xlu0 %1378
        %1380 = vrot.lane.b32.xlu0 %v1365, 59
        %v1381 = vpop.permute.xlu0 %1380
        %1382 = vrot.lane.b32.xlu0 %v1366, 59
        %v1383 = vpop.permute.xlu0 %1382
        %1384 = vrot.lane.b32.xlu0 %v1367, 59
        %v1385 = vpop.permute.xlu0 %1384
        %1386 = vrot.lane.b32.xlu0 %v1368, 59
        %v1387 = vpop.permute.xlu0 %1386
        %1388 = vrot.lane.b32.xlu0 %v1370, 59
        %v1389 = vpop.permute.xlu0 %1388
        %1390 = vrot.lane.b32.xlu0 %v1371, 59
        %v1391 = vpop.permute.xlu0 %1390
        %vm1392 = vcmask 482304
        %v1393 = vsel %vm1392, %v1373, %v1375
        %v1394 = vsel %vm1392, %v1375, %v1377
        %v1395 = vsel %vm1392, %v1377, %v1379
        %v1396 = vsel %vm1392, %v1379, %v1381
        %v1397 = vsel %vm1392, %v1381, %v1383
        %v1398 = vsel %vm1392, %v1383, %v1385
        %v1399 = vsel %vm1392, %v1385, %v1387
        %v1400 = vsel %vm1392, %v1387, %v1389
        %v1401 = vsel %vm1392, %v1389, %v1391
        %1411 = vst [vmem:[#allocation3 + $0xd8] sm:$0xf0] %v1393
        %1412 = vst [vmem:[#allocation3 + $0xe0] sm:$0xf0] %v1394
        %1413 = vst [vmem:[#allocation3 + $0xe8] sm:$0xf0] %v1395
        %1414 = vst [vmem:[#allocation3 + $0xf0] sm:$0xf0] %v1396
        %1415 = vst [vmem:[#allocation3 + $0xf8] sm:$0xf0] %v1397
        %1416 = vst [vmem:[#allocation3 + $0x100] sm:$0xf0] %v1398
        %1417 = vst [vmem:[#allocation3 + $0x108] sm:$0xf0] %v1399
        %1418 = vst [vmem:[#allocation3 + $0x110] sm:$0xf0] %v1400
        %1419 = vst.msk [vmem:[#allocation3 + $0x118] sm:$0xf0] %vm976, %v1401
        %v1420 = vld [vmem:[#allocation2] sm:$0xff]
        %v1421 = vld [vmem:[#allocation2 + $0x8] sm:$0xff]
        %v1422 = vld [vmem:[#allocation2 + $0x10] sm:$0xff]
        %v1423 = vld [vmem:[#allocation2 + $0x18] sm:$0xff]
        %v1424 = vld [vmem:[#allocation2 + $0x20] sm:$0xff]
        %1430 = vst [vmem:[#allocation1] ss:$2 sm:$0xff] %v1420
        %s1431 = scalar_lea.vmem [#allocation1], 16
        %1432 = vst [vmem:[%s1431] ss:$2 sm:$0xff] %v1421
        %s1433 = scalar_lea.vmem [#allocation1], 32
        %1434 = vst [vmem:[%s1433] ss:$2 sm:$0xff] %v1422
        %s1435 = scalar_lea.vmem [#allocation1], 48
        %1436 = vst [vmem:[%s1435] ss:$2 sm:$0xff] %v1423
        %v1437 = vld.sshfl [vmem:[#allocation1] sm:$0xff pattern:$0x75316420]
        %v1438 = vld.sshfl [vmem:[#allocation1 + $0x8] sm:$0xff pattern:$0x75316420]
        %v1439 = vld.sshfl [vmem:[#allocation1 + $0x10] sm:$0xff pattern:$0x75316420]
        %v1440 = vld.sshfl [vmem:[#allocation1 + $0x18] sm:$0xff pattern:$0x75316420]
        %v1441 = vld.sshfl [vmem:[#allocation1 + $0x20] sm:$0xff pattern:$0x75316420]
        %v1442 = vld.sshfl [vmem:[#allocation1 + $0x28] sm:$0xff pattern:$0x75316420]
        %v1443 = vld.sshfl [vmem:[#allocation1 + $0x30] sm:$0xff pattern:$0x75316420]
        %v1444 = vld.sshfl [vmem:[#allocation1 + $0x38] sm:$0xff pattern:$0x75316420]
        %1445 = vst [vmem:[#allocation1] ss:$2 sm:$0xff] %v1424
        %v1446 = vld.sshfl [vmem:[#allocation1] sm:$0xff pattern:$0x75316420]
        %v1447 = vld.sshfl [vmem:[#allocation1 + $0x8] sm:$0xff pattern:$0x75316420]
        %1448 = vrot.lane.b32.xlu0 %v1437, 58
        %v1449 = vpop.permute.xlu0 %1448
        %1450 = vrot.lane.b32.xlu0 %v1438, 58
        %v1451 = vpop.permute.xlu0 %1450
        %1452 = vrot.lane.b32.xlu0 %v1439, 58
        %v1453 = vpop.permute.xlu0 %1452
        %1454 = vrot.lane.b32.xlu0 %v1440, 58
        %v1455 = vpop.permute.xlu0 %1454
        %1456 = vrot.lane.b32.xlu0 %v1441, 58
        %v1457 = vpop.permute.xlu0 %1456
        %1458 = vrot.lane.b32.xlu0 %v1442, 58
        %v1459 = vpop.permute.xlu0 %1458
        %1460 = vrot.lane.b32.xlu0 %v1443, 58
        %v1461 = vpop.permute.xlu0 %1460
        %1462 = vrot.lane.b32.xlu0 %v1444, 58
        %v1463 = vpop.permute.xlu0 %1462
        %1464 = vrot.lane.b32.xlu0 %v1446, 58
        %v1465 = vpop.permute.xlu0 %1464
        %1466 = vrot.lane.b32.xlu0 %v1447, 58
        %v1467 = vpop.permute.xlu0 %1466
        %vm1468 = vcmask 474112
        %v1469 = vsel %vm1468, %v1449, %v1451
        %v1470 = vsel %vm1468, %v1451, %v1453
        %v1471 = vsel %vm1468, %v1453, %v1455
        %v1472 = vsel %vm1468, %v1455, %v1457
        %v1473 = vsel %vm1468, %v1457, %v1459
        %v1474 = vsel %vm1468, %v1459, %v1461
        %v1475 = vsel %vm1468, %v1461, %v1463
        %v1476 = vsel %vm1468, %v1463, %v1465
        %v1477 = vsel %vm1468, %v1465, %v1467
        %1487 = vst [vmem:[#allocation3 + $0x120] sm:$0xf] %v1469
        %1488 = vst [vmem:[#allocation3 + $0x128] sm:$0xf] %v1470
        %1489 = vst [vmem:[#allocation3 + $0x130] sm:$0xf] %v1471
        %1490 = vst [vmem:[#allocation3 + $0x138] sm:$0xf] %v1472
        %1491 = vst [vmem:[#allocation3 + $0x140] sm:$0xf] %v1473
        %1492 = vst [vmem:[#allocation3 + $0x148] sm:$0xf] %v1474
        %1493 = vst [vmem:[#allocation3 + $0x150] sm:$0xf] %v1475
        %1494 = vst [vmem:[#allocation3 + $0x158] sm:$0xf] %v1476
        %1495 = vst.msk [vmem:[#allocation3 + $0x160] sm:$0xf] %vm902, %v1477
        %v1496 = vld [vmem:[%s1] sm:$0xff]
        %v1497 = vld [vmem:[#allocation3] sm:$0xff]
        %v1498 = vld [vmem:[#allocation3 + $0x8] sm:$0xff]
        %v1499 = vld [vmem:[#allocation3 + $0x10] sm:$0xff]
        %v1500 = vld [vmem:[#allocation3 + $0x18] sm:$0xff]
        %v1501 = vld [vmem:[#allocation3 + $0x20] sm:$0xff]
        %v1502 = vld [vmem:[#allocation3 + $0x28] sm:$0xff]
        %v1503 = vld [vmem:[#allocation3 + $0x30] sm:$0xff]
        %v1504 = vld [vmem:[#allocation3 + $0x38] sm:$0xff]
        %v1505 = vld [vmem:[#allocation3 + $0x40] sm:$0xff]
        %v1506 = vld [vmem:[#allocation3 + $0x48] sm:$0xff]
        %v1507 = vld [vmem:[#allocation3 + $0x50] sm:$0xff]
        %v1508 = vld [vmem:[#allocation3 + $0x58] sm:$0xff]
        %v1509 = vld [vmem:[#allocation3 + $0x60] sm:$0xff]
        %v1510 = vld [vmem:[#allocation3 + $0x68] sm:$0xff]
        %v1511 = vld [vmem:[#allocation3 + $0x70] sm:$0xff]
        %v1512 = vld [vmem:[#allocation3 + $0x78] sm:$0xff]
        %v1513 = vld [vmem:[#allocation3 + $0x80] sm:$0xff]
        %v1514 = vld [vmem:[#allocation3 + $0x88] sm:$0xff]
        %v1515 = vld [vmem:[#allocation3 + $0x90] sm:$0xff]
        %v1516 = vld [vmem:[#allocation3 + $0x98] sm:$0xff]
        %v1517 = vld [vmem:[#allocation3 + $0xa0] sm:$0xff]
        %v1518 = vld [vmem:[#allocation3 + $0xa8] sm:$0xff]
        %v1519 = vld [vmem:[#allocation3 + $0xb0] sm:$0xff]
        %v1520 = vld [vmem:[#allocation3 + $0xb8] sm:$0xff]
        %v1521 = vld [vmem:[#allocation3 + $0xc0] sm:$0xff]
        %v1522 = vld [vmem:[#allocation3 + $0xc8] sm:$0xff]
        %v1523 = vld [vmem:[#allocation3 + $0xd0] sm:$0xff]
        %v1524 = vld [vmem:[#allocation3 + $0xd8] sm:$0xff]
        %v1525 = vld [vmem:[#allocation3 + $0xe0] sm:$0xff]
        %v1526 = vld [vmem:[#allocation3 + $0xe8] sm:$0xff]
        %v1527 = vld [vmem:[#allocation3 + $0xf0] sm:$0xff]
        %v1528 = vld [vmem:[#allocation3 + $0xf8] sm:$0xff]
        %v1529 = vld [vmem:[#allocation3 + $0x100] sm:$0xff]
        %v1530 = vld [vmem:[#allocation3 + $0x108] sm:$0xff]
        %v1531 = vld [vmem:[#allocation3 + $0x110] sm:$0xff]
        %v1532 = vld [vmem:[#allocation3 + $0x118] sm:$0xff]
        %v1533 = vld [vmem:[#allocation3 + $0x120] sm:$0xf]
        %v1534 = vld [vmem:[#allocation3 + $0x128] sm:$0xf]
        %v1535 = vld [vmem:[#allocation3 + $0x130] sm:$0xf]
        %v1536 = vld [vmem:[#allocation3 + $0x138] sm:$0xf]
        %v1537 = vld [vmem:[#allocation3 + $0x140] sm:$0xf]
        %v1538 = vld [vmem:[#allocation3 + $0x148] sm:$0xf]
        %v1539 = vld [vmem:[#allocation3 + $0x150] sm:$0xf]
        %v1540 = vld [vmem:[#allocation3 + $0x158] sm:$0xf]
        %v1541 = vld [vmem:[#allocation3 + $0x160] sm:$0xf]
        %v1542 = vld [vmem:[%s2] sm:$0xff]
        %1544 = vset.pattern.permute.xlu0 0
        %1545 = vperm.xlu0 %1544, %v1542
        %v1546 = vpop.permute.xlu0 %1545
        %vm1548 = vcmask 293888
        %v1550 = vsel %vm1548, %v1496, 0
        %vm1552 = vcmask 1043456
        %v1554 = vsel %vm1552, %v1533, 0
        %v1557 = vsel %vm1552, %v1534, 0
        %v1560 = vsel %vm1552, %v1535, 0
        %v1563 = vsel %vm1552, %v1536, 0
        %v1566 = vsel %vm1552, %v1537, 0
        %v1569 = vsel %vm1552, %v1538, 0
        %v1572 = vsel %vm1552, %v1539, 0
        %v1575 = vsel %vm1552, %v1540, 0
        %v1578 = vsel %vm1552, %v1541, 0
        %1580 = vmatpush.msra.mxu0 0.0
        %1581 = vmatpush.msra.mxu0 0.0
        %1582 = vmatpush.msra.mxu0 0.0
        %1583 = vmatpush.msra.mxu0 0.0
        %1584 = vmatpush.msra.mxu0 0.0
        %1585 = vmatpush.msra.mxu0 0.0
        %1586 = vmatpush.msra.mxu0 0.0
        %1587 = vmatpush.msra.mxu0 0.0
        %1588 = vmatpush.msra.mxu0 0.0
        %1589 = vmatpush.msra.mxu0 0.0
        %1590 = vmatpush.msra.mxu0 0.0
        %1591 = vmatpush.msra.mxu0 %v1554
        %1592 = vmatpush.msra.mxu0 %v1524
        %1593 = vmatpush.msra.mxu0 %v1515
        %1594 = vmatpush.msra.mxu0 %v1506
        %1595 = vmatpush.msra.mxu0 %v1497
        %1596 = vmatmul.f32.gmra.mxu0 %v1550
        %v1597 = vpop.f32.mrf.mxu0
        %v1598 = vadd.f32 %v1546, %v1597
        %1599 = vdwg.mxu0
        %1600 = vmatpush.msra.mxu0 0.0
        %1601 = vmatpush.msra.mxu0 0.0
        %1602 = vmatpush.msra.mxu0 0.0
        %1603 = vmatpush.msra.mxu0 0.0
        %1604 = vmatpush.msra.mxu0 0.0
        %1605 = vmatpush.msra.mxu0 0.0
        %1606 = vmatpush.msra.mxu0 0.0
        %1607 = vmatpush.msra.mxu0 0.0
        %1608 = vmatpush.msra.mxu0 0.0
        %1609 = vmatpush.msra.mxu0 0.0
        %1610 = vmatpush.msra.mxu0 0.0
        %1611 = vmatpush.msra.mxu0 %v1557
        %1612 = vmatpush.msra.mxu0 %v1525
        %1613 = vmatpush.msra.mxu0 %v1516
        %1614 = vmatpush.msra.mxu0 %v1507
        %1615 = vmatpush.msra.mxu0 %v1498
        %1616 = vmatmul.f32.gmra.mxu0 %v1550
        %v1617 = vpop.f32.mrf.mxu0
        %v1618 = vadd.f32 %v1546, %v1617
        %1619 = vdwg.mxu0
        %1620 = vmatpush.msra.mxu0 0.0
        %1621 = vmatpush.msra.mxu0 0.0
        %1622 = vmatpush.msra.mxu0 0.0
        %1623 = vmatpush.msra.mxu0 0.0
        %1624 = vmatpush.msra.mxu0 0.0
        %1625 = vmatpush.msra.mxu0 0.0
        %1626 = vmatpush.msra.mxu0 0.0
        %1627 = vmatpush.msra.mxu0 0.0
        %1628 = vmatpush.msra.mxu0 0.0
        %1629 = vmatpush.msra.mxu0 0.0
        %1630 = vmatpush.msra.mxu0 0.0
        %1631 = vmatpush.msra.mxu0 %v1560
        %1632 = vmatpush.msra.mxu0 %v1526
        %1633 = vmatpush.msra.mxu0 %v1517
        %1634 = vmatpush.msra.mxu0 %v1508
        %1635 = vmatpush.msra.mxu0 %v1499
        %1636 = vmatmul.f32.gmra.mxu0 %v1550
        %v1637 = vpop.f32.mrf.mxu0
        %v1638 = vadd.f32 %v1546, %v1637
        %1639 = vdwg.mxu0
        %1640 = vmatpush.msra.mxu0 0.0
        %1641 = vmatpush.msra.mxu0 0.0
        %1642 = vmatpush.msra.mxu0 0.0
        %1643 = vmatpush.msra.mxu0 0.0
        %1644 = vmatpush.msra.mxu0 0.0
        %1645 = vmatpush.msra.mxu0 0.0
        %1646 = vmatpush.msra.mxu0 0.0
        %1647 = vmatpush.msra.mxu0 0.0
        %1648 = vmatpush.msra.mxu0 0.0
        %1649 = vmatpush.msra.mxu0 0.0
        %1650 = vmatpush.msra.mxu0 0.0
        %1651 = vmatpush.msra.mxu0 %v1563
        %1652 = vmatpush.msra.mxu0 %v1527
        %1653 = vmatpush.msra.mxu0 %v1518
        %1654 = vmatpush.msra.mxu0 %v1509
        %1655 = vmatpush.msra.mxu0 %v1500
        %1656 = vmatmul.f32.gmra.mxu0 %v1550
        %v1657 = vpop.f32.mrf.mxu0
        %v1658 = vadd.f32 %v1546, %v1657
        %1659 = vdwg.mxu0
        %1660 = vmatpush.msra.mxu0 0.0
        %1661 = vmatpush.msra.mxu0 0.0
        %1662 = vmatpush.msra.mxu0 0.0
        %1663 = vmatpush.msra.mxu0 0.0
        %1664 = vmatpush.msra.mxu0 0.0
        %1665 = vmatpush.msra.mxu0 0.0
        %1666 = vmatpush.msra.mxu0 0.0
        %1667 = vmatpush.msra.mxu0 0.0
        %1668 = vmatpush.msra.mxu0 0.0
        %1669 = vmatpush.msra.mxu0 0.0
        %1670 = vmatpush.msra.mxu0 0.0
        %1671 = vmatpush.msra.mxu0 %v1566
        %1672 = vmatpush.msra.mxu0 %v1528
        %1673 = vmatpush.msra.mxu0 %v1519
        %1674 = vmatpush.msra.mxu0 %v1510
        %1675 = vmatpush.msra.mxu0 %v1501
        %1676 = vmatmul.f32.gmra.mxu0 %v1550
        %v1677 = vpop.f32.mrf.mxu0
        %v1678 = vadd.f32 %v1546, %v1677
        %1679 = vdwg.mxu0
        %1680 = vmatpush.msra.mxu0 0.0
        %1681 = vmatpush.msra.mxu0 0.0
        %1682 = vmatpush.msra.mxu0 0.0
        %1683 = vmatpush.msra.mxu0 0.0
        %1684 = vmatpush.msra.mxu0 0.0
        %1685 = vmatpush.msra.mxu0 0.0
        %1686 = vmatpush.msra.mxu0 0.0
        %1687 = vmatpush.msra.mxu0 0.0
        %1688 = vmatpush.msra.mxu0 0.0
        %1689 = vmatpush.msra.mxu0 0.0
        %1690 = vmatpush.msra.mxu0 0.0
        %1691 = vmatpush.msra.mxu0 %v1569
        %1692 = vmatpush.msra.mxu0 %v1529
        %1693 = vmatpush.msra.mxu0 %v1520
        %1694 = vmatpush.msra.mxu0 %v1511
        %1695 = vmatpush.msra.mxu0 %v1502
        %1696 = vmatmul.f32.gmra.mxu0 %v1550
        %v1697 = vpop.f32.mrf.mxu0
        %v1698 = vadd.f32 %v1546, %v1697
        %1699 = vdwg.mxu0
        %1700 = vmatpush.msra.mxu0 0.0
        %1701 = vmatpush.msra.mxu0 0.0
        %1702 = vmatpush.msra.mxu0 0.0
        %1703 = vmatpush.msra.mxu0 0.0
        %1704 = vmatpush.msra.mxu0 0.0
        %1705 = vmatpush.msra.mxu0 0.0
        %1706 = vmatpush.msra.mxu0 0.0
        %1707 = vmatpush.msra.mxu0 0.0
        %1708 = vmatpush.msra.mxu0 0.0
        %1709 = vmatpush.msra.mxu0 0.0
        %1710 = vmatpush.msra.mxu0 0.0
        %1711 = vmatpush.msra.mxu0 %v1572
        %1712 = vmatpush.msra.mxu0 %v1530
        %1713 = vmatpush.msra.mxu0 %v1521
        %1714 = vmatpush.msra.mxu0 %v1512
        %1715 = vmatpush.msra.mxu0 %v1503
        %1716 = vmatmul.f32.gmra.mxu0 %v1550
        %v1717 = vpop.f32.mrf.mxu0
        %v1718 = vadd.f32 %v1546, %v1717
        %1719 = vdwg.mxu0
        %1720 = vmatpush.msra.mxu0 0.0
        %1721 = vmatpush.msra.mxu0 0.0
        %1722 = vmatpush.msra.mxu0 0.0
        %1723 = vmatpush.msra.mxu0 0.0
        %1724 = vmatpush.msra.mxu0 0.0
        %1725 = vmatpush.msra.mxu0 0.0
        %1726 = vmatpush.msra.mxu0 0.0
        %1727 = vmatpush.msra.mxu0 0.0
        %1728 = vmatpush.msra.mxu0 0.0
        %1729 = vmatpush.msra.mxu0 0.0
        %1730 = vmatpush.msra.mxu0 0.0
        %1731 = vmatpush.msra.mxu0 %v1575
        %1732 = vmatpush.msra.mxu0 %v1531
        %1733 = vmatpush.msra.mxu0 %v1522
        %1734 = vmatpush.msra.mxu0 %v1513
        %1735 = vmatpush.msra.mxu0 %v1504
        %1736 = vmatmul.f32.gmra.mxu0 %v1550
        %v1737 = vpop.f32.mrf.mxu0
        %v1738 = vadd.f32 %v1546, %v1737
        %1739 = vdwg.mxu0
        %1740 = vmatpush.msra.mxu0 0.0
        %1741 = vmatpush.msra.mxu0 0.0
        %1742 = vmatpush.msra.mxu0 0.0
        %1743 = vmatpush.msra.mxu0 0.0
        %1744 = vmatpush.msra.mxu0 0.0
        %1745 = vmatpush.msra.mxu0 0.0
        %1746 = vmatpush.msra.mxu0 0.0
        %1747 = vmatpush.msra.mxu0 0.0
        %1748 = vmatpush.msra.mxu0 0.0
        %1749 = vmatpush.msra.mxu0 0.0
        %1750 = vmatpush.msra.mxu0 0.0
        %1751 = vmatpush.msra.mxu0 %v1578
        %1752 = vmatpush.msra.mxu0 %v1532
        %1753 = vmatpush.msra.mxu0 %v1523
        %1754 = vmatpush.msra.mxu0 %v1514
        %1755 = vmatpush.msra.mxu0 %v1505
        %1756 = vmatmul.f32.gmra.mxu0 %v1550
        %v1757 = vpop.f32.mrf.mxu0
        %v1758 = vadd.f32 %v1546, %v1757
        %1759 = vdwg.mxu0
        %v1761 = vrot.slane %v1598, 1
        %v1762 = vrot.slane %v1598, 2
        %v1763 = vrot.slane %v1598, 3
        %v1764 = vrot.slane %v1598, 4
        %v1765 = vrot.slane %v1598, 5
        %v1766 = vrot.slane %v1598, 6
        %v1767 = vrot.slane %v1598, 7
        %vm1775 = vcmask 253952
        %1776 = vst.msk [vmem:[%s190] sm:$0x1] %vm1775, %v1598
        %1777 = vst.msk [vmem:[%s190 + $0x20] sm:$0x1] %vm1775, %v1761
        %1778 = vst.msk [vmem:[%s190 + $0x40] sm:$0x1] %vm1775, %v1762
        %1779 = vst.msk [vmem:[%s190 + $0x60] sm:$0x1] %vm1775, %v1763
        %1780 = vst.msk [vmem:[%s190 + $0x80] sm:$0x1] %vm1775, %v1764
        %1781 = vst.msk [vmem:[%s190 + $0xa0] sm:$0x1] %vm1775, %v1765
        %1782 = vst.msk [vmem:[%s190 + $0xc0] sm:$0x1] %vm1775, %v1766
        %1783 = vst.msk [vmem:[%s190 + $0xe0] sm:$0x1] %vm1775, %v1767
        %v1784 = vperm.slane %v1598, 0
        %v1785 = vperm.slane %v1761, 0
        %v1786 = vperm.slane %v1762, 0
        %v1787 = vperm.slane %v1763, 0
        %v1788 = vperm.slane %v1764, 0
        %v1789 = vperm.slane %v1765, 0
        %v1790 = vperm.slane %v1766, 0
        %v1791 = vperm.slane %v1767, 0
        %1792 = vrot.lane.b32.xlu0 %v1784, 94
        %v1793 = vpop.permute.xlu0 %1792
        %1794 = vrot.lane.b32.xlu0 %v1785, 94
        %v1795 = vpop.permute.xlu0 %1794
        %1796 = vrot.lane.b32.xlu0 %v1786, 94
        %v1797 = vpop.permute.xlu0 %1796
        %1798 = vrot.lane.b32.xlu0 %v1787, 94
        %v1799 = vpop.permute.xlu0 %1798
        %1800 = vrot.lane.b32.xlu0 %v1788, 94
        %v1801 = vpop.permute.xlu0 %1800
        %1802 = vrot.lane.b32.xlu0 %v1789, 94
        %v1803 = vpop.permute.xlu0 %1802
        %1804 = vrot.lane.b32.xlu0 %v1790, 94
        %v1805 = vpop.permute.xlu0 %1804
        %1806 = vrot.lane.b32.xlu0 %v1791, 94
        %v1807 = vpop.permute.xlu0 %1806
        %1816 = vst.msk [vmem:[%s190 + $0x1] sm:$0x1] %vm1775, %v1793
        %1817 = vst.msk [vmem:[%s190 + $0x21] sm:$0x1] %vm1775, %v1795
        %1818 = vst.msk [vmem:[%s190 + $0x41] sm:$0x1] %vm1775, %v1797
        %1819 = vst.msk [vmem:[%s190 + $0x61] sm:$0x1] %vm1775, %v1799
        %1820 = vst.msk [vmem:[%s190 + $0x81] sm:$0x1] %vm1775, %v1801
        %1821 = vst.msk [vmem:[%s190 + $0xa1] sm:$0x1] %vm1775, %v1803
        %1822 = vst.msk [vmem:[%s190 + $0xc1] sm:$0x1] %vm1775, %v1805
        %1823 = vst.msk [vmem:[%s190 + $0xe1] sm:$0x1] %vm1775, %v1807
        %1824 = vrot.lane.b32.xlu0 %v1784, 60
        %v1825 = vpop.permute.xlu0 %1824
        %1826 = vrot.lane.b32.xlu0 %v1785, 60
        %v1827 = vpop.permute.xlu0 %1826
        %1828 = vrot.lane.b32.xlu0 %v1786, 60
        %v1829 = vpop.permute.xlu0 %1828
        %1830 = vrot.lane.b32.xlu0 %v1787, 60
        %v1831 = vpop.permute.xlu0 %1830
        %1832 = vrot.lane.b32.xlu0 %v1788, 60
        %v1833 = vpop.permute.xlu0 %1832
        %1834 = vrot.lane.b32.xlu0 %v1789, 60
        %v1835 = vpop.permute.xlu0 %1834
        %1836 = vrot.lane.b32.xlu0 %v1790, 60
        %v1837 = vpop.permute.xlu0 %1836
        %1838 = vrot.lane.b32.xlu0 %v1791, 60
        %v1839 = vpop.permute.xlu0 %1838
        %1848 = vst.msk [vmem:[%s190 + $0x2] sm:$0x1] %vm1775, %v1825
        %1849 = vst.msk [vmem:[%s190 + $0x22] sm:$0x1] %vm1775, %v1827
        %1850 = vst.msk [vmem:[%s190 + $0x42] sm:$0x1] %vm1775, %v1829
        %1851 = vst.msk [vmem:[%s190 + $0x62] sm:$0x1] %vm1775, %v1831
        %1852 = vst.msk [vmem:[%s190 + $0x82] sm:$0x1] %vm1775, %v1833
        %1853 = vst.msk [vmem:[%s190 + $0xa2] sm:$0x1] %vm1775, %v1835
        %1854 = vst.msk [vmem:[%s190 + $0xc2] sm:$0x1] %vm1775, %v1837
        %1855 = vst.msk [vmem:[%s190 + $0xe2] sm:$0x1] %vm1775, %v1839
        %v1857 = vrot.slane %v1618, 7
        %vm1858 = vcmask 1040384
        %v1859 = vsel %vm1858, %v1598, %v1857
        %v1860 = vsel %vm205, %v1598, %v1857
        %v1861 = vrot.slane %v1860, 1
        %v1862 = vsel %vm210, %v1598, %v1857
        %v1863 = vrot.slane %v1862, 2
        %v1864 = vsel %vm215, %v1598, %v1857
        %v1865 = vrot.slane %v1864, 3
        %v1866 = vsel %vm203, %v1598, %v1857
        %v1867 = vrot.slane %v1866, 4
        %v1868 = vsel %vm207, %v1598, %v1857
        %v1869 = vrot.slane %v1868, 5
        %v1870 = vsel %vm212, %v1598, %v1857
        %v1871 = vrot.slane %v1870, 6
        %vm1872 = vcmask 1046528
        %v1873 = vsel %vm1872, %v1857, %v1598
        %v1874 = vrot.slane %v1873, 7
        %v1875 = vperm.slane %v1859, 0
        %v1876 = vperm.slane %v1859, 1
        %v1877 = vperm.slane %v1861, 0
        %v1878 = vperm.slane %v1861, 1
        %v1879 = vperm.slane %v1863, 0
        %v1880 = vperm.slane %v1863, 1
        %v1881 = vperm.slane %v1865, 0
        %v1882 = vperm.slane %v1865, 1
        %v1883 = vperm.slane %v1867, 0
        %v1884 = vperm.slane %v1867, 1
        %v1885 = vperm.slane %v1869, 0
        %v1886 = vperm.slane %v1869, 1
        %v1887 = vperm.slane %v1871, 0
        %v1888 = vperm.slane %v1871, 1
        %v1889 = vperm.slane %v1874, 0
        %v1890 = vperm.slane %v1874, 1
        %1891 = vrot.lane.b32.xlu0 %v1875, 26
        %v1892 = vpop.permute.xlu0 %1891
        %1893 = vrot.lane.b32.xlu0 %v1876, 26
        %v1894 = vpop.permute.xlu0 %1893
        %1895 = vrot.lane.b32.xlu0 %v1877, 26
        %v1896 = vpop.permute.xlu0 %1895
        %1897 = vrot.lane.b32.xlu0 %v1878, 26
        %v1898 = vpop.permute.xlu0 %1897
        %1899 = vrot.lane.b32.xlu0 %v1879, 26
        %v1900 = vpop.permute.xlu0 %1899
        %1901 = vrot.lane.b32.xlu0 %v1880, 26
        %v1902 = vpop.permute.xlu0 %1901
        %1903 = vrot.lane.b32.xlu0 %v1881, 26
        %v1904 = vpop.permute.xlu0 %1903
        %1905 = vrot.lane.b32.xlu0 %v1882, 26
        %v1906 = vpop.permute.xlu0 %1905
        %1907 = vrot.lane.b32.xlu0 %v1883, 26
        %v1908 = vpop.permute.xlu0 %1907
        %1909 = vrot.lane.b32.xlu0 %v1884, 26
        %v1910 = vpop.permute.xlu0 %1909
        %1911 = vrot.lane.b32.xlu0 %v1885, 26
        %v1912 = vpop.permute.xlu0 %1911
        %1913 = vrot.lane.b32.xlu0 %v1886, 26
        %v1914 = vpop.permute.xlu0 %1913
        %1915 = vrot.lane.b32.xlu0 %v1887, 26
        %v1916 = vpop.permute.xlu0 %1915
        %1917 = vrot.lane.b32.xlu0 %v1888, 26
        %v1918 = vpop.permute.xlu0 %1917
        %1919 = vrot.lane.b32.xlu0 %v1889, 26
        %v1920 = vpop.permute.xlu0 %1919
        %1921 = vrot.lane.b32.xlu0 %v1890, 26
        %v1922 = vpop.permute.xlu0 %1921
        %vm1923 = vcmask 211968
        %v1924 = vsel %vm1923, %v1892, %v1894
        %v1925 = vsel %vm1923, %v1896, %v1898
        %v1926 = vsel %vm1923, %v1900, %v1902
        %v1927 = vsel %vm1923, %v1904, %v1906
        %v1928 = vsel %vm1923, %v1908, %v1910
        %v1929 = vsel %vm1923, %v1912, %v1914
        %v1930 = vsel %vm1923, %v1916, %v1918
        %v1931 = vsel %vm1923, %v1920, %v1922
        %1940 = vst.msk [vmem:[%s190 + $0x3] sm:$0x1] %vm1775, %v1924
        %1941 = vst.msk [vmem:[%s190 + $0x23] sm:$0x1] %vm1775, %v1925
        %1942 = vst.msk [vmem:[%s190 + $0x43] sm:$0x1] %vm1775, %v1926
        %1943 = vst.msk [vmem:[%s190 + $0x63] sm:$0x1] %vm1775, %v1927
        %1944 = vst.msk [vmem:[%s190 + $0x83] sm:$0x1] %vm1775, %v1928
        %1945 = vst.msk [vmem:[%s190 + $0xa3] sm:$0x1] %vm1775, %v1929
        %1946 = vst.msk [vmem:[%s190 + $0xc3] sm:$0x1] %vm1775, %v1930
        %1947 = vst.msk [vmem:[%s190 + $0xe3] sm:$0x1] %vm1775, %v1931
        %v1948 = vrot.slane %v1618, 1
        %v1949 = vrot.slane %v1618, 2
        %v1950 = vrot.slane %v1618, 3
        %v1951 = vrot.slane %v1618, 4
        %v1952 = vrot.slane %v1618, 5
        %v1953 = vrot.slane %v1618, 6
        %v1954 = vperm.slane %v1618, 0
        %v1955 = vperm.slane %v1948, 0
        %v1956 = vperm.slane %v1949, 0
        %v1957 = vperm.slane %v1950, 0
        %v1958 = vperm.slane %v1951, 0
        %v1959 = vperm.slane %v1952, 0
        %v1960 = vperm.slane %v1953, 0
        %v1961 = vperm.slane %v1857, 0
        %1962 = vrot.lane.b32.xlu0 %v1954, 120
        %v1963 = vpop.permute.xlu0 %1962
        %1964 = vrot.lane.b32.xlu0 %v1955, 120
        %v1965 = vpop.permute.xlu0 %1964
        %1966 = vrot.lane.b32.xlu0 %v1956, 120
        %v1967 = vpop.permute.xlu0 %1966
        %1968 = vrot.lane.b32.xlu0 %v1957, 120
        %v1969 = vpop.permute.xlu0 %1968
        %1970 = vrot.lane.b32.xlu0 %v1958, 120
        %v1971 = vpop.permute.xlu0 %1970
        %1972 = vrot.lane.b32.xlu0 %v1959, 120
        %v1973 = vpop.permute.xlu0 %1972
        %1974 = vrot.lane.b32.xlu0 %v1960, 120
        %v1975 = vpop.permute.xlu0 %1974
        %1976 = vrot.lane.b32.xlu0 %v1961, 120
        %v1977 = vpop.permute.xlu0 %1976
        %1986 = vst.msk [vmem:[%s190 + $0x4] sm:$0x1] %vm1775, %v1963
        %1987 = vst.msk [vmem:[%s190 + $0x24] sm:$0x1] %vm1775, %v1965
        %1988 = vst.msk [vmem:[%s190 + $0x44] sm:$0x1] %vm1775, %v1967
        %1989 = vst.msk [vmem:[%s190 + $0x64] sm:$0x1] %vm1775, %v1969
        %1990 = vst.msk [vmem:[%s190 + $0x84] sm:$0x1] %vm1775, %v1971
        %1991 = vst.msk [vmem:[%s190 + $0xa4] sm:$0x1] %vm1775, %v1973
        %1992 = vst.msk [vmem:[%s190 + $0xc4] sm:$0x1] %vm1775, %v1975
        %1993 = vst.msk [vmem:[%s190 + $0xe4] sm:$0x1] %vm1775, %v1977
        %1994 = vrot.lane.b32.xlu0 %v1954, 86
        %v1995 = vpop.permute.xlu0 %1994
        %1996 = vrot.lane.b32.xlu0 %v1955, 86
        %v1997 = vpop.permute.xlu0 %1996
        %1998 = vrot.lane.b32.xlu0 %v1956, 86
        %v1999 = vpop.permute.xlu0 %1998
        %2000 = vrot.lane.b32.xlu0 %v1957, 86
        %v2001 = vpop.permute.xlu0 %2000
        %2002 = vrot.lane.b32.xlu0 %v1958, 86
        %v2003 = vpop.permute.xlu0 %2002
        %2004 = vrot.lane.b32.xlu0 %v1959, 86
        %v2005 = vpop.permute.xlu0 %2004
        %2006 = vrot.lane.b32.xlu0 %v1960, 86
        %v2007 = vpop.permute.xlu0 %2006
        %2008 = vrot.lane.b32.xlu0 %v1961, 86
        %v2009 = vpop.permute.xlu0 %2008
        %2018 = vst.msk [vmem:[%s190 + $0x5] sm:$0x1] %vm1775, %v1995
        %2019 = vst.msk [vmem:[%s190 + $0x25] sm:$0x1] %vm1775, %v1997
        %2020 = vst.msk [vmem:[%s190 + $0x45] sm:$0x1] %vm1775, %v1999
        %2021 = vst.msk [vmem:[%s190 + $0x65] sm:$0x1] %vm1775, %v2001
        %2022 = vst.msk [vmem:[%s190 + $0x85] sm:$0x1] %vm1775, %v2003
        %2023 = vst.msk [vmem:[%s190 + $0xa5] sm:$0x1] %vm1775, %v2005
        %2024 = vst.msk [vmem:[%s190 + $0xc5] sm:$0x1] %vm1775, %v2007
        %2025 = vst.msk [vmem:[%s190 + $0xe5] sm:$0x1] %vm1775, %v2009
        %2026 = vrot.lane.b32.xlu0 %v1954, 52
        %v2027 = vpop.permute.xlu0 %2026
        %2028 = vrot.lane.b32.xlu0 %v1955, 52
        %v2029 = vpop.permute.xlu0 %2028
        %2030 = vrot.lane.b32.xlu0 %v1956, 52
        %v2031 = vpop.permute.xlu0 %2030
        %2032 = vrot.lane.b32.xlu0 %v1957, 52
        %v2033 = vpop.permute.xlu0 %2032
        %2034 = vrot.lane.b32.xlu0 %v1958, 52
        %v2035 = vpop.permute.xlu0 %2034
        %2036 = vrot.lane.b32.xlu0 %v1959, 52
        %v2037 = vpop.permute.xlu0 %2036
        %2038 = vrot.lane.b32.xlu0 %v1960, 52
        %v2039 = vpop.permute.xlu0 %2038
        %2040 = vrot.lane.b32.xlu0 %v1961, 52
        %v2041 = vpop.permute.xlu0 %2040
        %2050 = vst.msk [vmem:[%s190 + $0x6] sm:$0x1] %vm1775, %v2027
        %2051 = vst.msk [vmem:[%s190 + $0x26] sm:$0x1] %vm1775, %v2029
        %2052 = vst.msk [vmem:[%s190 + $0x46] sm:$0x1] %vm1775, %v2031
        %2053 = vst.msk [vmem:[%s190 + $0x66] sm:$0x1] %vm1775, %v2033
        %2054 = vst.msk [vmem:[%s190 + $0x86] sm:$0x1] %vm1775, %v2035
        %2055 = vst.msk [vmem:[%s190 + $0xa6] sm:$0x1] %vm1775, %v2037
        %2056 = vst.msk [vmem:[%s190 + $0xc6] sm:$0x1] %vm1775, %v2039
        %2057 = vst.msk [vmem:[%s190 + $0xe6] sm:$0x1] %vm1775, %v2041
        %v2059 = vrot.slane %v1638, 7
        %v2060 = vsel %vm1858, %v1618, %v2059
        %v2061 = vsel %vm205, %v1618, %v2059
        %v2062 = vrot.slane %v2061, 1
        %v2063 = vsel %vm210, %v1618, %v2059
        %v2064 = vrot.slane %v2063, 2
        %v2065 = vsel %vm215, %v1618, %v2059
        %v2066 = vrot.slane %v2065, 3
        %v2067 = vsel %vm203, %v1618, %v2059
        %v2068 = vrot.slane %v2067, 4
        %v2069 = vsel %vm207, %v1618, %v2059
        %v2070 = vrot.slane %v2069, 5
        %v2071 = vsel %vm212, %v1618, %v2059
        %v2072 = vrot.slane %v2071, 6
        %v2073 = vsel %vm1872, %v2059, %v1618
        %v2074 = vrot.slane %v2073, 7
        %v2075 = vperm.slane %v2060, 0
        %v2076 = vperm.slane %v2060, 1
        %v2077 = vperm.slane %v2062, 0
        %v2078 = vperm.slane %v2062, 1
        %v2079 = vperm.slane %v2064, 0
        %v2080 = vperm.slane %v2064, 1
        %v2081 = vperm.slane %v2066, 0
        %v2082 = vperm.slane %v2066, 1
        %v2083 = vperm.slane %v2068, 0
        %v2084 = vperm.slane %v2068, 1
        %v2085 = vperm.slane %v2070, 0
        %v2086 = vperm.slane %v2070, 1
        %v2087 = vperm.slane %v2072, 0
        %v2088 = vperm.slane %v2072, 1
        %v2089 = vperm.slane %v2074, 0
        %v2090 = vperm.slane %v2074, 1
        %2091 = vrot.lane.b32.xlu0 %v2075, 18
        %v2092 = vpop.permute.xlu0 %2091
        %2093 = vrot.lane.b32.xlu0 %v2076, 18
        %v2094 = vpop.permute.xlu0 %2093
        %2095 = vrot.lane.b32.xlu0 %v2077, 18
        %v2096 = vpop.permute.xlu0 %2095
        %2097 = vrot.lane.b32.xlu0 %v2078, 18
        %v2098 = vpop.permute.xlu0 %2097
        %2099 = vrot.lane.b32.xlu0 %v2079, 18
        %v2100 = vpop.permute.xlu0 %2099
        %2101 = vrot.lane.b32.xlu0 %v2080, 18
        %v2102 = vpop.permute.xlu0 %2101
        %2103 = vrot.lane.b32.xlu0 %v2081, 18
        %v2104 = vpop.permute.xlu0 %2103
        %2105 = vrot.lane.b32.xlu0 %v2082, 18
        %v2106 = vpop.permute.xlu0 %2105
        %2107 = vrot.lane.b32.xlu0 %v2083, 18
        %v2108 = vpop.permute.xlu0 %2107
        %2109 = vrot.lane.b32.xlu0 %v2084, 18
        %v2110 = vpop.permute.xlu0 %2109
        %2111 = vrot.lane.b32.xlu0 %v2085, 18
        %v2112 = vpop.permute.xlu0 %2111
        %2113 = vrot.lane.b32.xlu0 %v2086, 18
        %v2114 = vpop.permute.xlu0 %2113
        %2115 = vrot.lane.b32.xlu0 %v2087, 18
        %v2116 = vpop.permute.xlu0 %2115
        %2117 = vrot.lane.b32.xlu0 %v2088, 18
        %v2118 = vpop.permute.xlu0 %2117
        %2119 = vrot.lane.b32.xlu0 %v2089, 18
        %v2120 = vpop.permute.xlu0 %2119
        %2121 = vrot.lane.b32.xlu0 %v2090, 18
        %v2122 = vpop.permute.xlu0 %2121
        %vm2123 = vcmask 146432
        %v2124 = vsel %vm2123, %v2092, %v2094
        %v2125 = vsel %vm2123, %v2096, %v2098
        %v2126 = vsel %vm2123, %v2100, %v2102
        %v2127 = vsel %vm2123, %v2104, %v2106
        %v2128 = vsel %vm2123, %v2108, %v2110
        %v2129 = vsel %vm2123, %v2112, %v2114
        %v2130 = vsel %vm2123, %v2116, %v2118
        %v2131 = vsel %vm2123, %v2120, %v2122
        %2140 = vst.msk [vmem:[%s190 + $0x7] sm:$0x1] %vm1775, %v2124
        %2141 = vst.msk [vmem:[%s190 + $0x27] sm:$0x1] %vm1775, %v2125
        %2142 = vst.msk [vmem:[%s190 + $0x47] sm:$0x1] %vm1775, %v2126
        %2143 = vst.msk [vmem:[%s190 + $0x67] sm:$0x1] %vm1775, %v2127
        %2144 = vst.msk [vmem:[%s190 + $0x87] sm:$0x1] %vm1775, %v2128
        %2145 = vst.msk [vmem:[%s190 + $0xa7] sm:$0x1] %vm1775, %v2129
        %2146 = vst.msk [vmem:[%s190 + $0xc7] sm:$0x1] %vm1775, %v2130
        %2147 = vst.msk [vmem:[%s190 + $0xe7] sm:$0x1] %vm1775, %v2131
        %v2148 = vrot.slane %v1638, 1
        %v2149 = vrot.slane %v1638, 2
        %v2150 = vrot.slane %v1638, 3
        %v2151 = vrot.slane %v1638, 4
        %v2152 = vrot.slane %v1638, 5
        %v2153 = vrot.slane %v1638, 6
        %v2154 = vperm.slane %v1638, 0
        %v2155 = vperm.slane %v2148, 0
        %v2156 = vperm.slane %v2149, 0
        %v2157 = vperm.slane %v2150, 0
        %v2158 = vperm.slane %v2151, 0
        %v2159 = vperm.slane %v2152, 0
        %v2160 = vperm.slane %v2153, 0
        %v2161 = vperm.slane %v2059, 0
        %2162 = vrot.lane.b32.xlu0 %v2154, 112
        %v2163 = vpop.permute.xlu0 %2162
        %2164 = vrot.lane.b32.xlu0 %v2155, 112
        %v2165 = vpop.permute.xlu0 %2164
        %2166 = vrot.lane.b32.xlu0 %v2156, 112
        %v2167 = vpop.permute.xlu0 %2166
        %2168 = vrot.lane.b32.xlu0 %v2157, 112
        %v2169 = vpop.permute.xlu0 %2168
        %2170 = vrot.lane.b32.xlu0 %v2158, 112
        %v2171 = vpop.permute.xlu0 %2170
        %2172 = vrot.lane.b32.xlu0 %v2159, 112
        %v2173 = vpop.permute.xlu0 %2172
        %2174 = vrot.lane.b32.xlu0 %v2160, 112
        %v2175 = vpop.permute.xlu0 %2174
        %2176 = vrot.lane.b32.xlu0 %v2161, 112
        %v2177 = vpop.permute.xlu0 %2176
        %2186 = vst.msk [vmem:[%s190 + $0x8] sm:$0x1] %vm1775, %v2163
        %2187 = vst.msk [vmem:[%s190 + $0x28] sm:$0x1] %vm1775, %v2165
        %2188 = vst.msk [vmem:[%s190 + $0x48] sm:$0x1] %vm1775, %v2167
        %2189 = vst.msk [vmem:[%s190 + $0x68] sm:$0x1] %vm1775, %v2169
        %2190 = vst.msk [vmem:[%s190 + $0x88] sm:$0x1] %vm1775, %v2171
        %2191 = vst.msk [vmem:[%s190 + $0xa8] sm:$0x1] %vm1775, %v2173
        %2192 = vst.msk [vmem:[%s190 + $0xc8] sm:$0x1] %vm1775, %v2175
        %2193 = vst.msk [vmem:[%s190 + $0xe8] sm:$0x1] %vm1775, %v2177
        %2194 = vrot.lane.b32.xlu0 %v2154, 78
        %v2195 = vpop.permute.xlu0 %2194
        %2196 = vrot.lane.b32.xlu0 %v2155, 78
        %v2197 = vpop.permute.xlu0 %2196
        %2198 = vrot.lane.b32.xlu0 %v2156, 78
        %v2199 = vpop.permute.xlu0 %2198
        %2200 = vrot.lane.b32.xlu0 %v2157, 78
        %v2201 = vpop.permute.xlu0 %2200
        %2202 = vrot.lane.b32.xlu0 %v2158, 78
        %v2203 = vpop.permute.xlu0 %2202
        %2204 = vrot.lane.b32.xlu0 %v2159, 78
        %v2205 = vpop.permute.xlu0 %2204
        %2206 = vrot.lane.b32.xlu0 %v2160, 78
        %v2207 = vpop.permute.xlu0 %2206
        %2208 = vrot.lane.b32.xlu0 %v2161, 78
        %v2209 = vpop.permute.xlu0 %2208
        %2218 = vst.msk [vmem:[%s190 + $0x9] sm:$0x1] %vm1775, %v2195
        %2219 = vst.msk [vmem:[%s190 + $0x29] sm:$0x1] %vm1775, %v2197
        %2220 = vst.msk [vmem:[%s190 + $0x49] sm:$0x1] %vm1775, %v2199
        %2221 = vst.msk [vmem:[%s190 + $0x69] sm:$0x1] %vm1775, %v2201
        %2222 = vst.msk [vmem:[%s190 + $0x89] sm:$0x1] %vm1775, %v2203
        %2223 = vst.msk [vmem:[%s190 + $0xa9] sm:$0x1] %vm1775, %v2205
        %2224 = vst.msk [vmem:[%s190 + $0xc9] sm:$0x1] %vm1775, %v2207
        %2225 = vst.msk [vmem:[%s190 + $0xe9] sm:$0x1] %vm1775, %v2209
        %2226 = vrot.lane.b32.xlu0 %v2154, 44
        %v2227 = vpop.permute.xlu0 %2226
        %2228 = vrot.lane.b32.xlu0 %v2155, 44
        %v2229 = vpop.permute.xlu0 %2228
        %2230 = vrot.lane.b32.xlu0 %v2156, 44
        %v2231 = vpop.permute.xlu0 %2230
        %2232 = vrot.lane.b32.xlu0 %v2157, 44
        %v2233 = vpop.permute.xlu0 %2232
        %2234 = vrot.lane.b32.xlu0 %v2158, 44
        %v2235 = vpop.permute.xlu0 %2234
        %2236 = vrot.lane.b32.xlu0 %v2159, 44
        %v2237 = vpop.permute.xlu0 %2236
        %2238 = vrot.lane.b32.xlu0 %v2160, 44
        %v2239 = vpop.permute.xlu0 %2238
        %2240 = vrot.lane.b32.xlu0 %v2161, 44
        %v2241 = vpop.permute.xlu0 %2240
        %2250 = vst.msk [vmem:[%s190 + $0xa] sm:$0x1] %vm1775, %v2227
        %2251 = vst.msk [vmem:[%s190 + $0x2a] sm:$0x1] %vm1775, %v2229
        %2252 = vst.msk [vmem:[%s190 + $0x4a] sm:$0x1] %vm1775, %v2231
        %2253 = vst.msk [vmem:[%s190 + $0x6a] sm:$0x1] %vm1775, %v2233
        %2254 = vst.msk [vmem:[%s190 + $0x8a] sm:$0x1] %vm1775, %v2235
        %2255 = vst.msk [vmem:[%s190 + $0xaa] sm:$0x1] %vm1775, %v2237
        %2256 = vst.msk [vmem:[%s190 + $0xca] sm:$0x1] %vm1775, %v2239
        %2257 = vst.msk [vmem:[%s190 + $0xea] sm:$0x1] %vm1775, %v2241
        %v2259 = vrot.slane %v1658, 7
        %v2260 = vsel %vm1858, %v1638, %v2259
        %v2261 = vsel %vm205, %v1638, %v2259
        %v2262 = vrot.slane %v2261, 1
        %v2263 = vsel %vm210, %v1638, %v2259
        %v2264 = vrot.slane %v2263, 2
        %v2265 = vsel %vm215, %v1638, %v2259
        %v2266 = vrot.slane %v2265, 3
        %v2267 = vsel %vm203, %v1638, %v2259
        %v2268 = vrot.slane %v2267, 4
        %v2269 = vsel %vm207, %v1638, %v2259
        %v2270 = vrot.slane %v2269, 5
        %v2271 = vsel %vm212, %v1638, %v2259
        %v2272 = vrot.slane %v2271, 6
        %v2273 = vsel %vm1872, %v2259, %v1638
        %v2274 = vrot.slane %v2273, 7
        %v2275 = vperm.slane %v2260, 0
        %v2276 = vperm.slane %v2260, 1
        %v2277 = vperm.slane %v2262, 0
        %v2278 = vperm.slane %v2262, 1
        %v2279 = vperm.slane %v2264, 0
        %v2280 = vperm.slane %v2264, 1
        %v2281 = vperm.slane %v2266, 0
        %v2282 = vperm.slane %v2266, 1
        %v2283 = vperm.slane %v2268, 0
        %v2284 = vperm.slane %v2268, 1
        %v2285 = vperm.slane %v2270, 0
        %v2286 = vperm.slane %v2270, 1
        %v2287 = vperm.slane %v2272, 0
        %v2288 = vperm.slane %v2272, 1
        %v2289 = vperm.slane %v2274, 0
        %v2290 = vperm.slane %v2274, 1
        %2291 = vrot.lane.b32.xlu0 %v2275, 10
        %v2292 = vpop.permute.xlu0 %2291
        %2293 = vrot.lane.b32.xlu0 %v2276, 10
        %v2294 = vpop.permute.xlu0 %2293
        %2295 = vrot.lane.b32.xlu0 %v2277, 10
        %v2296 = vpop.permute.xlu0 %2295
        %2297 = vrot.lane.b32.xlu0 %v2278, 10
        %v2298 = vpop.permute.xlu0 %2297
        %2299 = vrot.lane.b32.xlu0 %v2279, 10
        %v2300 = vpop.permute.xlu0 %2299
        %2301 = vrot.lane.b32.xlu0 %v2280, 10
        %v2302 = vpop.permute.xlu0 %2301
        %2303 = vrot.lane.b32.xlu0 %v2281, 10
        %v2304 = vpop.permute.xlu0 %2303
        %2305 = vrot.lane.b32.xlu0 %v2282, 10
        %v2306 = vpop.permute.xlu0 %2305
        %2307 = vrot.lane.b32.xlu0 %v2283, 10
        %v2308 = vpop.permute.xlu0 %2307
        %2309 = vrot.lane.b32.xlu0 %v2284, 10
        %v2310 = vpop.permute.xlu0 %2309
        %2311 = vrot.lane.b32.xlu0 %v2285, 10
        %v2312 = vpop.permute.xlu0 %2311
        %2313 = vrot.lane.b32.xlu0 %v2286, 10
        %v2314 = vpop.permute.xlu0 %2313
        %2315 = vrot.lane.b32.xlu0 %v2287, 10
        %v2316 = vpop.permute.xlu0 %2315
        %2317 = vrot.lane.b32.xlu0 %v2288, 10
        %v2318 = vpop.permute.xlu0 %2317
        %2319 = vrot.lane.b32.xlu0 %v2289, 10
        %v2320 = vpop.permute.xlu0 %2319
        %2321 = vrot.lane.b32.xlu0 %v2290, 10
        %v2322 = vpop.permute.xlu0 %2321
        %vm2323 = vcmask 80896
        %v2324 = vsel %vm2323, %v2292, %v2294
        %v2325 = vsel %vm2323, %v2296, %v2298
        %v2326 = vsel %vm2323, %v2300, %v2302
        %v2327 = vsel %vm2323, %v2304, %v2306
        %v2328 = vsel %vm2323, %v2308, %v2310
        %v2329 = vsel %vm2323, %v2312, %v2314
        %v2330 = vsel %vm2323, %v2316, %v2318
        %v2331 = vsel %vm2323, %v2320, %v2322
        %2340 = vst.msk [vmem:[%s190 + $0xb] sm:$0x1] %vm1775, %v2324
        %2341 = vst.msk [vmem:[%s190 + $0x2b] sm:$0x1] %vm1775, %v2325
        %2342 = vst.msk [vmem:[%s190 + $0x4b] sm:$0x1] %vm1775, %v2326
        %2343 = vst.msk [vmem:[%s190 + $0x6b] sm:$0x1] %vm1775, %v2327
        %2344 = vst.msk [vmem:[%s190 + $0x8b] sm:$0x1] %vm1775, %v2328
        %2345 = vst.msk [vmem:[%s190 + $0xab] sm:$0x1] %vm1775, %v2329
        %2346 = vst.msk [vmem:[%s190 + $0xcb] sm:$0x1] %vm1775, %v2330
        %2347 = vst.msk [vmem:[%s190 + $0xeb] sm:$0x1] %vm1775, %v2331
        %v2348 = vrot.slane %v1658, 1
        %v2349 = vrot.slane %v1658, 2
        %v2350 = vrot.slane %v1658, 3
        %v2351 = vrot.slane %v1658, 4
        %v2352 = vrot.slane %v1658, 5
        %v2353 = vrot.slane %v1658, 6
        %v2354 = vperm.slane %v1658, 0
        %v2355 = vperm.slane %v2348, 0
        %v2356 = vperm.slane %v2349, 0
        %v2357 = vperm.slane %v2350, 0
        %v2358 = vperm.slane %v2351, 0
        %v2359 = vperm.slane %v2352, 0
        %v2360 = vperm.slane %v2353, 0
        %v2361 = vperm.slane %v2259, 0
        %2362 = vrot.lane.b32.xlu0 %v2354, 104
        %v2363 = vpop.permute.xlu0 %2362
        %2364 = vrot.lane.b32.xlu0 %v2355, 104
        %v2365 = vpop.permute.xlu0 %2364
        %2366 = vrot.lane.b32.xlu0 %v2356, 104
        %v2367 = vpop.permute.xlu0 %2366
        %2368 = vrot.lane.b32.xlu0 %v2357, 104
        %v2369 = vpop.permute.xlu0 %2368
        %2370 = vrot.lane.b32.xlu0 %v2358, 104
        %v2371 = vpop.permute.xlu0 %2370
        %2372 = vrot.lane.b32.xlu0 %v2359, 104
        %v2373 = vpop.permute.xlu0 %2372
        %2374 = vrot.lane.b32.xlu0 %v2360, 104
        %v2375 = vpop.permute.xlu0 %2374
        %2376 = vrot.lane.b32.xlu0 %v2361, 104
        %v2377 = vpop.permute.xlu0 %2376
        %2386 = vst.msk [vmem:[%s190 + $0xc] sm:$0x1] %vm1775, %v2363
        %2387 = vst.msk [vmem:[%s190 + $0x2c] sm:$0x1] %vm1775, %v2365
        %2388 = vst.msk [vmem:[%s190 + $0x4c] sm:$0x1] %vm1775, %v2367
        %2389 = vst.msk [vmem:[%s190 + $0x6c] sm:$0x1] %vm1775, %v2369
        %2390 = vst.msk [vmem:[%s190 + $0x8c] sm:$0x1] %vm1775, %v2371
        %2391 = vst.msk [vmem:[%s190 + $0xac] sm:$0x1] %vm1775, %v2373
        %2392 = vst.msk [vmem:[%s190 + $0xcc] sm:$0x1] %vm1775, %v2375
        %2393 = vst.msk [vmem:[%s190 + $0xec] sm:$0x1] %vm1775, %v2377
        %2394 = vrot.lane.b32.xlu0 %v2354, 70
        %v2395 = vpop.permute.xlu0 %2394
        %2396 = vrot.lane.b32.xlu0 %v2355, 70
        %v2397 = vpop.permute.xlu0 %2396
        %2398 = vrot.lane.b32.xlu0 %v2356, 70
        %v2399 = vpop.permute.xlu0 %2398
        %2400 = vrot.lane.b32.xlu0 %v2357, 70
        %v2401 = vpop.permute.xlu0 %2400
        %2402 = vrot.lane.b32.xlu0 %v2358, 70
        %v2403 = vpop.permute.xlu0 %2402
        %2404 = vrot.lane.b32.xlu0 %v2359, 70
        %v2405 = vpop.permute.xlu0 %2404
        %2406 = vrot.lane.b32.xlu0 %v2360, 70
        %v2407 = vpop.permute.xlu0 %2406
        %2408 = vrot.lane.b32.xlu0 %v2361, 70
        %v2409 = vpop.permute.xlu0 %2408
        %2418 = vst.msk [vmem:[%s190 + $0xd] sm:$0x1] %vm1775, %v2395
        %2419 = vst.msk [vmem:[%s190 + $0x2d] sm:$0x1] %vm1775, %v2397
        %2420 = vst.msk [vmem:[%s190 + $0x4d] sm:$0x1] %vm1775, %v2399
        %2421 = vst.msk [vmem:[%s190 + $0x6d] sm:$0x1] %vm1775, %v2401
        %2422 = vst.msk [vmem:[%s190 + $0x8d] sm:$0x1] %vm1775, %v2403
        %2423 = vst.msk [vmem:[%s190 + $0xad] sm:$0x1] %vm1775, %v2405
        %2424 = vst.msk [vmem:[%s190 + $0xcd] sm:$0x1] %vm1775, %v2407
        %2425 = vst.msk [vmem:[%s190 + $0xed] sm:$0x1] %vm1775, %v2409
        %2426 = vrot.lane.b32.xlu0 %v2354, 36
        %v2427 = vpop.permute.xlu0 %2426
        %2428 = vrot.lane.b32.xlu0 %v2355, 36
        %v2429 = vpop.permute.xlu0 %2428
        %2430 = vrot.lane.b32.xlu0 %v2356, 36
        %v2431 = vpop.permute.xlu0 %2430
        %2432 = vrot.lane.b32.xlu0 %v2357, 36
        %v2433 = vpop.permute.xlu0 %2432
        %2434 = vrot.lane.b32.xlu0 %v2358, 36
        %v2435 = vpop.permute.xlu0 %2434
        %2436 = vrot.lane.b32.xlu0 %v2359, 36
        %v2437 = vpop.permute.xlu0 %2436
        %2438 = vrot.lane.b32.xlu0 %v2360, 36
        %v2439 = vpop.permute.xlu0 %2438
        %2440 = vrot.lane.b32.xlu0 %v2361, 36
        %v2441 = vpop.permute.xlu0 %2440
        %2450 = vst.msk [vmem:[%s190 + $0xe] sm:$0x1] %vm1775, %v2427
        %2451 = vst.msk [vmem:[%s190 + $0x2e] sm:$0x1] %vm1775, %v2429
        %2452 = vst.msk [vmem:[%s190 + $0x4e] sm:$0x1] %vm1775, %v2431
        %2453 = vst.msk [vmem:[%s190 + $0x6e] sm:$0x1] %vm1775, %v2433
        %2454 = vst.msk [vmem:[%s190 + $0x8e] sm:$0x1] %vm1775, %v2435
        %2455 = vst.msk [vmem:[%s190 + $0xae] sm:$0x1] %vm1775, %v2437
        %2456 = vst.msk [vmem:[%s190 + $0xce] sm:$0x1] %vm1775, %v2439
        %2457 = vst.msk [vmem:[%s190 + $0xee] sm:$0x1] %vm1775, %v2441
        %v2459 = vrot.slane %v1678, 7
        %v2460 = vsel %vm1858, %v1658, %v2459
        %v2461 = vsel %vm205, %v1658, %v2459
        %v2462 = vrot.slane %v2461, 1
        %v2463 = vsel %vm210, %v1658, %v2459
        %v2464 = vrot.slane %v2463, 2
        %v2465 = vsel %vm215, %v1658, %v2459
        %v2466 = vrot.slane %v2465, 3
        %v2467 = vsel %vm203, %v1658, %v2459
        %v2468 = vrot.slane %v2467, 4
        %v2469 = vsel %vm207, %v1658, %v2459
        %v2470 = vrot.slane %v2469, 5
        %v2471 = vsel %vm212, %v1658, %v2459
        %v2472 = vrot.slane %v2471, 6
        %v2473 = vsel %vm1872, %v2459, %v1658
        %v2474 = vrot.slane %v2473, 7
        %v2475 = vperm.slane %v2460, 0
        %v2476 = vperm.slane %v2460, 1
        %v2477 = vperm.slane %v2462, 0
        %v2478 = vperm.slane %v2462, 1
        %v2479 = vperm.slane %v2464, 0
        %v2480 = vperm.slane %v2464, 1
        %v2481 = vperm.slane %v2466, 0
        %v2482 = vperm.slane %v2466, 1
        %v2483 = vperm.slane %v2468, 0
        %v2484 = vperm.slane %v2468, 1
        %v2485 = vperm.slane %v2470, 0
        %v2486 = vperm.slane %v2470, 1
        %v2487 = vperm.slane %v2472, 0
        %v2488 = vperm.slane %v2472, 1
        %v2489 = vperm.slane %v2474, 0
        %v2490 = vperm.slane %v2474, 1
        %2491 = vrot.lane.b32.xlu0 %v2475, 2
        %v2492 = vpop.permute.xlu0 %2491
        %2493 = vrot.lane.b32.xlu0 %v2476, 2
        %v2494 = vpop.permute.xlu0 %2493
        %2495 = vrot.lane.b32.xlu0 %v2477, 2
        %v2496 = vpop.permute.xlu0 %2495
        %2497 = vrot.lane.b32.xlu0 %v2478, 2
        %v2498 = vpop.permute.xlu0 %2497
        %2499 = vrot.lane.b32.xlu0 %v2479, 2
        %v2500 = vpop.permute.xlu0 %2499
        %2501 = vrot.lane.b32.xlu0 %v2480, 2
        %v2502 = vpop.permute.xlu0 %2501
        %2503 = vrot.lane.b32.xlu0 %v2481, 2
        %v2504 = vpop.permute.xlu0 %2503
        %2505 = vrot.lane.b32.xlu0 %v2482, 2
        %v2506 = vpop.permute.xlu0 %2505
        %2507 = vrot.lane.b32.xlu0 %v2483, 2
        %v2508 = vpop.permute.xlu0 %2507
        %2509 = vrot.lane.b32.xlu0 %v2484, 2
        %v2510 = vpop.permute.xlu0 %2509
        %2511 = vrot.lane.b32.xlu0 %v2485, 2
        %v2512 = vpop.permute.xlu0 %2511
        %2513 = vrot.lane.b32.xlu0 %v2486, 2
        %v2514 = vpop.permute.xlu0 %2513
        %2515 = vrot.lane.b32.xlu0 %v2487, 2
        %v2516 = vpop.permute.xlu0 %2515
        %2517 = vrot.lane.b32.xlu0 %v2488, 2
        %v2518 = vpop.permute.xlu0 %2517
        %2519 = vrot.lane.b32.xlu0 %v2489, 2
        %v2520 = vpop.permute.xlu0 %2519
        %2521 = vrot.lane.b32.xlu0 %v2490, 2
        %v2522 = vpop.permute.xlu0 %2521
        %vm2523 = vcmask 15360
        %v2524 = vsel %vm2523, %v2492, %v2494
        %v2525 = vsel %vm2523, %v2496, %v2498
        %v2526 = vsel %vm2523, %v2500, %v2502
        %v2527 = vsel %vm2523, %v2504, %v2506
        %v2528 = vsel %vm2523, %v2508, %v2510
        %v2529 = vsel %vm2523, %v2512, %v2514
        %v2530 = vsel %vm2523, %v2516, %v2518
        %v2531 = vsel %vm2523, %v2520, %v2522
        %2540 = vst.msk [vmem:[%s190 + $0xf] sm:$0x1] %vm1775, %v2524
        %2541 = vst.msk [vmem:[%s190 + $0x2f] sm:$0x1] %vm1775, %v2525
        %2542 = vst.msk [vmem:[%s190 + $0x4f] sm:$0x1] %vm1775, %v2526
        %2543 = vst.msk [vmem:[%s190 + $0x6f] sm:$0x1] %vm1775, %v2527
        %2544 = vst.msk [vmem:[%s190 + $0x8f] sm:$0x1] %vm1775, %v2528
        %2545 = vst.msk [vmem:[%s190 + $0xaf] sm:$0x1] %vm1775, %v2529
        %2546 = vst.msk [vmem:[%s190 + $0xcf] sm:$0x1] %vm1775, %v2530
        %2547 = vst.msk [vmem:[%s190 + $0xef] sm:$0x1] %vm1775, %v2531
        %v2548 = vrot.slane %v1678, 1
        %v2549 = vrot.slane %v1678, 2
        %v2550 = vrot.slane %v1678, 3
        %v2551 = vrot.slane %v1678, 4
        %v2552 = vrot.slane %v1678, 5
        %v2553 = vrot.slane %v1678, 6
        %v2554 = vperm.slane %v1678, 0
        %v2555 = vperm.slane %v2548, 0
        %v2556 = vperm.slane %v2549, 0
        %v2557 = vperm.slane %v2550, 0
        %v2558 = vperm.slane %v2551, 0
        %v2559 = vperm.slane %v2552, 0
        %v2560 = vperm.slane %v2553, 0
        %v2561 = vperm.slane %v2459, 0
        %2562 = vrot.lane.b32.xlu0 %v2554, 96
        %v2563 = vpop.permute.xlu0 %2562
        %2564 = vrot.lane.b32.xlu0 %v2555, 96
        %v2565 = vpop.permute.xlu0 %2564
        %2566 = vrot.lane.b32.xlu0 %v2556, 96
        %v2567 = vpop.permute.xlu0 %2566
        %2568 = vrot.lane.b32.xlu0 %v2557, 96
        %v2569 = vpop.permute.xlu0 %2568
        %2570 = vrot.lane.b32.xlu0 %v2558, 96
        %v2571 = vpop.permute.xlu0 %2570
        %2572 = vrot.lane.b32.xlu0 %v2559, 96
        %v2573 = vpop.permute.xlu0 %2572
        %2574 = vrot.lane.b32.xlu0 %v2560, 96
        %v2575 = vpop.permute.xlu0 %2574
        %2576 = vrot.lane.b32.xlu0 %v2561, 96
        %v2577 = vpop.permute.xlu0 %2576
        %2586 = vst.msk [vmem:[%s190 + $0x10] sm:$0x1] %vm1775, %v2563
        %2587 = vst.msk [vmem:[%s190 + $0x30] sm:$0x1] %vm1775, %v2565
        %2588 = vst.msk [vmem:[%s190 + $0x50] sm:$0x1] %vm1775, %v2567
        %2589 = vst.msk [vmem:[%s190 + $0x70] sm:$0x1] %vm1775, %v2569
        %2590 = vst.msk [vmem:[%s190 + $0x90] sm:$0x1] %vm1775, %v2571
        %2591 = vst.msk [vmem:[%s190 + $0xb0] sm:$0x1] %vm1775, %v2573
        %2592 = vst.msk [vmem:[%s190 + $0xd0] sm:$0x1] %vm1775, %v2575
        %2593 = vst.msk [vmem:[%s190 + $0xf0] sm:$0x1] %vm1775, %v2577
        %2594 = vrot.lane.b32.xlu0 %v2554, 62
        %v2595 = vpop.permute.xlu0 %2594
        %2596 = vrot.lane.b32.xlu0 %v2555, 62
        %v2597 = vpop.permute.xlu0 %2596
        %2598 = vrot.lane.b32.xlu0 %v2556, 62
        %v2599 = vpop.permute.xlu0 %2598
        %2600 = vrot.lane.b32.xlu0 %v2557, 62
        %v2601 = vpop.permute.xlu0 %2600
        %2602 = vrot.lane.b32.xlu0 %v2558, 62
        %v2603 = vpop.permute.xlu0 %2602
        %2604 = vrot.lane.b32.xlu0 %v2559, 62
        %v2605 = vpop.permute.xlu0 %2604
        %2606 = vrot.lane.b32.xlu0 %v2560, 62
        %v2607 = vpop.permute.xlu0 %2606
        %2608 = vrot.lane.b32.xlu0 %v2561, 62
        %v2609 = vpop.permute.xlu0 %2608
        %2618 = vst.msk [vmem:[%s190 + $0x11] sm:$0x1] %vm1775, %v2595
        %2619 = vst.msk [vmem:[%s190 + $0x31] sm:$0x1] %vm1775, %v2597
        %2620 = vst.msk [vmem:[%s190 + $0x51] sm:$0x1] %vm1775, %v2599
        %2621 = vst.msk [vmem:[%s190 + $0x71] sm:$0x1] %vm1775, %v2601
        %2622 = vst.msk [vmem:[%s190 + $0x91] sm:$0x1] %vm1775, %v2603
        %2623 = vst.msk [vmem:[%s190 + $0xb1] sm:$0x1] %vm1775, %v2605
        %2624 = vst.msk [vmem:[%s190 + $0xd1] sm:$0x1] %vm1775, %v2607
        %2625 = vst.msk [vmem:[%s190 + $0xf1] sm:$0x1] %vm1775, %v2609
        %v2627 = vrot.slane %v1698, 7
        %v2628 = vsel %vm1858, %v1678, %v2627
        %v2629 = vsel %vm205, %v1678, %v2627
        %v2630 = vrot.slane %v2629, 1
        %v2631 = vsel %vm210, %v1678, %v2627
        %v2632 = vrot.slane %v2631, 2
        %v2633 = vsel %vm215, %v1678, %v2627
        %v2634 = vrot.slane %v2633, 3
        %v2635 = vsel %vm203, %v1678, %v2627
        %v2636 = vrot.slane %v2635, 4
        %v2637 = vsel %vm207, %v1678, %v2627
        %v2638 = vrot.slane %v2637, 5
        %v2639 = vsel %vm212, %v1678, %v2627
        %v2640 = vrot.slane %v2639, 6
        %v2641 = vsel %vm1872, %v2627, %v1678
        %v2642 = vrot.slane %v2641, 7
        %v2643 = vperm.slane %v2628, 0
        %v2644 = vperm.slane %v2628, 1
        %v2645 = vperm.slane %v2630, 0
        %v2646 = vperm.slane %v2630, 1
        %v2647 = vperm.slane %v2632, 0
        %v2648 = vperm.slane %v2632, 1
        %v2649 = vperm.slane %v2634, 0
        %v2650 = vperm.slane %v2634, 1
        %v2651 = vperm.slane %v2636, 0
        %v2652 = vperm.slane %v2636, 1
        %v2653 = vperm.slane %v2638, 0
        %v2654 = vperm.slane %v2638, 1
        %v2655 = vperm.slane %v2640, 0
        %v2656 = vperm.slane %v2640, 1
        %v2657 = vperm.slane %v2642, 0
        %v2658 = vperm.slane %v2642, 1
        %2659 = vrot.lane.b32.xlu0 %v2643, 28
        %v2660 = vpop.permute.xlu0 %2659
        %2661 = vrot.lane.b32.xlu0 %v2644, 28
        %v2662 = vpop.permute.xlu0 %2661
        %2663 = vrot.lane.b32.xlu0 %v2645, 28
        %v2664 = vpop.permute.xlu0 %2663
        %2665 = vrot.lane.b32.xlu0 %v2646, 28
        %v2666 = vpop.permute.xlu0 %2665
        %2667 = vrot.lane.b32.xlu0 %v2647, 28
        %v2668 = vpop.permute.xlu0 %2667
        %2669 = vrot.lane.b32.xlu0 %v2648, 28
        %v2670 = vpop.permute.xlu0 %2669
        %2671 = vrot.lane.b32.xlu0 %v2649, 28
        %v2672 = vpop.permute.xlu0 %2671
        %2673 = vrot.lane.b32.xlu0 %v2650, 28
        %v2674 = vpop.permute.xlu0 %2673
        %2675 = vrot.lane.b32.xlu0 %v2651, 28
        %v2676 = vpop.permute.xlu0 %2675
        %2677 = vrot.lane.b32.xlu0 %v2652, 28
        %v2678 = vpop.permute.xlu0 %2677
        %2679 = vrot.lane.b32.xlu0 %v2653, 28
        %v2680 = vpop.permute.xlu0 %2679
        %2681 = vrot.lane.b32.xlu0 %v2654, 28
        %v2682 = vpop.permute.xlu0 %2681
        %2683 = vrot.lane.b32.xlu0 %v2655, 28
        %v2684 = vpop.permute.xlu0 %2683
        %2685 = vrot.lane.b32.xlu0 %v2656, 28
        %v2686 = vpop.permute.xlu0 %2685
        %2687 = vrot.lane.b32.xlu0 %v2657, 28
        %v2688 = vpop.permute.xlu0 %2687
        %2689 = vrot.lane.b32.xlu0 %v2658, 28
        %v2690 = vpop.permute.xlu0 %2689
        %vm2691 = vcmask 228352
        %v2692 = vsel %vm2691, %v2660, %v2662
        %v2693 = vsel %vm2691, %v2664, %v2666
        %v2694 = vsel %vm2691, %v2668, %v2670
        %v2695 = vsel %vm2691, %v2672, %v2674
        %v2696 = vsel %vm2691, %v2676, %v2678
        %v2697 = vsel %vm2691, %v2680, %v2682
        %v2698 = vsel %vm2691, %v2684, %v2686
        %v2699 = vsel %vm2691, %v2688, %v2690
        %2708 = vst.msk [vmem:[%s190 + $0x12] sm:$0x1] %vm1775, %v2692
        %2709 = vst.msk [vmem:[%s190 + $0x32] sm:$0x1] %vm1775, %v2693
        %2710 = vst.msk [vmem:[%s190 + $0x52] sm:$0x1] %vm1775, %v2694
        %2711 = vst.msk [vmem:[%s190 + $0x72] sm:$0x1] %vm1775, %v2695
        %2712 = vst.msk [vmem:[%s190 + $0x92] sm:$0x1] %vm1775, %v2696
        %2713 = vst.msk [vmem:[%s190 + $0xb2] sm:$0x1] %vm1775, %v2697
        %2714 = vst.msk [vmem:[%s190 + $0xd2] sm:$0x1] %vm1775, %v2698
        %2715 = vst.msk [vmem:[%s190 + $0xf2] sm:$0x1] %vm1775, %v2699
        %v2716 = vrot.slane %v1698, 1
        %v2717 = vrot.slane %v1698, 2
        %v2718 = vrot.slane %v1698, 3
        %v2719 = vrot.slane %v1698, 4
        %v2720 = vrot.slane %v1698, 5
        %v2721 = vrot.slane %v1698, 6
        %v2722 = vperm.slane %v1698, 0
        %v2723 = vperm.slane %v2716, 0
        %v2724 = vperm.slane %v2717, 0
        %v2725 = vperm.slane %v2718, 0
        %v2726 = vperm.slane %v2719, 0
        %v2727 = vperm.slane %v2720, 0
        %v2728 = vperm.slane %v2721, 0
        %v2729 = vperm.slane %v2627, 0
        %2730 = vrot.lane.b32.xlu0 %v2722, 122
        %v2731 = vpop.permute.xlu0 %2730
        %2732 = vrot.lane.b32.xlu0 %v2723, 122
        %v2733 = vpop.permute.xlu0 %2732
        %2734 = vrot.lane.b32.xlu0 %v2724, 122
        %v2735 = vpop.permute.xlu0 %2734
        %2736 = vrot.lane.b32.xlu0 %v2725, 122
        %v2737 = vpop.permute.xlu0 %2736
        %2738 = vrot.lane.b32.xlu0 %v2726, 122
        %v2739 = vpop.permute.xlu0 %2738
        %2740 = vrot.lane.b32.xlu0 %v2727, 122
        %v2741 = vpop.permute.xlu0 %2740
        %2742 = vrot.lane.b32.xlu0 %v2728, 122
        %v2743 = vpop.permute.xlu0 %2742
        %2744 = vrot.lane.b32.xlu0 %v2729, 122
        %v2745 = vpop.permute.xlu0 %2744
        %2754 = vst.msk [vmem:[%s190 + $0x13] sm:$0x1] %vm1775, %v2731
        %2755 = vst.msk [vmem:[%s190 + $0x33] sm:$0x1] %vm1775, %v2733
        %2756 = vst.msk [vmem:[%s190 + $0x53] sm:$0x1] %vm1775, %v2735
        %2757 = vst.msk [vmem:[%s190 + $0x73] sm:$0x1] %vm1775, %v2737
        %2758 = vst.msk [vmem:[%s190 + $0x93] sm:$0x1] %vm1775, %v2739
        %2759 = vst.msk [vmem:[%s190 + $0xb3] sm:$0x1] %vm1775, %v2741
        %2760 = vst.msk [vmem:[%s190 + $0xd3] sm:$0x1] %vm1775, %v2743
        %2761 = vst.msk [vmem:[%s190 + $0xf3] sm:$0x1] %vm1775, %v2745
        %2762 = vrot.lane.b32.xlu0 %v2722, 88
        %v2763 = vpop.permute.xlu0 %2762
        %2764 = vrot.lane.b32.xlu0 %v2723, 88
        %v2765 = vpop.permute.xlu0 %2764
        %2766 = vrot.lane.b32.xlu0 %v2724, 88
        %v2767 = vpop.permute.xlu0 %2766
        %2768 = vrot.lane.b32.xlu0 %v2725, 88
        %v2769 = vpop.permute.xlu0 %2768
        %2770 = vrot.lane.b32.xlu0 %v2726, 88
        %v2771 = vpop.permute.xlu0 %2770
        %2772 = vrot.lane.b32.xlu0 %v2727, 88
        %v2773 = vpop.permute.xlu0 %2772
        %2774 = vrot.lane.b32.xlu0 %v2728, 88
        %v2775 = vpop.permute.xlu0 %2774
        %2776 = vrot.lane.b32.xlu0 %v2729, 88
        %v2777 = vpop.permute.xlu0 %2776
        %2786 = vst.msk [vmem:[%s190 + $0x14] sm:$0x1] %vm1775, %v2763
        %2787 = vst.msk [vmem:[%s190 + $0x34] sm:$0x1] %vm1775, %v2765
        %2788 = vst.msk [vmem:[%s190 + $0x54] sm:$0x1] %vm1775, %v2767
        %2789 = vst.msk [vmem:[%s190 + $0x74] sm:$0x1] %vm1775, %v2769
        %2790 = vst.msk [vmem:[%s190 + $0x94] sm:$0x1] %vm1775, %v2771
        %2791 = vst.msk [vmem:[%s190 + $0xb4] sm:$0x1] %vm1775, %v2773
        %2792 = vst.msk [vmem:[%s190 + $0xd4] sm:$0x1] %vm1775, %v2775
        %2793 = vst.msk [vmem:[%s190 + $0xf4] sm:$0x1] %vm1775, %v2777
        %2794 = vrot.lane.b32.xlu0 %v2722, 54
        %v2795 = vpop.permute.xlu0 %2794
        %2796 = vrot.lane.b32.xlu0 %v2723, 54
        %v2797 = vpop.permute.xlu0 %2796
        %2798 = vrot.lane.b32.xlu0 %v2724, 54
        %v2799 = vpop.permute.xlu0 %2798
        %2800 = vrot.lane.b32.xlu0 %v2725, 54
        %v2801 = vpop.permute.xlu0 %2800
        %2802 = vrot.lane.b32.xlu0 %v2726, 54
        %v2803 = vpop.permute.xlu0 %2802
        %2804 = vrot.lane.b32.xlu0 %v2727, 54
        %v2805 = vpop.permute.xlu0 %2804
        %2806 = vrot.lane.b32.xlu0 %v2728, 54
        %v2807 = vpop.permute.xlu0 %2806
        %2808 = vrot.lane.b32.xlu0 %v2729, 54
        %v2809 = vpop.permute.xlu0 %2808
        %2818 = vst.msk [vmem:[%s190 + $0x15] sm:$0x1] %vm1775, %v2795
        %2819 = vst.msk [vmem:[%s190 + $0x35] sm:$0x1] %vm1775, %v2797
        %2820 = vst.msk [vmem:[%s190 + $0x55] sm:$0x1] %vm1775, %v2799
        %2821 = vst.msk [vmem:[%s190 + $0x75] sm:$0x1] %vm1775, %v2801
        %2822 = vst.msk [vmem:[%s190 + $0x95] sm:$0x1] %vm1775, %v2803
        %2823 = vst.msk [vmem:[%s190 + $0xb5] sm:$0x1] %vm1775, %v2805
        %2824 = vst.msk [vmem:[%s190 + $0xd5] sm:$0x1] %vm1775, %v2807
        %2825 = vst.msk [vmem:[%s190 + $0xf5] sm:$0x1] %vm1775, %v2809
        %v2827 = vrot.slane %v1718, 7
        %v2828 = vsel %vm1858, %v1698, %v2827
        %v2829 = vsel %vm205, %v1698, %v2827
        %v2830 = vrot.slane %v2829, 1
        %v2831 = vsel %vm210, %v1698, %v2827
        %v2832 = vrot.slane %v2831, 2
        %v2833 = vsel %vm215, %v1698, %v2827
        %v2834 = vrot.slane %v2833, 3
        %v2835 = vsel %vm203, %v1698, %v2827
        %v2836 = vrot.slane %v2835, 4
        %v2837 = vsel %vm207, %v1698, %v2827
        %v2838 = vrot.slane %v2837, 5
        %v2839 = vsel %vm212, %v1698, %v2827
        %v2840 = vrot.slane %v2839, 6
        %v2841 = vsel %vm1872, %v2827, %v1698
        %v2842 = vrot.slane %v2841, 7
        %v2843 = vperm.slane %v2828, 0
        %v2844 = vperm.slane %v2828, 1
        %v2845 = vperm.slane %v2830, 0
        %v2846 = vperm.slane %v2830, 1
        %v2847 = vperm.slane %v2832, 0
        %v2848 = vperm.slane %v2832, 1
        %v2849 = vperm.slane %v2834, 0
        %v2850 = vperm.slane %v2834, 1
        %v2851 = vperm.slane %v2836, 0
        %v2852 = vperm.slane %v2836, 1
        %v2853 = vperm.slane %v2838, 0
        %v2854 = vperm.slane %v2838, 1
        %v2855 = vperm.slane %v2840, 0
        %v2856 = vperm.slane %v2840, 1
        %v2857 = vperm.slane %v2842, 0
        %v2858 = vperm.slane %v2842, 1
        %2859 = vrot.lane.b32.xlu0 %v2843, 20
        %v2860 = vpop.permute.xlu0 %2859
        %2861 = vrot.lane.b32.xlu0 %v2844, 20
        %v2862 = vpop.permute.xlu0 %2861
        %2863 = vrot.lane.b32.xlu0 %v2845, 20
        %v2864 = vpop.permute.xlu0 %2863
        %2865 = vrot.lane.b32.xlu0 %v2846, 20
        %v2866 = vpop.permute.xlu0 %2865
        %2867 = vrot.lane.b32.xlu0 %v2847, 20
        %v2868 = vpop.permute.xlu0 %2867
        %2869 = vrot.lane.b32.xlu0 %v2848, 20
        %v2870 = vpop.permute.xlu0 %2869
        %2871 = vrot.lane.b32.xlu0 %v2849, 20
        %v2872 = vpop.permute.xlu0 %2871
        %2873 = vrot.lane.b32.xlu0 %v2850, 20
        %v2874 = vpop.permute.xlu0 %2873
        %2875 = vrot.lane.b32.xlu0 %v2851, 20
        %v2876 = vpop.permute.xlu0 %2875
        %2877 = vrot.lane.b32.xlu0 %v2852, 20
        %v2878 = vpop.permute.xlu0 %2877
        %2879 = vrot.lane.b32.xlu0 %v2853, 20
        %v2880 = vpop.permute.xlu0 %2879
        %2881 = vrot.lane.b32.xlu0 %v2854, 20
        %v2882 = vpop.permute.xlu0 %2881
        %2883 = vrot.lane.b32.xlu0 %v2855, 20
        %v2884 = vpop.permute.xlu0 %2883
        %2885 = vrot.lane.b32.xlu0 %v2856, 20
        %v2886 = vpop.permute.xlu0 %2885
        %2887 = vrot.lane.b32.xlu0 %v2857, 20
        %v2888 = vpop.permute.xlu0 %2887
        %2889 = vrot.lane.b32.xlu0 %v2858, 20
        %v2890 = vpop.permute.xlu0 %2889
        %vm2891 = vcmask 162816
        %v2892 = vsel %vm2891, %v2860, %v2862
        %v2893 = vsel %vm2891, %v2864, %v2866
        %v2894 = vsel %vm2891, %v2868, %v2870
        %v2895 = vsel %vm2891, %v2872, %v2874
        %v2896 = vsel %vm2891, %v2876, %v2878
        %v2897 = vsel %vm2891, %v2880, %v2882
        %v2898 = vsel %vm2891, %v2884, %v2886
        %v2899 = vsel %vm2891, %v2888, %v2890
        %2908 = vst.msk [vmem:[%s190 + $0x16] sm:$0x1] %vm1775, %v2892
        %2909 = vst.msk [vmem:[%s190 + $0x36] sm:$0x1] %vm1775, %v2893
        %2910 = vst.msk [vmem:[%s190 + $0x56] sm:$0x1] %vm1775, %v2894
        %2911 = vst.msk [vmem:[%s190 + $0x76] sm:$0x1] %vm1775, %v2895
        %2912 = vst.msk [vmem:[%s190 + $0x96] sm:$0x1] %vm1775, %v2896
        %2913 = vst.msk [vmem:[%s190 + $0xb6] sm:$0x1] %vm1775, %v2897
        %2914 = vst.msk [vmem:[%s190 + $0xd6] sm:$0x1] %vm1775, %v2898
        %2915 = vst.msk [vmem:[%s190 + $0xf6] sm:$0x1] %vm1775, %v2899
        %v2916 = vrot.slane %v1718, 1
        %v2917 = vrot.slane %v1718, 2
        %v2918 = vrot.slane %v1718, 3
        %v2919 = vrot.slane %v1718, 4
        %v2920 = vrot.slane %v1718, 5
        %v2921 = vrot.slane %v1718, 6
        %v2922 = vperm.slane %v1718, 0
        %v2923 = vperm.slane %v2916, 0
        %v2924 = vperm.slane %v2917, 0
        %v2925 = vperm.slane %v2918, 0
        %v2926 = vperm.slane %v2919, 0
        %v2927 = vperm.slane %v2920, 0
        %v2928 = vperm.slane %v2921, 0
        %v2929 = vperm.slane %v2827, 0
        %2930 = vrot.lane.b32.xlu0 %v2922, 114
        %v2931 = vpop.permute.xlu0 %2930
        %2932 = vrot.lane.b32.xlu0 %v2923, 114
        %v2933 = vpop.permute.xlu0 %2932
        %2934 = vrot.lane.b32.xlu0 %v2924, 114
        %v2935 = vpop.permute.xlu0 %2934
        %2936 = vrot.lane.b32.xlu0 %v2925, 114
        %v2937 = vpop.permute.xlu0 %2936
        %2938 = vrot.lane.b32.xlu0 %v2926, 114
        %v2939 = vpop.permute.xlu0 %2938
        %2940 = vrot.lane.b32.xlu0 %v2927, 114
        %v2941 = vpop.permute.xlu0 %2940
        %2942 = vrot.lane.b32.xlu0 %v2928, 114
        %v2943 = vpop.permute.xlu0 %2942
        %2944 = vrot.lane.b32.xlu0 %v2929, 114
        %v2945 = vpop.permute.xlu0 %2944
        %2954 = vst.msk [vmem:[%s190 + $0x17] sm:$0x1] %vm1775, %v2931
        %2955 = vst.msk [vmem:[%s190 + $0x37] sm:$0x1] %vm1775, %v2933
        %2956 = vst.msk [vmem:[%s190 + $0x57] sm:$0x1] %vm1775, %v2935
        %2957 = vst.msk [vmem:[%s190 + $0x77] sm:$0x1] %vm1775, %v2937
        %2958 = vst.msk [vmem:[%s190 + $0x97] sm:$0x1] %vm1775, %v2939
        %2959 = vst.msk [vmem:[%s190 + $0xb7] sm:$0x1] %vm1775, %v2941
        %2960 = vst.msk [vmem:[%s190 + $0xd7] sm:$0x1] %vm1775, %v2943
        %2961 = vst.msk [vmem:[%s190 + $0xf7] sm:$0x1] %vm1775, %v2945
        %2962 = vrot.lane.b32.xlu0 %v2922, 80
        %v2963 = vpop.permute.xlu0 %2962
        %2964 = vrot.lane.b32.xlu0 %v2923, 80
        %v2965 = vpop.permute.xlu0 %2964
        %2966 = vrot.lane.b32.xlu0 %v2924, 80
        %v2967 = vpop.permute.xlu0 %2966
        %2968 = vrot.lane.b32.xlu0 %v2925, 80
        %v2969 = vpop.permute.xlu0 %2968
        %2970 = vrot.lane.b32.xlu0 %v2926, 80
        %v2971 = vpop.permute.xlu0 %2970
        %2972 = vrot.lane.b32.xlu0 %v2927, 80
        %v2973 = vpop.permute.xlu0 %2972
        %2974 = vrot.lane.b32.xlu0 %v2928, 80
        %v2975 = vpop.permute.xlu0 %2974
        %2976 = vrot.lane.b32.xlu0 %v2929, 80
        %v2977 = vpop.permute.xlu0 %2976
        %2986 = vst.msk [vmem:[%s190 + $0x18] sm:$0x1] %vm1775, %v2963
        %2987 = vst.msk [vmem:[%s190 + $0x38] sm:$0x1] %vm1775, %v2965
        %2988 = vst.msk [vmem:[%s190 + $0x58] sm:$0x1] %vm1775, %v2967
        %2989 = vst.msk [vmem:[%s190 + $0x78] sm:$0x1] %vm1775, %v2969
        %2990 = vst.msk [vmem:[%s190 + $0x98] sm:$0x1] %vm1775, %v2971
        %2991 = vst.msk [vmem:[%s190 + $0xb8] sm:$0x1] %vm1775, %v2973
        %2992 = vst.msk [vmem:[%s190 + $0xd8] sm:$0x1] %vm1775, %v2975
        %2993 = vst.msk [vmem:[%s190 + $0xf8] sm:$0x1] %vm1775, %v2977
        %2994 = vrot.lane.b32.xlu0 %v2922, 46
        %v2995 = vpop.permute.xlu0 %2994
        %2996 = vrot.lane.b32.xlu0 %v2923, 46
        %v2997 = vpop.permute.xlu0 %2996
        %2998 = vrot.lane.b32.xlu0 %v2924, 46
        %v2999 = vpop.permute.xlu0 %2998
        %3000 = vrot.lane.b32.xlu0 %v2925, 46
        %v3001 = vpop.permute.xlu0 %3000
        %3002 = vrot.lane.b32.xlu0 %v2926, 46
        %v3003 = vpop.permute.xlu0 %3002
        %3004 = vrot.lane.b32.xlu0 %v2927, 46
        %v3005 = vpop.permute.xlu0 %3004
        %3006 = vrot.lane.b32.xlu0 %v2928, 46
        %v3007 = vpop.permute.xlu0 %3006
        %3008 = vrot.lane.b32.xlu0 %v2929, 46
        %v3009 = vpop.permute.xlu0 %3008
        %3018 = vst.msk [vmem:[%s190 + $0x19] sm:$0x1] %vm1775, %v2995
        %3019 = vst.msk [vmem:[%s190 + $0x39] sm:$0x1] %vm1775, %v2997
        %3020 = vst.msk [vmem:[%s190 + $0x59] sm:$0x1] %vm1775, %v2999
        %3021 = vst.msk [vmem:[%s190 + $0x79] sm:$0x1] %vm1775, %v3001
        %3022 = vst.msk [vmem:[%s190 + $0x99] sm:$0x1] %vm1775, %v3003
        %3023 = vst.msk [vmem:[%s190 + $0xb9] sm:$0x1] %vm1775, %v3005
        %3024 = vst.msk [vmem:[%s190 + $0xd9] sm:$0x1] %vm1775, %v3007
        %3025 = vst.msk [vmem:[%s190 + $0xf9] sm:$0x1] %vm1775, %v3009
        %v3027 = vrot.slane %v1738, 7
        %v3028 = vsel %vm1858, %v1718, %v3027
        %v3029 = vsel %vm205, %v1718, %v3027
        %v3030 = vrot.slane %v3029, 1
        %v3031 = vsel %vm210, %v1718, %v3027
        %v3032 = vrot.slane %v3031, 2
        %v3033 = vsel %vm215, %v1718, %v3027
        %v3034 = vrot.slane %v3033, 3
        %v3035 = vsel %vm203, %v1718, %v3027
        %v3036 = vrot.slane %v3035, 4
        %v3037 = vsel %vm207, %v1718, %v3027
        %v3038 = vrot.slane %v3037, 5
        %v3039 = vsel %vm212, %v1718, %v3027
        %v3040 = vrot.slane %v3039, 6
        %v3041 = vsel %vm1872, %v3027, %v1718
        %v3042 = vrot.slane %v3041, 7
        %v3043 = vperm.slane %v3028, 0
        %v3044 = vperm.slane %v3028, 1
        %v3045 = vperm.slane %v3030, 0
        %v3046 = vperm.slane %v3030, 1
        %v3047 = vperm.slane %v3032, 0
        %v3048 = vperm.slane %v3032, 1
        %v3049 = vperm.slane %v3034, 0
        %v3050 = vperm.slane %v3034, 1
        %v3051 = vperm.slane %v3036, 0
        %v3052 = vperm.slane %v3036, 1
        %v3053 = vperm.slane %v3038, 0
        %v3054 = vperm.slane %v3038, 1
        %v3055 = vperm.slane %v3040, 0
        %v3056 = vperm.slane %v3040, 1
        %v3057 = vperm.slane %v3042, 0
        %v3058 = vperm.slane %v3042, 1
        %3059 = vrot.lane.b32.xlu0 %v3043, 12
        %v3060 = vpop.permute.xlu0 %3059
        %3061 = vrot.lane.b32.xlu0 %v3044, 12
        %v3062 = vpop.permute.xlu0 %3061
        %3063 = vrot.lane.b32.xlu0 %v3045, 12
        %v3064 = vpop.permute.xlu0 %3063
        %3065 = vrot.lane.b32.xlu0 %v3046, 12
        %v3066 = vpop.permute.xlu0 %3065
        %3067 = vrot.lane.b32.xlu0 %v3047, 12
        %v3068 = vpop.permute.xlu0 %3067
        %3069 = vrot.lane.b32.xlu0 %v3048, 12
        %v3070 = vpop.permute.xlu0 %3069
        %3071 = vrot.lane.b32.xlu0 %v3049, 12
        %v3072 = vpop.permute.xlu0 %3071
        %3073 = vrot.lane.b32.xlu0 %v3050, 12
        %v3074 = vpop.permute.xlu0 %3073
        %3075 = vrot.lane.b32.xlu0 %v3051, 12
        %v3076 = vpop.permute.xlu0 %3075
        %3077 = vrot.lane.b32.xlu0 %v3052, 12
        %v3078 = vpop.permute.xlu0 %3077
        %3079 = vrot.lane.b32.xlu0 %v3053, 12
        %v3080 = vpop.permute.xlu0 %3079
        %3081 = vrot.lane.b32.xlu0 %v3054, 12
        %v3082 = vpop.permute.xlu0 %3081
        %3083 = vrot.lane.b32.xlu0 %v3055, 12
        %v3084 = vpop.permute.xlu0 %3083
        %3085 = vrot.lane.b32.xlu0 %v3056, 12
        %v3086 = vpop.permute.xlu0 %3085
        %3087 = vrot.lane.b32.xlu0 %v3057, 12
        %v3088 = vpop.permute.xlu0 %3087
        %3089 = vrot.lane.b32.xlu0 %v3058, 12
        %v3090 = vpop.permute.xlu0 %3089
        %vm3091 = vcmask 97280
        %v3092 = vsel %vm3091, %v3060, %v3062
        %v3093 = vsel %vm3091, %v3064, %v3066
        %v3094 = vsel %vm3091, %v3068, %v3070
        %v3095 = vsel %vm3091, %v3072, %v3074
        %v3096 = vsel %vm3091, %v3076, %v3078
        %v3097 = vsel %vm3091, %v3080, %v3082
        %v3098 = vsel %vm3091, %v3084, %v3086
        %v3099 = vsel %vm3091, %v3088, %v3090
        %3108 = vst.msk [vmem:[%s190 + $0x1a] sm:$0x1] %vm1775, %v3092
        %3109 = vst.msk [vmem:[%s190 + $0x3a] sm:$0x1] %vm1775, %v3093
        %3110 = vst.msk [vmem:[%s190 + $0x5a] sm:$0x1] %vm1775, %v3094
        %3111 = vst.msk [vmem:[%s190 + $0x7a] sm:$0x1] %vm1775, %v3095
        %3112 = vst.msk [vmem:[%s190 + $0x9a] sm:$0x1] %vm1775, %v3096
        %3113 = vst.msk [vmem:[%s190 + $0xba] sm:$0x1] %vm1775, %v3097
        %3114 = vst.msk [vmem:[%s190 + $0xda] sm:$0x1] %vm1775, %v3098
        %3115 = vst.msk [vmem:[%s190 + $0xfa] sm:$0x1] %vm1775, %v3099
        %v3116 = vrot.slane %v1738, 1
        %v3117 = vrot.slane %v1738, 2
        %v3118 = vrot.slane %v1738, 3
        %v3119 = vrot.slane %v1738, 4
        %v3120 = vrot.slane %v1738, 5
        %v3121 = vrot.slane %v1738, 6
        %v3122 = vperm.slane %v1738, 0
        %v3123 = vperm.slane %v3116, 0
        %v3124 = vperm.slane %v3117, 0
        %v3125 = vperm.slane %v3118, 0
        %v3126 = vperm.slane %v3119, 0
        %v3127 = vperm.slane %v3120, 0
        %v3128 = vperm.slane %v3121, 0
        %v3129 = vperm.slane %v3027, 0
        %3130 = vrot.lane.b32.xlu0 %v3122, 106
        %v3131 = vpop.permute.xlu0 %3130
        %3132 = vrot.lane.b32.xlu0 %v3123, 106
        %v3133 = vpop.permute.xlu0 %3132
        %3134 = vrot.lane.b32.xlu0 %v3124, 106
        %v3135 = vpop.permute.xlu0 %3134
        %3136 = vrot.lane.b32.xlu0 %v3125, 106
        %v3137 = vpop.permute.xlu0 %3136
        %3138 = vrot.lane.b32.xlu0 %v3126, 106
        %v3139 = vpop.permute.xlu0 %3138
        %3140 = vrot.lane.b32.xlu0 %v3127, 106
        %v3141 = vpop.permute.xlu0 %3140
        %3142 = vrot.lane.b32.xlu0 %v3128, 106
        %v3143 = vpop.permute.xlu0 %3142
        %3144 = vrot.lane.b32.xlu0 %v3129, 106
        %v3145 = vpop.permute.xlu0 %3144
        %3154 = vst.msk [vmem:[%s190 + $0x1b] sm:$0x1] %vm1775, %v3131
        %3155 = vst.msk [vmem:[%s190 + $0x3b] sm:$0x1] %vm1775, %v3133
        %3156 = vst.msk [vmem:[%s190 + $0x5b] sm:$0x1] %vm1775, %v3135
        %3157 = vst.msk [vmem:[%s190 + $0x7b] sm:$0x1] %vm1775, %v3137
        %3158 = vst.msk [vmem:[%s190 + $0x9b] sm:$0x1] %vm1775, %v3139
        %3159 = vst.msk [vmem:[%s190 + $0xbb] sm:$0x1] %vm1775, %v3141
        %3160 = vst.msk [vmem:[%s190 + $0xdb] sm:$0x1] %vm1775, %v3143
        %3161 = vst.msk [vmem:[%s190 + $0xfb] sm:$0x1] %vm1775, %v3145
        %3162 = vrot.lane.b32.xlu0 %v3122, 72
        %v3163 = vpop.permute.xlu0 %3162
        %3164 = vrot.lane.b32.xlu0 %v3123, 72
        %v3165 = vpop.permute.xlu0 %3164
        %3166 = vrot.lane.b32.xlu0 %v3124, 72
        %v3167 = vpop.permute.xlu0 %3166
        %3168 = vrot.lane.b32.xlu0 %v3125, 72
        %v3169 = vpop.permute.xlu0 %3168
        %3170 = vrot.lane.b32.xlu0 %v3126, 72
        %v3171 = vpop.permute.xlu0 %3170
        %3172 = vrot.lane.b32.xlu0 %v3127, 72
        %v3173 = vpop.permute.xlu0 %3172
        %3174 = vrot.lane.b32.xlu0 %v3128, 72
        %v3175 = vpop.permute.xlu0 %3174
        %3176 = vrot.lane.b32.xlu0 %v3129, 72
        %v3177 = vpop.permute.xlu0 %3176
        %3186 = vst.msk [vmem:[%s190 + $0x1c] sm:$0x1] %vm1775, %v3163
        %3187 = vst.msk [vmem:[%s190 + $0x3c] sm:$0x1] %vm1775, %v3165
        %3188 = vst.msk [vmem:[%s190 + $0x5c] sm:$0x1] %vm1775, %v3167
        %3189 = vst.msk [vmem:[%s190 + $0x7c] sm:$0x1] %vm1775, %v3169
        %3190 = vst.msk [vmem:[%s190 + $0x9c] sm:$0x1] %vm1775, %v3171
        %3191 = vst.msk [vmem:[%s190 + $0xbc] sm:$0x1] %vm1775, %v3173
        %3192 = vst.msk [vmem:[%s190 + $0xdc] sm:$0x1] %vm1775, %v3175
        %3193 = vst.msk [vmem:[%s190 + $0xfc] sm:$0x1] %vm1775, %v3177
        %3194 = vrot.lane.b32.xlu0 %v3122, 38
        %v3195 = vpop.permute.xlu0 %3194
        %3196 = vrot.lane.b32.xlu0 %v3123, 38
        %v3197 = vpop.permute.xlu0 %3196
        %3198 = vrot.lane.b32.xlu0 %v3124, 38
        %v3199 = vpop.permute.xlu0 %3198
        %3200 = vrot.lane.b32.xlu0 %v3125, 38
        %v3201 = vpop.permute.xlu0 %3200
        %3202 = vrot.lane.b32.xlu0 %v3126, 38
        %v3203 = vpop.permute.xlu0 %3202
        %3204 = vrot.lane.b32.xlu0 %v3127, 38
        %v3205 = vpop.permute.xlu0 %3204
        %3206 = vrot.lane.b32.xlu0 %v3128, 38
        %v3207 = vpop.permute.xlu0 %3206
        %3208 = vrot.lane.b32.xlu0 %v3129, 38
        %v3209 = vpop.permute.xlu0 %3208
        %3218 = vst.msk [vmem:[%s190 + $0x1d] sm:$0x1] %vm1775, %v3195
        %3219 = vst.msk [vmem:[%s190 + $0x3d] sm:$0x1] %vm1775, %v3197
        %3220 = vst.msk [vmem:[%s190 + $0x5d] sm:$0x1] %vm1775, %v3199
        %3221 = vst.msk [vmem:[%s190 + $0x7d] sm:$0x1] %vm1775, %v3201
        %3222 = vst.msk [vmem:[%s190 + $0x9d] sm:$0x1] %vm1775, %v3203
        %3223 = vst.msk [vmem:[%s190 + $0xbd] sm:$0x1] %vm1775, %v3205
        %3224 = vst.msk [vmem:[%s190 + $0xdd] sm:$0x1] %vm1775, %v3207
        %3225 = vst.msk [vmem:[%s190 + $0xfd] sm:$0x1] %vm1775, %v3209
        %v3227 = vrot.slane %v1758, 7
        %v3228 = vsel %vm1858, %v1738, %v3227
        %v3229 = vsel %vm205, %v1738, %v3227
        %v3230 = vrot.slane %v3229, 1
        %v3231 = vsel %vm210, %v1738, %v3227
        %v3232 = vrot.slane %v3231, 2
        %v3233 = vsel %vm215, %v1738, %v3227
        %v3234 = vrot.slane %v3233, 3
        %v3235 = vsel %vm203, %v1738, %v3227
        %v3236 = vrot.slane %v3235, 4
        %v3237 = vsel %vm207, %v1738, %v3227
        %v3238 = vrot.slane %v3237, 5
        %v3239 = vsel %vm212, %v1738, %v3227
        %v3240 = vrot.slane %v3239, 6
        %v3241 = vsel %vm1872, %v3227, %v1738
        %v3242 = vrot.slane %v3241, 7
        %v3243 = vperm.slane %v3228, 0
        %v3244 = vperm.slane %v3228, 1
        %v3245 = vperm.slane %v3230, 0
        %v3246 = vperm.slane %v3230, 1
        %v3247 = vperm.slane %v3232, 0
        %v3248 = vperm.slane %v3232, 1
        %v3249 = vperm.slane %v3234, 0
        %v3250 = vperm.slane %v3234, 1
        %v3251 = vperm.slane %v3236, 0
        %v3252 = vperm.slane %v3236, 1
        %v3253 = vperm.slane %v3238, 0
        %v3254 = vperm.slane %v3238, 1
        %v3255 = vperm.slane %v3240, 0
        %v3256 = vperm.slane %v3240, 1
        %v3257 = vperm.slane %v3242, 0
        %v3258 = vperm.slane %v3242, 1
        %3259 = vrot.lane.b32.xlu0 %v3243, 4
        %v3260 = vpop.permute.xlu0 %3259
        %3261 = vrot.lane.b32.xlu0 %v3244, 4
        %v3262 = vpop.permute.xlu0 %3261
        %3263 = vrot.lane.b32.xlu0 %v3245, 4
        %v3264 = vpop.permute.xlu0 %3263
        %3265 = vrot.lane.b32.xlu0 %v3246, 4
        %v3266 = vpop.permute.xlu0 %3265
        %3267 = vrot.lane.b32.xlu0 %v3247, 4
        %v3268 = vpop.permute.xlu0 %3267
        %3269 = vrot.lane.b32.xlu0 %v3248, 4
        %v3270 = vpop.permute.xlu0 %3269
        %3271 = vrot.lane.b32.xlu0 %v3249, 4
        %v3272 = vpop.permute.xlu0 %3271
        %3273 = vrot.lane.b32.xlu0 %v3250, 4
        %v3274 = vpop.permute.xlu0 %3273
        %3275 = vrot.lane.b32.xlu0 %v3251, 4
        %v3276 = vpop.permute.xlu0 %3275
        %3277 = vrot.lane.b32.xlu0 %v3252, 4
        %v3278 = vpop.permute.xlu0 %3277
        %3279 = vrot.lane.b32.xlu0 %v3253, 4
        %v3280 = vpop.permute.xlu0 %3279
        %3281 = vrot.lane.b32.xlu0 %v3254, 4
        %v3282 = vpop.permute.xlu0 %3281
        %3283 = vrot.lane.b32.xlu0 %v3255, 4
        %v3284 = vpop.permute.xlu0 %3283
        %3285 = vrot.lane.b32.xlu0 %v3256, 4
        %v3286 = vpop.permute.xlu0 %3285
        %3287 = vrot.lane.b32.xlu0 %v3257, 4
        %v3288 = vpop.permute.xlu0 %3287
        %3289 = vrot.lane.b32.xlu0 %v3258, 4
        %v3290 = vpop.permute.xlu0 %3289
        %vm3291 = vcmask 31744
        %v3292 = vsel %vm3291, %v3260, %v3262
        %v3293 = vsel %vm3291, %v3264, %v3266
        %v3294 = vsel %vm3291, %v3268, %v3270
        %v3295 = vsel %vm3291, %v3272, %v3274
        %v3296 = vsel %vm3291, %v3276, %v3278
        %v3297 = vsel %vm3291, %v3280, %v3282
        %v3298 = vsel %vm3291, %v3284, %v3286
        %v3299 = vsel %vm3291, %v3288, %v3290
        %3308 = vst.msk [vmem:[%s190 + $0x1e] sm:$0x1] %vm1775, %v3292
        %3309 = vst.msk [vmem:[%s190 + $0x3e] sm:$0x1] %vm1775, %v3293
        %3310 = vst.msk [vmem:[%s190 + $0x5e] sm:$0x1] %vm1775, %v3294
        %3311 = vst.msk [vmem:[%s190 + $0x7e] sm:$0x1] %vm1775, %v3295
        %3312 = vst.msk [vmem:[%s190 + $0x9e] sm:$0x1] %vm1775, %v3296
        %3313 = vst.msk [vmem:[%s190 + $0xbe] sm:$0x1] %vm1775, %v3297
        %3314 = vst.msk [vmem:[%s190 + $0xde] sm:$0x1] %vm1775, %v3298
        %3315 = vst.msk [vmem:[%s190 + $0xfe] sm:$0x1] %vm1775, %v3299
        %v3316 = vrot.slane %v1758, 1
        %v3317 = vrot.slane %v1758, 2
        %v3318 = vrot.slane %v1758, 3
        %v3319 = vrot.slane %v1758, 4
        %v3320 = vrot.slane %v1758, 5
        %v3321 = vrot.slane %v1758, 6
        %v3322 = vperm.slane %v1758, 0
        %v3323 = vperm.slane %v3316, 0
        %v3324 = vperm.slane %v3317, 0
        %v3325 = vperm.slane %v3318, 0
        %v3326 = vperm.slane %v3319, 0
        %v3327 = vperm.slane %v3320, 0
        %v3328 = vperm.slane %v3321, 0
        %v3329 = vperm.slane %v3227, 0
        %3330 = vrot.lane.b32.xlu0 %v3322, 98
        %v3331 = vpop.permute.xlu0 %3330
        %3332 = vrot.lane.b32.xlu0 %v3323, 98
        %v3333 = vpop.permute.xlu0 %3332
        %3334 = vrot.lane.b32.xlu0 %v3324, 98
        %v3335 = vpop.permute.xlu0 %3334
        %3336 = vrot.lane.b32.xlu0 %v3325, 98
        %v3337 = vpop.permute.xlu0 %3336
        %3338 = vrot.lane.b32.xlu0 %v3326, 98
        %v3339 = vpop.permute.xlu0 %3338
        %3340 = vrot.lane.b32.xlu0 %v3327, 98
        %v3341 = vpop.permute.xlu0 %3340
        %3342 = vrot.lane.b32.xlu0 %v3328, 98
        %v3343 = vpop.permute.xlu0 %3342
        %3344 = vrot.lane.b32.xlu0 %v3329, 98
        %v3345 = vpop.permute.xlu0 %3344
        %3354 = vst.msk [vmem:[%s190 + $0x1f] sm:$0x1] %vm1775, %v3331
        %3355 = vst.msk [vmem:[%s190 + $0x3f] sm:$0x1] %vm1775, %v3333
        %3356 = vst.msk [vmem:[%s190 + $0x5f] sm:$0x1] %vm1775, %v3335
        %3357 = vst.msk [vmem:[%s190 + $0x7f] sm:$0x1] %vm1775, %v3337
        %3358 = vst.msk [vmem:[%s190 + $0x9f] sm:$0x1] %vm1775, %v3339
        %3359 = vst.msk [vmem:[%s190 + $0xbf] sm:$0x1] %vm1775, %v3341
        %3360 = vst.msk [vmem:[%s190 + $0xdf] sm:$0x1] %vm1775, %v3343
        %3361 = vst.msk [vmem:[%s190 + $0xff] sm:$0x1] %vm1775, %v3345
        %s3362 = sand.u32 %s96, 1
        %s3363 = scalar_lea.sflag [#allocation6], %s3362
        %s3364 = sand.u32 %s96, 1
        %s3365 = smul.addr %s3364, 256
        %s3366 = scalar_lea.vmem [#allocation7], %s3365
        // Predicated region
        $region37: #{tpu_custom_call.1} parent=31 // pred_check
          %p3367 = pneg %p106
        $region38: #{tpu_custom_call.1} parent=31 // pred_check_branch
          %3369 = sbr.rel (%p3367) target = $region40
        $region39: #{tpu_custom_call.1} parent=31 // pred_region
          %3371 = vsyncadd %s3363, 0
          %s3372 = smul.addr %s20, 32
          %s3373 = smul.addr %s3372, 8
          %s3374 = scalar_lea.hbm %s3, %s3373
          %s3375 = sshll.u32 %s3366, 4
          %s3376 = int_to_ptr.vmem [resolvable:$true] %s3375
          %s3377 = sshll.u32 %s3374, 4
          %s3378 = int_to_ptr.hbm [resolvable:$true] %s3377
          %3383 = dma.vmem_to_hbm [thread:$0]  %s3376, 4096, %s3378, %s3363, 128, 128, 8
        $region40: #{tpu_custom_call.1} parent=31 // pred_fallthru
          _
      $region32: #{tpu_custom_call.1} parent=5 // pred_fallthru
        _
      %p3384 = scmp.le.s32.totalorder 2, %s15
      // Predicated region
      $region41: #{tpu_custom_call.1} parent=5 // pred_check
        %p3385 = pneg %p3384
      $region42: #{tpu_custom_call.1} parent=5 // pred_check_branch
        %3387 = sbr.rel (%p3385) target = $region44
      $region43: #{tpu_custom_call.1} parent=5 // pred_region
        %s3388 = ssub.s32 %s15, 2
        // Predicated region
        $region45: #{tpu_custom_call.1} parent=43 // pred_check
          %p3389 = pneg %p112
        $region46: #{tpu_custom_call.1} parent=43 // pred_check_branch
          %3391 = sbr.rel (%p3389) target = $region48
        $region47: #{tpu_custom_call.1} parent=43 // pred_region
          %s3392 = sand.u32 %s97, 1
          %s3393 = scalar_lea.sflag [#allocation6], %s3392
          %s3394 = sand.u32 %s97, 1
          %s3395 = smul.addr %s3394, 256
          %s3396 = scalar_lea.vmem [#allocation7], %s3395
          %3398 = dma.done %s3393, 4096
        $region48: #{tpu_custom_call.1} parent=43 // pred_fallthru
          _
      $region44: #{tpu_custom_call.1} parent=5 // pred_fallthru
        _
    $region6: #{tpu_custom_call.1} parent=1 // loop_footer
      %s19 = sadd.s32 1, %s15
    $region7: #{tpu_custom_call.1} parent=1 // loop_footer_branch
      %14 = sbr.rel target = $region3
    $region8: #{tpu_custom_call.1} parent=1 // loop_exit
      _
    %3399 = vsyncpa [#allocation5], 1
    %s3400 = scalar_lea.sflag [#allocation5], 1
    %3401 = vsyncpa %s3400, 1
    %3402 = vsyncpa [#allocation6], 1
    %s3403 = scalar_lea.sflag [#allocation6], 1
    %3404 = vsyncpa %s3403, 1

</llo_original>
